<compile_context>
chip_gen: v6e
topology: v6e:2x2x1
jax: 0.10.0
libtpu: 0.0.40
codegen_flags: <defaults>
</compile_context>

<pallas_src>
import functools
import math

import jax
import jax.numpy as jnp
import numpy as np
from jax.experimental import pallas as pl
from jax.experimental.pallas import tpu as pltpu

# ----- small synthetic config (shapes consistent with GPTConfig semantics) ---
VOCAB   = 256              # vocab_size
BLOCK   = 16               # block_size (max positions)
N_LAYER = 2
N_HEAD  = 2
N_EMBD  = 32
DH      = N_EMBD // N_HEAD
LN_EPS  = 1e-5             # torch.nn.LayerNorm default
NEG_INF = -1e30            # finite additive mask constant


# --------------------------- in-kernel helpers --------------------------------
def _ln(x, g, b):
    mu = jnp.mean(x, axis=-1, keepdims=True)
    var = jnp.mean(jnp.square(x - mu), axis=-1, keepdims=True)
    return (x - mu) * jax.lax.rsqrt(var + LN_EPS) * g + b


def _gelu_tanh(x):
    # GELU(approximate='tanh'), exactly torch's tanh approximation (f32)
    c = math.sqrt(2.0 / math.pi)
    return 0.5 * x * (1.0 + jnp.tanh(c * (x + 0.044715 * x * x * x)))


# ------------------------------ the fused kernel -------------------------------
def _gpt_kernel(idx_ref, bidc_ref, bidr_ref, pid_ref, wte_ref, wpe_ref,
                ln1g_ref, ln1b_ref, wq_ref, wk_ref, wv_ref,
                bq_ref, bk_ref, bv_ref, wproj_ref, bproj_ref,
                ln2g_ref, ln2b_ref, wfc_ref, bfc_ref, wmp_ref, bmp_ref,
                lnfg_ref, lnfb_ref, wlm_ref,
                logits_ref, x_ref, *, n_head):
    """Whole GPT forward. Grid axis 0 = layer index ("arbitrary")."""
    layer = pl.program_id(0)
    n, c = x_ref.shape
    dh = c // n_head
    scale = 1.0 / math.sqrt(dh)
    nt = (((1,), (1,)), ((), ()))          # contract last dims: A @ B.T (no .T copy)

    # ---- layer-0 prologue: token + positional embedding (one-hot MXU gather) ----
    @pl.when(layer == 0)
    def _():
        vocab = wte_ref.shape[0]
        nposn = wpe_ref.shape[0]
        tok_oh = (jax.lax.broadcasted_iota(jnp.int32, (n, vocab), 1)
                  == idx_ref[...]).astype(jnp.float32)
        pos_oh = (jax.lax.broadcasted_iota(jnp.int32, (n, nposn), 1)
                  == pid_ref[...]).astype(jnp.float32)
        x_ref[...] = (jnp.dot(tok_oh, wte_ref[...], preferred_element_type=jnp.float32)
                      + jnp.dot(pos_oh, wpe_ref[...], preferred_element_type=jnp.float32))

    x = x_ref[...]                          # (N, C) f32 residual stream (VMEM scratch)

    # ---- block-diagonal causal mask, built in-kernel from iota + O(N) metadata ----
    row_t = jax.lax.broadcasted_iota(jnp.int32, (n, n), 0)
    col_t = jax.lax.broadcasted_iota(jnp.int32, (n, n), 1)
    allowed = (bidc_ref[...] == bidr_ref[...]) & (col_t <= row_t)
    bias = jnp.where(allowed, 0.0, NEG_INF).astype(jnp.float32)

    # ---- LN1 + causal self-attention (head-major weights: lane-offset-0 tiles) ----
    h = _ln(x, ln1g_ref[...], ln1b_ref[...]).astype(jnp.bfloat16)   # single hoisted cast
    att = jnp.zeros((n, c), jnp.float32)
    for hd in range(n_head):                # static unroll over heads
        q = jnp.dot(h, wq_ref[hd], preferred_element_type=jnp.float32) + bq_ref[hd]
        k = jnp.dot(h, wk_ref[hd], preferred_element_type=jnp.float32) + bk_ref[hd]
        v = jnp.dot(h, wv_ref[hd], preferred_element_type=jnp.float32) + bv_ref[hd]
        s = jax.lax.dot_general(q.astype(jnp.bfloat16), k.astype(jnp.bfloat16),
                                dimension_numbers=nt,
                                preferred_element_type=jnp.float32) * scale + bias
        m = jnp.max(s, axis=-1, keepdims=True)
        p = jnp.exp(s - m)
        p = p * pl.reciprocal(jnp.sum(p, axis=-1, keepdims=True), approx=True)
        y = jnp.dot(p.astype(jnp.bfloat16), v.astype(jnp.bfloat16),
                    preferred_element_type=jnp.float32)              # (N, Dh)
        # per-head slab of the output projection -> accumulate (no concat/reshape)
        att = att + jnp.dot(y.astype(jnp.bfloat16), wproj_ref[hd],
                            preferred_element_type=jnp.float32)

    x = x + att + bproj_ref[...]            # residual 1

    # ---- LN2 + MLP (c_fc -> gelu(tanh) -> c_proj) ----
    h2 = _ln(x, ln2g_ref[...], ln2b_ref[...]).astype(jnp.bfloat16)
    mid = jnp.dot(h2, wfc_ref[...], preferred_element_type=jnp.float32) + bfc_ref[...]
    mid = _gelu_tanh(mid)
    mlp = jnp.dot(mid.astype(jnp.bfloat16), wmp_ref[...],
                  preferred_element_type=jnp.float32) + bmp_ref[...]
    x = x + mlp                             # residual 2
    x_ref[...] = x                          # persists in VMEM across layers

    # ---- final LN + weight-tied lm_head, written once at the last layer ----
    @pl.when(layer == pl.num_programs(0) - 1)
    def _():
        hf = _ln(x, lnfg_ref[...], lnfb_ref[...]).astype(jnp.bfloat16)
        logits_ref[...] = jnp.dot(hf, wlm_ref[...],
                                  preferred_element_type=jnp.float32)   # (N, V)


# --------------------------- parameters (deterministic) ------------------------
def init_params(key):
    std = 0.02
    proj_std = 0.02 * (2 * N_LAYER) ** -0.5   # NANOGPT_SCALE_INIT
    C, H = N_EMBD, N_HEAD
    kit = iter(jax.random.split(key, 2 + 4 * N_LAYER))

    wte = (jax.random.normal(next(kit), (VOCAB, C)) * std).astype(jnp.float32)
    wpe = (jax.random.normal(next(kit), (BLOCK, C)) * std).astype(jnp.float32)

    wq, wk, wv, wproj, wfc, wmp = [], [], [], [], [], []
    for _ in range(N_LAYER):
        attn_w = jax.random.normal(next(kit), (C, 3 * C)) * std        # (in, out)
        qw, kw, vw = attn_w[:, :C], attn_w[:, C:2 * C], attn_w[:, 2 * C:]
        # head-major stacks: each head's tile starts at lane/sublane offset 0
        wq.append(qw.reshape(C, H, DH).transpose(1, 0, 2))              # (H, C, Dh)
        wk.append(kw.reshape(C, H, DH).transpose(1, 0, 2))
        wv.append(vw.reshape(C, H, DH).transpose(1, 0, 2))
        pw = jax.random.normal(next(kit), (C, C)) * proj_std
        wproj.append(pw.reshape(H, DH, C))                              # (H, Dh, C)
        wfc.append(jax.random.normal(next(kit), (C, 4 * C)) * std)
        wmp.append(jax.random.normal(next(kit), (4 * C, C)) * proj_std)

    stack_bf16 = lambda xs: jnp.stack(xs).astype(jnp.bfloat16)
    params = {
        "wte": wte,                                    # f32 (exact embedding gather)
        "wpe": wpe,
        "ln1_g": jnp.ones((N_LAYER, 1, C), jnp.float32),
        "ln1_b": jnp.zeros((N_LAYER, 1, C), jnp.float32),
        "wq": stack_bf16(wq), "wk": stack_bf16(wk), "wv": stack_bf16(wv),
        "bq": jnp.zeros((N_LAYER, H, 1, DH), jnp.float32),
        "bk": jnp.zeros((N_LAYER, H, 1, DH), jnp.float32),
        "bv": jnp.zeros((N_LAYER, H, 1, DH), jnp.float32),
        "wproj": stack_bf16(wproj),
        "bproj": jnp.zeros((N_LAYER, 1, C), jnp.float32),
        "ln2_g": jnp.ones((N_LAYER, 1, C), jnp.float32),
        "ln2_b": jnp.zeros((N_LAYER, 1, C), jnp.float32),
        "wfc": stack_bf16(wfc),
        "bfc": jnp.zeros((N_LAYER, 1, 4 * C), jnp.float32),
        "wmp": stack_bf16(wmp),
        "bmp": jnp.zeros((N_LAYER, 1, C), jnp.float32),
        "lnf_g": jnp.ones((1, C), jnp.float32),
        "lnf_b": jnp.zeros((1, C), jnp.float32),
        # tied lm_head operand, transposed + cast ONCE at init (lane-dense (C, V))
        "wlm": wte.T.astype(jnp.bfloat16),
    }
    return params


# ------------------------------ GPT forward ------------------------------------
def gpt_forward(params, idx):
    B, T = idx.shape
    C, H, V = N_EMBD, N_HEAD, VOCAB
    n = B * T

    idx2 = idx.reshape(n, 1).astype(jnp.int32)
    # O(N) token metadata (compile-time constants): batch id / position per token.
    r = np.arange(n, dtype=np.int32)
    bid_col = jnp.asarray((r // T).reshape(n, 1))
    bid_row = jnp.asarray((r // T).reshape(1, n))
    pid_col = jnp.asarray((r % T).reshape(n, 1))

    per_layer_2d = lambda s: pl.BlockSpec((None,) + s, lambda l: (l, 0, 0))
    per_layer_3d = lambda s: pl.BlockSpec((None,) + s, lambda l: (l, 0, 0, 0))
    const_2d = lambda s: pl.BlockSpec(s, lambda l: (0, 0))

    grid_spec = pltpu.PrefetchScalarGridSpec(
        num_scalar_prefetch=0,
        grid=(N_LAYER,),
        in_specs=[
            const_2d((n, 1)),                 # idx
            const_2d((n, 1)),                 # batch id (column layout)
            const_2d((1, n)),                 # batch id (row layout)
            const_2d((n, 1)),                 # position id
            const_2d((V, C)),                 # wte (f32)
            const_2d((BLOCK, C)),             # wpe (f32)
            per_layer_2d((1, C)),             # ln1_g
            per_layer_2d((1, C)),             # ln1_b
            per_layer_3d((H, C, DH)),         # wq
            per_layer_3d((H, C, DH)),         # wk
            per_layer_3d((H, C, DH)),         # wv
            per_layer_3d((H, 1, DH)),         # bq
            per_layer_3d((H, 1, DH)),         # bk
            per_layer_3d((H, 1, DH)),         # bv
            per_layer_3d((H, DH, C)),         # wproj
            per_layer_2d((1, C)),             # bproj
            per_layer_2d((1, C)),             # ln2_g
            per_layer_2d((1, C)),             # ln2_b
            per_layer_2d((C, 4 * C)),         # wfc
            per_layer_2d((1, 4 * C)),         # bfc
            per_layer_2d((4 * C, C)),         # wmp
            per_layer_2d((1, C)),             # bmp
            const_2d((1, C)),                 # lnf_g
            const_2d((1, C)),                 # lnf_b
            const_2d((C, V)),                 # wlm (tied wte.T, bf16)
        ],
        out_specs=pl.BlockSpec((n, V), lambda l: (0, 0)),
        scratch_shapes=[pltpu.VMEM((n, C), jnp.float32)],   # resident residual stream
    )

    logits = pl.pallas_call(
        functools.partial(_gpt_kernel, n_head=H),
        grid_spec=grid_spec,
        out_shape=jax.ShapeDtypeStruct((n, V), jnp.float32),
        compiler_params=pltpu.CompilerParams(
            dimension_semantics=("arbitrary",)),            # layer axis is sequential
    )(idx2, bid_col, bid_row, pid_col, params["wte"], params["wpe"],
      params["ln1_g"], params["ln1_b"], params["wq"], params["wk"], params["wv"],
      params["bq"], params["bk"], params["bv"], params["wproj"], params["bproj"],
      params["ln2_g"], params["ln2_b"], params["wfc"], params["bfc"],
      params["wmp"], params["bmp"], params["lnf_g"], params["lnf_b"], params["wlm"])

    return logits.reshape(B, T, V), None      # targets=None path of GPT.forward


# ---------------------------------- main ----------------------------------------
if __name__ == "__main__":
    key = jax.random.PRNGKey(0)
    pkey, dkey = jax.random.split(key)
    params = init_params(pkey)

    B, T = 2, 8
    idx = jax.random.randint(dkey, (B, T), 0, VOCAB, dtype=jnp.int32)

    fwd = jax.jit(gpt_forward)
    logits, loss = fwd(params, idx)
    jax.block_until_ready(logits)

    assert logits.shape == (B, T, VOCAB)
    assert loss is None
    assert bool(jnp.all(jnp.isfinite(logits)))
    print("KERNEL_OK")
</pallas_src>

<mosaic_0001>
module attributes {stable_mosaic.version = 11 : i64} {
  func.func @_gpt_kernel(%arg0: i32, %arg1: memref<16x1xi32, #tpu.memory_space<vmem>>, %arg2: memref<16x1xi32, #tpu.memory_space<vmem>>, %arg3: memref<1x16xi32, #tpu.memory_space<vmem>>, %arg4: memref<16x1xi32, #tpu.memory_space<vmem>>, %arg5: memref<256x32xf32, #tpu.memory_space<vmem>>, %arg6: memref<16x32xf32, #tpu.memory_space<vmem>>, %arg7: memref<1x1x32xf32, #tpu.memory_space<vmem>>, %arg8: memref<1x1x32xf32, #tpu.memory_space<vmem>>, %arg9: memref<1x2x32x16xbf16, #tpu.memory_space<vmem>>, %arg10: memref<1x2x32x16xbf16, #tpu.memory_space<vmem>>, %arg11: memref<1x2x32x16xbf16, #tpu.memory_space<vmem>>, %arg12: memref<1x2x1x16xf32, #tpu.memory_space<vmem>>, %arg13: memref<1x2x1x16xf32, #tpu.memory_space<vmem>>, %arg14: memref<1x2x1x16xf32, #tpu.memory_space<vmem>>, %arg15: memref<1x2x16x32xbf16, #tpu.memory_space<vmem>>, %arg16: memref<1x1x32xf32, #tpu.memory_space<vmem>>, %arg17: memref<1x1x32xf32, #tpu.memory_space<vmem>>, %arg18: memref<1x1x32xf32, #tpu.memory_space<vmem>>, %arg19: memref<1x32x128xbf16, #tpu.memory_space<vmem>>, %arg20: memref<1x1x128xf32, #tpu.memory_space<vmem>>, %arg21: memref<1x128x32xbf16, #tpu.memory_space<vmem>>, %arg22: memref<1x1x32xf32, #tpu.memory_space<vmem>>, %arg23: memref<1x32xf32, #tpu.memory_space<vmem>>, %arg24: memref<1x32xf32, #tpu.memory_space<vmem>>, %arg25: memref<32x256xbf16, #tpu.memory_space<vmem>>, %arg26: memref<16x256xf32, #tpu.memory_space<vmem>>, %arg27: memref<16x32xf32, #tpu.memory_space<vmem>>) attributes {dimension_semantics = [#tpu.dimension_semantics<arbitrary>], iteration_bounds = array<i64: 2>, scalar_prefetch = 0 : i64, scratch_operands = 1 : i64, tpu.core_type = #tpu.core_type<tc>, window_params = [{pipeline_mode = #tpu.pipeline_mode<synchronous>, transform_indices = @transform_0, window_bounds = array<i64: 16, 1>}, {pipeline_mode = #tpu.pipeline_mode<synchronous>, transform_indices = @transform_1, window_bounds = array<i64: 16, 1>}, {pipeline_mode = #tpu.pipeline_mode<synchronous>, transform_indices = @transform_2, window_bounds = array<i64: 1, 16>}, {pipeline_mode = #tpu.pipeline_mode<synchronous>, transform_indices = @transform_3, window_bounds = array<i64: 16, 1>}, {pipeline_mode = #tpu.pipeline_mode<synchronous>, transform_indices = @transform_4, window_bounds = array<i64: 256, 32>}, {pipeline_mode = #tpu.pipeline_mode<synchronous>, transform_indices = @transform_5, window_bounds = array<i64: 16, 32>}, {transform_indices = @transform_6, window_bounds = array<i64: 1, 1, 32>}, {transform_indices = @transform_7, window_bounds = array<i64: 1, 1, 32>}, {transform_indices = @transform_8, window_bounds = array<i64: 1, 2, 32, 16>}, {transform_indices = @transform_9, window_bounds = array<i64: 1, 2, 32, 16>}, {transform_indices = @transform_10, window_bounds = array<i64: 1, 2, 32, 16>}, {transform_indices = @transform_11, window_bounds = array<i64: 1, 2, 1, 16>}, {transform_indices = @transform_12, window_bounds = array<i64: 1, 2, 1, 16>}, {transform_indices = @transform_13, window_bounds = array<i64: 1, 2, 1, 16>}, {transform_indices = @transform_14, window_bounds = array<i64: 1, 2, 16, 32>}, {transform_indices = @transform_15, window_bounds = array<i64: 1, 1, 32>}, {transform_indices = @transform_16, window_bounds = array<i64: 1, 1, 32>}, {transform_indices = @transform_17, window_bounds = array<i64: 1, 1, 32>}, {transform_indices = @transform_18, window_bounds = array<i64: 1, 32, 128>}, {transform_indices = @transform_19, window_bounds = array<i64: 1, 1, 128>}, {transform_indices = @transform_20, window_bounds = array<i64: 1, 128, 32>}, {transform_indices = @transform_21, window_bounds = array<i64: 1, 1, 32>}, {pipeline_mode = #tpu.pipeline_mode<synchronous>, transform_indices = @transform_22, window_bounds = array<i64: 1, 32>}, {pipeline_mode = #tpu.pipeline_mode<synchronous>, transform_indices = @transform_23, window_bounds = array<i64: 1, 32>}, {pipeline_mode = #tpu.pipeline_mode<synchronous>, transform_indices = @transform_24, window_bounds = array<i64: 32, 256>}, {pipeline_mode = #tpu.pipeline_mode<synchronous>, transform_indices = @transform_25, window_bounds = array<i64: 16, 256>}]} {
    %c0_i32 = arith.constant 0 : i32
    %0 = arith.cmpi eq, %arg0, %c0_i32 : i32
    %1 = arith.extui %0 : i1 to i32
    %c0_i32_0 = arith.constant 0 : i32
    %2 = arith.cmpi ne, %1, %c0_i32_0 : i32
    scf.if %2 {
      %199 = tpu.iota {dimensions = array<i32: 1>} : vector<16x256xi32>
      %c0_127 = arith.constant 0 : index
      %c0_128 = arith.constant 0 : index
      %200 = vector.load %arg1[%c0_127, %c0_128] : memref<16x1xi32, #tpu.memory_space<vmem>>, vector<16x1xi32>
      %201 = vector.broadcast %200 : vector<16x1xi32> to vector<16x256xi32>
      %202 = arith.cmpi eq, %199, %201 : vector<16x256xi32>
      %203 = arith.extui %202 : vector<16x256xi1> to vector<16x256xi32>
      %204 = arith.sitofp %203 : vector<16x256xi32> to vector<16x256xf32>
      %205 = tpu.iota {dimensions = array<i32: 1>} : vector<16x16xi32>
      %c0_129 = arith.constant 0 : index
      %c0_130 = arith.constant 0 : index
      %206 = vector.load %arg4[%c0_129, %c0_130] : memref<16x1xi32, #tpu.memory_space<vmem>>, vector<16x1xi32>
      %207 = vector.broadcast %206 : vector<16x1xi32> to vector<16x16xi32>
      %208 = arith.cmpi eq, %205, %207 : vector<16x16xi32>
      %209 = arith.extui %208 : vector<16x16xi1> to vector<16x16xi32>
      %210 = arith.sitofp %209 : vector<16x16xi32> to vector<16x16xf32>
      %c0_131 = arith.constant 0 : index
      %c0_132 = arith.constant 0 : index
      %211 = vector.load %arg5[%c0_131, %c0_132] : memref<256x32xf32, #tpu.memory_space<vmem>>, vector<256x32xf32>
      %cst_133 = arith.constant dense<0.000000e+00> : vector<16x32xf32>
      %212 = tpu.matmul %204, %211, %cst_133 {dimension_numbers = #tpu.dot_dimension_numbers<[1], [0], [0], [1], [0, 0, 1, 1], [], []>} : vector<16x256xf32>, vector<256x32xf32>, vector<16x32xf32> -> vector<16x32xf32>
      %c0_134 = arith.constant 0 : index
      %c0_135 = arith.constant 0 : index
      %213 = vector.load %arg6[%c0_134, %c0_135] : memref<16x32xf32, #tpu.memory_space<vmem>>, vector<16x32xf32>
      %cst_136 = arith.constant dense<0.000000e+00> : vector<16x32xf32>
      %214 = tpu.matmul %210, %213, %cst_136 {dimension_numbers = #tpu.dot_dimension_numbers<[1], [0], [0], [1], [0, 0, 1, 1], [], []>} : vector<16x16xf32>, vector<16x32xf32>, vector<16x32xf32> -> vector<16x32xf32>
      %215 = arith.addf %212, %214 : vector<16x32xf32>
      %c0_137 = arith.constant 0 : index
      %c0_138 = arith.constant 0 : index
      %216 = vector.load %arg27[%c0_137, %c0_138] : memref<16x32xf32, #tpu.memory_space<vmem>>, vector<16x32xf32>
      tpu.vector_store %arg27[%c0_137, %c0_138], %215 {strides = array<i32>} : memref<16x32xf32, #tpu.memory_space<vmem>>, vector<16x32xf32>,
    } else {
    }
    %c0 = arith.constant 0 : index
    %c0_1 = arith.constant 0 : index
    %3 = vector.load %arg27[%c0, %c0_1] : memref<16x32xf32, #tpu.memory_space<vmem>>, vector<16x32xf32>
    %4 = tpu.iota {dimensions = array<i32: 0>} : vector<16x16xi32>
    %5 = tpu.iota {dimensions = array<i32: 1>} : vector<16x16xi32>
    %c0_2 = arith.constant 0 : index
    %c0_3 = arith.constant 0 : index
    %6 = vector.load %arg2[%c0_2, %c0_3] : memref<16x1xi32, #tpu.memory_space<vmem>>, vector<16x1xi32>
    %c0_4 = arith.constant 0 : index
    %c0_5 = arith.constant 0 : index
    %7 = vector.load %arg3[%c0_4, %c0_5] : memref<1x16xi32, #tpu.memory_space<vmem>>, vector<1x16xi32>
    %8 = vector.broadcast %6 : vector<16x1xi32> to vector<16x16xi32>
    %9 = vector.broadcast %7 : vector<1x16xi32> to vector<16x16xi32>
    %10 = arith.cmpi eq, %8, %9 : vector<16x16xi32>
    %11 = arith.cmpi sle, %5, %4 : vector<16x16xi32>
    %12 = arith.andi %10, %11 : vector<16x16xi1>
    %cst = arith.constant 0.000000e+00 : f32
    %cst_6 = arith.constant -1.000000e+30 : f32
    %13 = vector.broadcast %cst : f32 to vector<16x16xf32>
    %14 = vector.broadcast %cst_6 : f32 to vector<16x16xf32>
    %15 = arith.select %12, %13, %14 : vector<16x16xi1>, vector<16x16xf32>
    %c0_7 = arith.constant 0 : index
    %c0_8 = arith.constant 0 : index
    %c0_9 = arith.constant 0 : index
    %16 = vector.load %arg7[%c0_7, %c0_8, %c0_9] : memref<1x1x32xf32, #tpu.memory_space<vmem>>, vector<1x1x32xf32>
    %17 = vector.shape_cast %16 : vector<1x1x32xf32> to vector<1x32xf32>
    %c0_10 = arith.constant 0 : index
    %c0_11 = arith.constant 0 : index
    %c0_12 = arith.constant 0 : index
    %18 = vector.load %arg8[%c0_10, %c0_11, %c0_12] : memref<1x1x32xf32, #tpu.memory_space<vmem>>, vector<1x1x32xf32>
    %19 = vector.shape_cast %18 : vector<1x1x32xf32> to vector<1x32xf32>
    %cst_13 = arith.constant dense<0.000000e+00> : vector<16xf32>
    %20 = vector.multi_reduction <add>, %3, %cst_13 [1] : vector<16x32xf32> to vector<16xf32>
    %21 = vector.shape_cast %20 : vector<16xf32> to vector<16x1xf32>
    %cst_14 = arith.constant 3.200000e+01 : f32
    %22 = vector.broadcast %cst_14 : f32 to vector<16x1xf32>
    %23 = arith.divf %21, %22 : vector<16x1xf32>
    %24 = vector.broadcast %23 : vector<16x1xf32> to vector<16x32xf32>
    %25 = arith.subf %3, %24 : vector<16x32xf32>
    %26 = arith.mulf %25, %25 : vector<16x32xf32>
    %cst_15 = arith.constant dense<0.000000e+00> : vector<16xf32>
    %27 = vector.multi_reduction <add>, %26, %cst_15 [1] : vector<16x32xf32> to vector<16xf32>
    %28 = vector.shape_cast %27 : vector<16xf32> to vector<16x1xf32>
    %cst_16 = arith.constant 3.200000e+01 : f32
    %29 = vector.broadcast %cst_16 : f32 to vector<16x1xf32>
    %30 = arith.divf %28, %29 : vector<16x1xf32>
    %31 = vector.broadcast %23 : vector<16x1xf32> to vector<16x32xf32>
    %32 = arith.subf %3, %31 : vector<16x32xf32>
    %cst_17 = arith.constant 9.99999974E-6 : f32
    %33 = vector.broadcast %cst_17 : f32 to vector<16x1xf32>
    %34 = arith.addf %30, %33 : vector<16x1xf32>
    %35 = math.rsqrt %34 : vector<16x1xf32>
    %36 = vector.broadcast %35 : vector<16x1xf32> to vector<16x32xf32>
    %37 = arith.mulf %32, %36 : vector<16x32xf32>
    %38 = vector.broadcast %17 : vector<1x32xf32> to vector<16x32xf32>
    %39 = arith.mulf %37, %38 : vector<16x32xf32>
    %40 = vector.broadcast %19 : vector<1x32xf32> to vector<16x32xf32>
    %41 = arith.addf %39, %40 : vector<16x32xf32>
    %42 = arith.truncf %41 : vector<16x32xf32> to vector<16x32xbf16>
    %cst_18 = arith.constant 0.000000e+00 : f32
    %43 = vector.broadcast %cst_18 : f32 to vector<16x32xf32>
    %c0_19 = arith.constant 0 : index
    %c0_20 = arith.constant 0 : index
    %c0_21 = arith.constant 0 : index
    %c0_22 = arith.constant 0 : index
    %44 = vector.load %arg9[%c0_19, %c0_20, %c0_21, %c0_22] : memref<1x2x32x16xbf16, #tpu.memory_space<vmem>>, vector<1x1x32x16xbf16>
    %45 = vector.shape_cast %44 : vector<1x1x32x16xbf16> to vector<32x16xbf16>
    %cst_23 = arith.constant dense<0.000000e+00> : vector<16x16xf32>
    %46 = tpu.matmul %42, %45, %cst_23 {dimension_numbers = #tpu.dot_dimension_numbers<[1], [0], [0], [1], [0, 0, 1, 1], [], []>} : vector<16x32xbf16>, vector<32x16xbf16>, vector<16x16xf32> -> vector<16x16xf32>
    %c0_24 = arith.constant 0 : index
    %c0_25 = arith.constant 0 : index
    %c0_26 = arith.constant 0 : index
    %c0_27 = arith.constant 0 : index
    %47 = vector.load %arg12[%c0_24, %c0_25, %c0_26, %c0_27] : memref<1x2x1x16xf32, #tpu.memory_space<vmem>>, vector<1x1x1x16xf32>
    %48 = vector.shape_cast %47 : vector<1x1x1x16xf32> to vector<1x16xf32>
    %49 = vector.broadcast %48 : vector<1x16xf32> to vector<16x16xf32>
    %50 = arith.addf %46, %49 : vector<16x16xf32>
    %c0_28 = arith.constant 0 : index
    %c0_29 = arith.constant 0 : index
    %c0_30 = arith.constant 0 : index
    %c0_31 = arith.constant 0 : index
    %51 = vector.load %arg10[%c0_28, %c0_29, %c0_30, %c0_31] : memref<1x2x32x16xbf16, #tpu.memory_space<vmem>>, vector<1x1x32x16xbf16>
    %52 = vector.shape_cast %51 : vector<1x1x32x16xbf16> to vector<32x16xbf16>
    %cst_32 = arith.constant dense<0.000000e+00> : vector<16x16xf32>
    %53 = tpu.matmul %42, %52, %cst_32 {dimension_numbers = #tpu.dot_dimension_numbers<[1], [0], [0], [1], [0, 0, 1, 1], [], []>} : vector<16x32xbf16>, vector<32x16xbf16>, vector<16x16xf32> -> vector<16x16xf32>
    %c0_33 = arith.constant 0 : index
    %c0_34 = arith.constant 0 : index
    %c0_35 = arith.constant 0 : index
    %c0_36 = arith.constant 0 : index
    %54 = vector.load %arg13[%c0_33, %c0_34, %c0_35, %c0_36] : memref<1x2x1x16xf32, #tpu.memory_space<vmem>>, vector<1x1x1x16xf32>
    %55 = vector.shape_cast %54 : vector<1x1x1x16xf32> to vector<1x16xf32>
    %56 = vector.broadcast %55 : vector<1x16xf32> to vector<16x16xf32>
    %57 = arith.addf %53, %56 : vector<16x16xf32>
    %c0_37 = arith.constant 0 : index
    %c0_38 = arith.constant 0 : index
    %c0_39 = arith.constant 0 : index
    %c0_40 = arith.constant 0 : index
    %58 = vector.load %arg11[%c0_37, %c0_38, %c0_39, %c0_40] : memref<1x2x32x16xbf16, #tpu.memory_space<vmem>>, vector<1x1x32x16xbf16>
    %59 = vector.shape_cast %58 : vector<1x1x32x16xbf16> to vector<32x16xbf16>
    %cst_41 = arith.constant dense<0.000000e+00> : vector<16x16xf32>
    %60 = tpu.matmul %42, %59, %cst_41 {dimension_numbers = #tpu.dot_dimension_numbers<[1], [0], [0], [1], [0, 0, 1, 1], [], []>} : vector<16x32xbf16>, vector<32x16xbf16>, vector<16x16xf32> -> vector<16x16xf32>
    %c0_42 = arith.constant 0 : index
    %c0_43 = arith.constant 0 : index
    %c0_44 = arith.constant 0 : index
    %c0_45 = arith.constant 0 : index
    %61 = vector.load %arg14[%c0_42, %c0_43, %c0_44, %c0_45] : memref<1x2x1x16xf32, #tpu.memory_space<vmem>>, vector<1x1x1x16xf32>
    %62 = vector.shape_cast %61 : vector<1x1x1x16xf32> to vector<1x16xf32>
    %63 = vector.broadcast %62 : vector<1x16xf32> to vector<16x16xf32>
    %64 = arith.addf %60, %63 : vector<16x16xf32>
    %65 = arith.truncf %50 : vector<16x16xf32> to vector<16x16xbf16>
    %66 = arith.truncf %57 : vector<16x16xf32> to vector<16x16xbf16>
    %cst_46 = arith.constant dense<0.000000e+00> : vector<16x16xf32>
    %67 = tpu.matmul %65, %66, %cst_46 {dimension_numbers = #tpu.dot_dimension_numbers<[1], [1], [0], [0], [0, 0, 1, 0], [], []>} : vector<16x16xbf16>, vector<16x16xbf16>, vector<16x16xf32> -> vector<16x16xf32>
    %cst_47 = arith.constant 2.500000e-01 : f32
    %68 = vector.broadcast %cst_47 : f32 to vector<16x16xf32>
    %69 = arith.mulf %67, %68 : vector<16x16xf32>
    %70 = arith.addf %69, %15 : vector<16x16xf32>
    %cst_48 = arith.constant dense<0xFF800000> : vector<16xf32>
    %71 = vector.multi_reduction <maximumf>, %70, %cst_48 [1] : vector<16x16xf32> to vector<16xf32>
    %72 = vector.shape_cast %71 : vector<16xf32> to vector<16x1xf32>
    %73 = vector.broadcast %72 : vector<16x1xf32> to vector<16x16xf32>
    %74 = arith.subf %70, %73 : vector<16x16xf32>
    %75 = math.exp %74 : vector<16x16xf32>
    %cst_49 = arith.constant dense<0.000000e+00> : vector<16xf32>
    %76 = vector.multi_reduction <add>, %75, %cst_49 [1] : vector<16x16xf32> to vector<16xf32>
    %77 = vector.shape_cast %76 : vector<16xf32> to vector<16x1xf32>
    %78 = tpu.reciprocal %77 {approx = true} : vector<16x1xf32> -> vector<16x1xf32>
    %79 = vector.broadcast %78 : vector<16x1xf32> to vector<16x16xf32>
    %80 = arith.mulf %75, %79 : vector<16x16xf32>
    %81 = arith.truncf %80 : vector<16x16xf32> to vector<16x16xbf16>
    %82 = arith.truncf %64 : vector<16x16xf32> to vector<16x16xbf16>
    %cst_50 = arith.constant dense<0.000000e+00> : vector<16x16xf32>
    %83 = tpu.matmul %81, %82, %cst_50 {dimension_numbers = #tpu.dot_dimension_numbers<[1], [0], [0], [1], [0, 0, 1, 1], [], []>} : vector<16x16xbf16>, vector<16x16xbf16>, vector<16x16xf32> -> vector<16x16xf32>
    %84 = arith.truncf %83 : vector<16x16xf32> to vector<16x16xbf16>
    %c0_51 = arith.constant 0 : index
    %c0_52 = arith.constant 0 : index
    %c0_53 = arith.constant 0 : index
    %c0_54 = arith.constant 0 : index
    %85 = vector.load %arg15[%c0_51, %c0_52, %c0_53, %c0_54] : memref<1x2x16x32xbf16, #tpu.memory_space<vmem>>, vector<1x1x16x32xbf16>
    %86 = vector.shape_cast %85 : vector<1x1x16x32xbf16> to vector<16x32xbf16>
    %cst_55 = arith.constant dense<0.000000e+00> : vector<16x32xf32>
    %87 = tpu.matmul %84, %86, %cst_55 {dimension_numbers = #tpu.dot_dimension_numbers<[1], [0], [0], [1], [0, 0, 1, 1], [], []>} : vector<16x16xbf16>, vector<16x32xbf16>, vector<16x32xf32> -> vector<16x32xf32>
    %88 = arith.addf %43, %87 : vector<16x32xf32>
    %c0_56 = arith.constant 0 : index
    %c1 = arith.constant 1 : index
    %c0_57 = arith.constant 0 : index
    %c0_58 = arith.constant 0 : index
    %89 = vector.load %arg9[%c0_56, %c1, %c0_57, %c0_58] : memref<1x2x32x16xbf16, #tpu.memory_space<vmem>>, vector<1x1x32x16xbf16>
    %90 = vector.shape_cast %89 : vector<1x1x32x16xbf16> to vector<32x16xbf16>
    %cst_59 = arith.constant dense<0.000000e+00> : vector<16x16xf32>
    %91 = tpu.matmul %42, %90, %cst_59 {dimension_numbers = #tpu.dot_dimension_numbers<[1], [0], [0], [1], [0, 0, 1, 1], [], []>} : vector<16x32xbf16>, vector<32x16xbf16>, vector<16x16xf32> -> vector<16x16xf32>
    %c0_60 = arith.constant 0 : index
    %c1_61 = arith.constant 1 : index
    %c0_62 = arith.constant 0 : index
    %c0_63 = arith.constant 0 : index
    %92 = vector.load %arg12[%c0_60, %c1_61, %c0_62, %c0_63] : memref<1x2x1x16xf32, #tpu.memory_space<vmem>>, vector<1x1x1x16xf32>
    %93 = vector.shape_cast %92 : vector<1x1x1x16xf32> to vector<1x16xf32>
    %94 = vector.broadcast %93 : vector<1x16xf32> to vector<16x16xf32>
    %95 = arith.addf %91, %94 : vector<16x16xf32>
    %c0_64 = arith.constant 0 : index
    %c1_65 = arith.constant 1 : index
    %c0_66 = arith.constant 0 : index
    %c0_67 = arith.constant 0 : index
    %96 = vector.load %arg10[%c0_64, %c1_65, %c0_66, %c0_67] : memref<1x2x32x16xbf16, #tpu.memory_space<vmem>>, vector<1x1x32x16xbf16>
    %97 = vector.shape_cast %96 : vector<1x1x32x16xbf16> to vector<32x16xbf16>
    %cst_68 = arith.constant dense<0.000000e+00> : vector<16x16xf32>
    %98 = tpu.matmul %42, %97, %cst_68 {dimension_numbers = #tpu.dot_dimension_numbers<[1], [0], [0], [1], [0, 0, 1, 1], [], []>} : vector<16x32xbf16>, vector<32x16xbf16>, vector<16x16xf32> -> vector<16x16xf32>
    %c0_69 = arith.constant 0 : index
    %c1_70 = arith.constant 1 : index
    %c0_71 = arith.constant 0 : index
    %c0_72 = arith.constant 0 : index
    %99 = vector.load %arg13[%c0_69, %c1_70, %c0_71, %c0_72] : memref<1x2x1x16xf32, #tpu.memory_space<vmem>>, vector<1x1x1x16xf32>
    %100 = vector.shape_cast %99 : vector<1x1x1x16xf32> to vector<1x16xf32>
    %101 = vector.broadcast %100 : vector<1x16xf32> to vector<16x16xf32>
    %102 = arith.addf %98, %101 : vector<16x16xf32>
    %c0_73 = arith.constant 0 : index
    %c1_74 = arith.constant 1 : index
    %c0_75 = arith.constant 0 : index
    %c0_76 = arith.constant 0 : index
    %103 = vector.load %arg11[%c0_73, %c1_74, %c0_75, %c0_76] : memref<1x2x32x16xbf16, #tpu.memory_space<vmem>>, vector<1x1x32x16xbf16>
    %104 = vector.shape_cast %103 : vector<1x1x32x16xbf16> to vector<32x16xbf16>
    %cst_77 = arith.constant dense<0.000000e+00> : vector<16x16xf32>
    %105 = tpu.matmul %42, %104, %cst_77 {dimension_numbers = #tpu.dot_dimension_numbers<[1], [0], [0], [1], [0, 0, 1, 1], [], []>} : vector<16x32xbf16>, vector<32x16xbf16>, vector<16x16xf32> -> vector<16x16xf32>
    %c0_78 = arith.constant 0 : index
    %c1_79 = arith.constant 1 : index
    %c0_80 = arith.constant 0 : index
    %c0_81 = arith.constant 0 : index
    %106 = vector.load %arg14[%c0_78, %c1_79, %c0_80, %c0_81] : memref<1x2x1x16xf32, #tpu.memory_space<vmem>>, vector<1x1x1x16xf32>
    %107 = vector.shape_cast %106 : vector<1x1x1x16xf32> to vector<1x16xf32>
    %108 = vector.broadcast %107 : vector<1x16xf32> to vector<16x16xf32>
    %109 = arith.addf %105, %108 : vector<16x16xf32>
    %110 = arith.truncf %95 : vector<16x16xf32> to vector<16x16xbf16>
    %111 = arith.truncf %102 : vector<16x16xf32> to vector<16x16xbf16>
    %cst_82 = arith.constant dense<0.000000e+00> : vector<16x16xf32>
    %112 = tpu.matmul %110, %111, %cst_82 {dimension_numbers = #tpu.dot_dimension_numbers<[1], [1], [0], [0], [0, 0, 1, 0], [], []>} : vector<16x16xbf16>, vector<16x16xbf16>, vector<16x16xf32> -> vector<16x16xf32>
    %cst_83 = arith.constant 2.500000e-01 : f32
    %113 = vector.broadcast %cst_83 : f32 to vector<16x16xf32>
    %114 = arith.mulf %112, %113 : vector<16x16xf32>
    %115 = arith.addf %114, %15 : vector<16x16xf32>
    %cst_84 = arith.constant dense<0xFF800000> : vector<16xf32>
    %116 = vector.multi_reduction <maximumf>, %115, %cst_84 [1] : vector<16x16xf32> to vector<16xf32>
    %117 = vector.shape_cast %116 : vector<16xf32> to vector<16x1xf32>
    %118 = vector.broadcast %117 : vector<16x1xf32> to vector<16x16xf32>
    %119 = arith.subf %115, %118 : vector<16x16xf32>
    %120 = math.exp %119 : vector<16x16xf32>
    %cst_85 = arith.constant dense<0.000000e+00> : vector<16xf32>
    %121 = vector.multi_reduction <add>, %120, %cst_85 [1] : vector<16x16xf32> to vector<16xf32>
    %122 = vector.shape_cast %121 : vector<16xf32> to vector<16x1xf32>
    %123 = tpu.reciprocal %122 {approx = true} : vector<16x1xf32> -> vector<16x1xf32>
    %124 = vector.broadcast %123 : vector<16x1xf32> to vector<16x16xf32>
    %125 = arith.mulf %120, %124 : vector<16x16xf32>
    %126 = arith.truncf %125 : vector<16x16xf32> to vector<16x16xbf16>
    %127 = arith.truncf %109 : vector<16x16xf32> to vector<16x16xbf16>
    %cst_86 = arith.constant dense<0.000000e+00> : vector<16x16xf32>
    %128 = tpu.matmul %126, %127, %cst_86 {dimension_numbers = #tpu.dot_dimension_numbers<[1], [0], [0], [1], [0, 0, 1, 1], [], []>} : vector<16x16xbf16>, vector<16x16xbf16>, vector<16x16xf32> -> vector<16x16xf32>
    %129 = arith.truncf %128 : vector<16x16xf32> to vector<16x16xbf16>
    %c0_87 = arith.constant 0 : index
    %c1_88 = arith.constant 1 : index
    %c0_89 = arith.constant 0 : index
    %c0_90 = arith.constant 0 : index
    %130 = vector.load %arg15[%c0_87, %c1_88, %c0_89, %c0_90] : memref<1x2x16x32xbf16, #tpu.memory_space<vmem>>, vector<1x1x16x32xbf16>
    %131 = vector.shape_cast %130 : vector<1x1x16x32xbf16> to vector<16x32xbf16>
    %cst_91 = arith.constant dense<0.000000e+00> : vector<16x32xf32>
    %132 = tpu.matmul %129, %131, %cst_91 {dimension_numbers = #tpu.dot_dimension_numbers<[1], [0], [0], [1], [0, 0, 1, 1], [], []>} : vector<16x16xbf16>, vector<16x32xbf16>, vector<16x32xf32> -> vector<16x32xf32>
    %133 = arith.addf %88, %132 : vector<16x32xf32>
    %134 = arith.addf %3, %133 : vector<16x32xf32>
    %c0_92 = arith.constant 0 : index
    %c0_93 = arith.constant 0 : index
    %c0_94 = arith.constant 0 : index
    %135 = vector.load %arg16[%c0_92, %c0_93, %c0_94] : memref<1x1x32xf32, #tpu.memory_space<vmem>>, vector<1x1x32xf32>
    %136 = vector.shape_cast %135 : vector<1x1x32xf32> to vector<1x32xf32>
    %137 = vector.broadcast %136 : vector<1x32xf32> to vector<16x32xf32>
    %138 = arith.addf %134, %137 : vector<16x32xf32>
    %c0_95 = arith.constant 0 : index
    %c0_96 = arith.constant 0 : index
    %c0_97 = arith.constant 0 : index
    %139 = vector.load %arg17[%c0_95, %c0_96, %c0_97] : memref<1x1x32xf32, #tpu.memory_space<vmem>>, vector<1x1x32xf32>
    %140 = vector.shape_cast %139 : vector<1x1x32xf32> to vector<1x32xf32>
    %c0_98 = arith.constant 0 : index
    %c0_99 = arith.constant 0 : index
    %c0_100 = arith.constant 0 : index
    %141 = vector.load %arg18[%c0_98, %c0_99, %c0_100] : memref<1x1x32xf32, #tpu.memory_space<vmem>>, vector<1x1x32xf32>
    %142 = vector.shape_cast %141 : vector<1x1x32xf32> to vector<1x32xf32>
    %cst_101 = arith.constant dense<0.000000e+00> : vector<16xf32>
    %143 = vector.multi_reduction <add>, %138, %cst_101 [1] : vector<16x32xf32> to vector<16xf32>
    %144 = vector.shape_cast %143 : vector<16xf32> to vector<16x1xf32>
    %cst_102 = arith.constant 3.200000e+01 : f32
    %145 = vector.broadcast %cst_102 : f32 to vector<16x1xf32>
    %146 = arith.divf %144, %145 : vector<16x1xf32>
    %147 = vector.broadcast %146 : vector<16x1xf32> to vector<16x32xf32>
    %148 = arith.subf %138, %147 : vector<16x32xf32>
    %149 = arith.mulf %148, %148 : vector<16x32xf32>
    %cst_103 = arith.constant dense<0.000000e+00> : vector<16xf32>
    %150 = vector.multi_reduction <add>, %149, %cst_103 [1] : vector<16x32xf32> to vector<16xf32>
    %151 = vector.shape_cast %150 : vector<16xf32> to vector<16x1xf32>
    %cst_104 = arith.constant 3.200000e+01 : f32
    %152 = vector.broadcast %cst_104 : f32 to vector<16x1xf32>
    %153 = arith.divf %151, %152 : vector<16x1xf32>
    %154 = vector.broadcast %146 : vector<16x1xf32> to vector<16x32xf32>
    %155 = arith.subf %138, %154 : vector<16x32xf32>
    %cst_105 = arith.constant 9.99999974E-6 : f32
    %156 = vector.broadcast %cst_105 : f32 to vector<16x1xf32>
    %157 = arith.addf %153, %156 : vector<16x1xf32>
    %158 = math.rsqrt %157 : vector<16x1xf32>
    %159 = vector.broadcast %158 : vector<16x1xf32> to vector<16x32xf32>
    %160 = arith.mulf %155, %159 : vector<16x32xf32>
    %161 = vector.broadcast %140 : vector<1x32xf32> to vector<16x32xf32>
    %162 = arith.mulf %160, %161 : vector<16x32xf32>
    %163 = vector.broadcast %142 : vector<1x32xf32> to vector<16x32xf32>
    %164 = arith.addf %162, %163 : vector<16x32xf32>
    %165 = arith.truncf %164 : vector<16x32xf32> to vector<16x32xbf16>
    %c0_106 = arith.constant 0 : index
    %c0_107 = arith.constant 0 : index
    %c0_108 = arith.constant 0 : index
    %166 = vector.load %arg19[%c0_106, %c0_107, %c0_108] : memref<1x32x128xbf16, #tpu.memory_space<vmem>>, vector<1x32x128xbf16>
    %167 = vector.shape_cast %166 : vector<1x32x128xbf16> to vector<32x128xbf16>
    %cst_109 = arith.constant dense<0.000000e+00> : vector<16x128xf32>
    %168 = tpu.matmul %165, %167, %cst_109 {dimension_numbers = #tpu.dot_dimension_numbers<[1], [0], [0], [1], [0, 0, 1, 1], [], []>} : vector<16x32xbf16>, vector<32x128xbf16>, vector<16x128xf32> -> vector<16x128xf32>
    %c0_110 = arith.constant 0 : index
    %c0_111 = arith.constant 0 : index
    %c0_112 = arith.constant 0 : index
    %169 = vector.load %arg20[%c0_110, %c0_111, %c0_112] : memref<1x1x128xf32, #tpu.memory_space<vmem>>, vector<1x1x128xf32>
    %170 = vector.shape_cast %169 : vector<1x1x128xf32> to vector<1x128xf32>
    %171 = vector.broadcast %170 : vector<1x128xf32> to vector<16x128xf32>
    %172 = arith.addf %168, %171 : vector<16x128xf32>
    %cst_113 = arith.constant 5.000000e-01 : f32
    %173 = vector.broadcast %cst_113 : f32 to vector<16x128xf32>
    %174 = arith.mulf %173, %172 : vector<16x128xf32>
    %cst_114 = arith.constant 4.471500e-02 : f32
    %175 = vector.broadcast %cst_114 : f32 to vector<16x128xf32>
    %176 = arith.mulf %175, %172 : vector<16x128xf32>
    %177 = arith.mulf %176, %172 : vector<16x128xf32>
    %178 = arith.mulf %177, %172 : vector<16x128xf32>
    %179 = arith.addf %172, %178 : vector<16x128xf32>
    %cst_115 = arith.constant 0.797884583 : f32
    %180 = vector.broadcast %cst_115 : f32 to vector<16x128xf32>
    %181 = arith.mulf %180, %179 : vector<16x128xf32>
    %182 = math.tanh %181 : vector<16x128xf32>
    %cst_116 = arith.constant 1.000000e+00 : f32
    %183 = vector.broadcast %cst_116 : f32 to vector<16x128xf32>
    %184 = arith.addf %183, %182 : vector<16x128xf32>
    %185 = arith.mulf %174, %184 : vector<16x128xf32>
    %186 = arith.truncf %185 : vector<16x128xf32> to vector<16x128xbf16>
    %c0_117 = arith.constant 0 : index
    %c0_118 = arith.constant 0 : index
    %c0_119 = arith.constant 0 : index
    %187 = vector.load %arg21[%c0_117, %c0_118, %c0_119] : memref<1x128x32xbf16, #tpu.memory_space<vmem>>, vector<1x128x32xbf16>
    %188 = vector.shape_cast %187 : vector<1x128x32xbf16> to vector<128x32xbf16>
    %cst_120 = arith.constant dense<0.000000e+00> : vector<16x32xf32>
    %189 = tpu.matmul %186, %188, %cst_120 {dimension_numbers = #tpu.dot_dimension_numbers<[1], [0], [0], [1], [0, 0, 1, 1], [], []>} : vector<16x128xbf16>, vector<128x32xbf16>, vector<16x32xf32> -> vector<16x32xf32>
    %c0_121 = arith.constant 0 : index
    %c0_122 = arith.constant 0 : index
    %c0_123 = arith.constant 0 : index
    %190 = vector.load %arg22[%c0_121, %c0_122, %c0_123] : memref<1x1x32xf32, #tpu.memory_space<vmem>>, vector<1x1x32xf32>
    %191 = vector.shape_cast %190 : vector<1x1x32xf32> to vector<1x32xf32>
    %192 = vector.broadcast %191 : vector<1x32xf32> to vector<16x32xf32>
    %193 = arith.addf %189, %192 : vector<16x32xf32>
    %194 = arith.addf %138, %193 : vector<16x32xf32>
    %c0_124 = arith.constant 0 : index
    %c0_125 = arith.constant 0 : index
    %195 = vector.load %arg27[%c0_124, %c0_125] : memref<16x32xf32, #tpu.memory_space<vmem>>, vector<16x32xf32>
    tpu.vector_store %arg27[%c0_124, %c0_125], %194 {strides = array<i32>} : memref<16x32xf32, #tpu.memory_space<vmem>>, vector<16x32xf32>,
    %c1_i32 = arith.constant 1 : i32
    %196 = arith.cmpi eq, %arg0, %c1_i32 : i32
    %197 = arith.extui %196 : i1 to i32
    %c0_i32_126 = arith.constant 0 : i32
    %198 = arith.cmpi ne, %197, %c0_i32_126 : i32
    scf.if %198 {
      %c0_127 = arith.constant 0 : index
      %c0_128 = arith.constant 0 : index
      %199 = vector.load %arg23[%c0_127, %c0_128] : memref<1x32xf32, #tpu.memory_space<vmem>>, vector<1x32xf32>
      %c0_129 = arith.constant 0 : index
      %c0_130 = arith.constant 0 : index
      %200 = vector.load %arg24[%c0_129, %c0_130] : memref<1x32xf32, #tpu.memory_space<vmem>>, vector<1x32xf32>
      %cst_131 = arith.constant dense<0.000000e+00> : vector<16xf32>
      %201 = vector.multi_reduction <add>, %194, %cst_131 [1] : vector<16x32xf32> to vector<16xf32>
      %202 = vector.shape_cast %201 : vector<16xf32> to vector<16x1xf32>
      %cst_132 = arith.constant 3.200000e+01 : f32
      %203 = vector.broadcast %cst_132 : f32 to vector<16x1xf32>
      %204 = arith.divf %202, %203 : vector<16x1xf32>
      %205 = vector.broadcast %204 : vector<16x1xf32> to vector<16x32xf32>
      %206 = arith.subf %194, %205 : vector<16x32xf32>
      %207 = arith.mulf %206, %206 : vector<16x32xf32>
      %cst_133 = arith.constant dense<0.000000e+00> : vector<16xf32>
      %208 = vector.multi_reduction <add>, %207, %cst_133 [1] : vector<16x32xf32> to vector<16xf32>
      %209 = vector.shape_cast %208 : vector<16xf32> to vector<16x1xf32>
      %cst_134 = arith.constant 3.200000e+01 : f32
      %210 = vector.broadcast %cst_134 : f32 to vector<16x1xf32>
      %211 = arith.divf %209, %210 : vector<16x1xf32>
      %212 = vector.broadcast %204 : vector<16x1xf32> to vector<16x32xf32>
      %213 = arith.subf %194, %212 : vector<16x32xf32>
      %cst_135 = arith.constant 9.99999974E-6 : f32
      %214 = vector.broadcast %cst_135 : f32 to vector<16x1xf32>
      %215 = arith.addf %211, %214 : vector<16x1xf32>
      %216 = math.rsqrt %215 : vector<16x1xf32>
      %217 = vector.broadcast %216 : vector<16x1xf32> to vector<16x32xf32>
      %218 = arith.mulf %213, %217 : vector<16x32xf32>
      %219 = vector.broadcast %199 : vector<1x32xf32> to vector<16x32xf32>
      %220 = arith.mulf %218, %219 : vector<16x32xf32>
      %221 = vector.broadcast %200 : vector<1x32xf32> to vector<16x32xf32>
      %222 = arith.addf %220, %221 : vector<16x32xf32>
      %223 = arith.truncf %222 : vector<16x32xf32> to vector<16x32xbf16>
      %c0_136 = arith.constant 0 : index
      %c0_137 = arith.constant 0 : index
      %224 = vector.load %arg25[%c0_136, %c0_137] : memref<32x256xbf16, #tpu.memory_space<vmem>>, vector<32x256xbf16>
      %cst_138 = arith.constant dense<0.000000e+00> : vector<16x256xf32>
      %225 = tpu.matmul %223, %224, %cst_138 {dimension_numbers = #tpu.dot_dimension_numbers<[1], [0], [0], [1], [0, 0, 1, 1], [], []>} : vector<16x32xbf16>, vector<32x256xbf16>, vector<16x256xf32> -> vector<16x256xf32>
      %c0_139 = arith.constant 0 : index
      %c0_140 = arith.constant 0 : index
      %226 = vector.load %arg26[%c0_139, %c0_140] : memref<16x256xf32, #tpu.memory_space<vmem>>, vector<16x256xf32>
      tpu.vector_store %arg26[%c0_139, %c0_140], %225 {strides = array<i32>} : memref<16x256xf32, #tpu.memory_space<vmem>>, vector<16x256xf32>,
    } else {
    }
    return
  }
  func.func @transform_0(%arg0: i32) -> (i32, i32) {
    %c0_i32 = arith.constant 0 : i32
    %c0_i32_0 = arith.constant 0 : i32
    %c0_i32_1 = arith.constant 0 : i32
    return %c0_i32, %c0_i32_0 : i32, i32
  }
  func.func @transform_1(%arg0: i32) -> (i32, i32) {
    %c0_i32 = arith.constant 0 : i32
    %c0_i32_0 = arith.constant 0 : i32
    %c0_i32_1 = arith.constant 0 : i32
    return %c0_i32, %c0_i32_0 : i32, i32
  }
  func.func @transform_2(%arg0: i32) -> (i32, i32) {
    %c0_i32 = arith.constant 0 : i32
    %c0_i32_0 = arith.constant 0 : i32
    %c0_i32_1 = arith.constant 0 : i32
    return %c0_i32, %c0_i32_0 : i32, i32
  }
  func.func @transform_3(%arg0: i32) -> (i32, i32) {
    %c0_i32 = arith.constant 0 : i32
    %c0_i32_0 = arith.constant 0 : i32
    %c0_i32_1 = arith.constant 0 : i32
    return %c0_i32, %c0_i32_0 : i32, i32
  }
  func.func @transform_4(%arg0: i32) -> (i32, i32) {
    %c0_i32 = arith.constant 0 : i32
    %c0_i32_0 = arith.constant 0 : i32
    %c0_i32_1 = arith.constant 0 : i32
    return %c0_i32, %c0_i32_0 : i32, i32
  }
  func.func @transform_5(%arg0: i32) -> (i32, i32) {
    %c0_i32 = arith.constant 0 : i32
    %c0_i32_0 = arith.constant 0 : i32
    %c0_i32_1 = arith.constant 0 : i32
    return %c0_i32, %c0_i32_0 : i32, i32
  }
  func.func @transform_6(%arg0: i32) -> (i32, i32, i32) {
    %c0_i32 = arith.constant 0 : i32
    %c0_i32_0 = arith.constant 0 : i32
    %c0_i32_1 = arith.constant 0 : i32
    return %arg0, %c0_i32, %c0_i32_0 : i32, i32, i32
  }
  func.func @transform_7(%arg0: i32) -> (i32, i32, i32) {
    %c0_i32 = arith.constant 0 : i32
    %c0_i32_0 = arith.constant 0 : i32
    %c0_i32_1 = arith.constant 0 : i32
    return %arg0, %c0_i32, %c0_i32_0 : i32, i32, i32
  }
  func.func @transform_8(%arg0: i32) -> (i32, i32, i32, i32) {
    %c0_i32 = arith.constant 0 : i32
    %c0_i32_0 = arith.constant 0 : i32
    %c0_i32_1 = arith.constant 0 : i32
    %c0_i32_2 = arith.constant 0 : i32
    return %arg0, %c0_i32, %c0_i32_0, %c0_i32_1 : i32, i32, i32, i32
  }
  func.func @transform_9(%arg0: i32) -> (i32, i32, i32, i32) {
    %c0_i32 = arith.constant 0 : i32
    %c0_i32_0 = arith.constant 0 : i32
    %c0_i32_1 = arith.constant 0 : i32
    %c0_i32_2 = arith.constant 0 : i32
    return %arg0, %c0_i32, %c0_i32_0, %c0_i32_1 : i32, i32, i32, i32
  }
  func.func @transform_10(%arg0: i32) -> (i32, i32, i32, i32) {
    %c0_i32 = arith.constant 0 : i32
    %c0_i32_0 = arith.constant 0 : i32
    %c0_i32_1 = arith.constant 0 : i32
    %c0_i32_2 = arith.constant 0 : i32
    return %arg0, %c0_i32, %c0_i32_0, %c0_i32_1 : i32, i32, i32, i32
  }
  func.func @transform_11(%arg0: i32) -> (i32, i32, i32, i32) {
    %c0_i32 = arith.constant 0 : i32
    %c0_i32_0 = arith.constant 0 : i32
    %c0_i32_1 = arith.constant 0 : i32
    %c0_i32_2 = arith.constant 0 : i32
    return %arg0, %c0_i32, %c0_i32_0, %c0_i32_1 : i32, i32, i32, i32
  }
  func.func @transform_12(%arg0: i32) -> (i32, i32, i32, i32) {
    %c0_i32 = arith.constant 0 : i32
    %c0_i32_0 = arith.constant 0 : i32
    %c0_i32_1 = arith.constant 0 : i32
    %c0_i32_2 = arith.constant 0 : i32
    return %arg0, %c0_i32, %c0_i32_0, %c0_i32_1 : i32, i32, i32, i32
  }
  func.func @transform_13(%arg0: i32) -> (i32, i32, i32, i32) {
    %c0_i32 = arith.constant 0 : i32
    %c0_i32_0 = arith.constant 0 : i32
    %c0_i32_1 = arith.constant 0 : i32
    %c0_i32_2 = arith.constant 0 : i32
    return %arg0, %c0_i32, %c0_i32_0, %c0_i32_1 : i32, i32, i32, i32
  }
  func.func @transform_14(%arg0: i32) -> (i32, i32, i32, i32) {
    %c0_i32 = arith.constant 0 : i32
    %c0_i32_0 = arith.constant 0 : i32
    %c0_i32_1 = arith.constant 0 : i32
    %c0_i32_2 = arith.constant 0 : i32
    return %arg0, %c0_i32, %c0_i32_0, %c0_i32_1 : i32, i32, i32, i32
  }
  func.func @transform_15(%arg0: i32) -> (i32, i32, i32) {
    %c0_i32 = arith.constant 0 : i32
    %c0_i32_0 = arith.constant 0 : i32
    %c0_i32_1 = arith.constant 0 : i32
    return %arg0, %c0_i32, %c0_i32_0 : i32, i32, i32
  }
  func.func @transform_16(%arg0: i32) -> (i32, i32, i32) {
    %c0_i32 = arith.constant 0 : i32
    %c0_i32_0 = arith.constant 0 : i32
    %c0_i32_1 = arith.constant 0 : i32
    return %arg0, %c0_i32, %c0_i32_0 : i32, i32, i32
  }
  func.func @transform_17(%arg0: i32) -> (i32, i32, i32) {
    %c0_i32 = arith.constant 0 : i32
    %c0_i32_0 = arith.constant 0 : i32
    %c0_i32_1 = arith.constant 0 : i32
    return %arg0, %c0_i32, %c0_i32_0 : i32, i32, i32
  }
  func.func @transform_18(%arg0: i32) -> (i32, i32, i32) {
    %c0_i32 = arith.constant 0 : i32
    %c0_i32_0 = arith.constant 0 : i32
    %c0_i32_1 = arith.constant 0 : i32
    return %arg0, %c0_i32, %c0_i32_0 : i32, i32, i32
  }
  func.func @transform_19(%arg0: i32) -> (i32, i32, i32) {
    %c0_i32 = arith.constant 0 : i32
    %c0_i32_0 = arith.constant 0 : i32
    %c0_i32_1 = arith.constant 0 : i32
    return %arg0, %c0_i32, %c0_i32_0 : i32, i32, i32
  }
  func.func @transform_20(%arg0: i32) -> (i32, i32, i32) {
    %c0_i32 = arith.constant 0 : i32
    %c0_i32_0 = arith.constant 0 : i32
    %c0_i32_1 = arith.constant 0 : i32
    return %arg0, %c0_i32, %c0_i32_0 : i32, i32, i32
  }
  func.func @transform_21(%arg0: i32) -> (i32, i32, i32) {
    %c0_i32 = arith.constant 0 : i32
    %c0_i32_0 = arith.constant 0 : i32
    %c0_i32_1 = arith.constant 0 : i32
    return %arg0, %c0_i32, %c0_i32_0 : i32, i32, i32
  }
  func.func @transform_22(%arg0: i32) -> (i32, i32) {
    %c0_i32 = arith.constant 0 : i32
    %c0_i32_0 = arith.constant 0 : i32
    %c0_i32_1 = arith.constant 0 : i32
    return %c0_i32, %c0_i32_0 : i32, i32
  }
  func.func @transform_23(%arg0: i32) -> (i32, i32) {
    %c0_i32 = arith.constant 0 : i32
    %c0_i32_0 = arith.constant 0 : i32
    %c0_i32_1 = arith.constant 0 : i32
    return %c0_i32, %c0_i32_0 : i32, i32
  }
  func.func @transform_24(%arg0: i32) -> (i32, i32) {
    %c0_i32 = arith.constant 0 : i32
    %c0_i32_0 = arith.constant 0 : i32
    %c0_i32_1 = arith.constant 0 : i32
    return %c0_i32, %c0_i32_0 : i32, i32
  }
  func.func @transform_25(%arg0: i32) -> (i32, i32) {
    %c0_i32 = arith.constant 0 : i32
    %c0_i32_0 = arith.constant 0 : i32
    %c0_i32_1 = arith.constant 0 : i32
    return %c0_i32, %c0_i32_0 : i32, i32
  }
}

</mosaic_0001>

<llo_original>
// kernel: gpt_forward.1
$region0: #{gpt_forward.1}
  #allocation0 [shape = 'u32[]', space=smem, size = 0x4, offset = 0x4, fixed_abs, tag = 'smem constant byte address 0x4 - core index']
  #allocation1 [shape = 'u32[144,128]{1,0:T(1,128)}', space=vmem, size = 0x12000, scoped, tag = 'internal scratch']
  #allocation2 [shape = 'f32[16,32]{1,0:T(8,128)}', space=vmem, size = 0x2000, scoped, tag = 'scratch operand']
  %s0 = inlined_call_operand.vmem [shape: s32[16,1], index: 0, kind: input, shape index: {}]
  %s1 = inlined_call_operand.vmem [shape: s32[16,1], index: 1, kind: input, shape index: {}]
  %s2 = inlined_call_operand.vmem [shape: s32[1,16], index: 2, kind: input, shape index: {}]
  %s3 = inlined_call_operand.vmem [shape: s32[16,1], index: 3, kind: input, shape index: {}]
  %s4 = inlined_call_operand.vmem [shape: f32[256,32], index: 4, kind: input, shape index: {}]
  %s5 = inlined_call_operand.vmem [shape: f32[16,32], index: 5, kind: input, shape index: {}]
  %s6 = inlined_call_operand.vmem [shape: f32[2,1,32], index: 6, kind: input, shape index: {}]
  %s7 = inlined_call_operand.vmem [shape: f32[2,1,32], index: 7, kind: input, shape index: {}]
  %s8 = inlined_call_operand.vmem [shape: bf16[2,2,32,16], index: 8, kind: input, shape index: {}]
  %s9 = inlined_call_operand.vmem [shape: bf16[2,2,32,16], index: 9, kind: input, shape index: {}]
  %s10 = inlined_call_operand.vmem [shape: bf16[2,2,32,16], index: 10, kind: input, shape index: {}]
  %s11 = inlined_call_operand.vmem [shape: f32[2,2,1,16], index: 11, kind: input, shape index: {}]
  %s12 = inlined_call_operand.vmem [shape: f32[2,2,1,16], index: 12, kind: input, shape index: {}]
  %s13 = inlined_call_operand.vmem [shape: f32[2,2,1,16], index: 13, kind: input, shape index: {}]
  %s14 = inlined_call_operand.vmem [shape: bf16[2,2,16,32], index: 14, kind: input, shape index: {}]
  %s15 = inlined_call_operand.vmem [shape: f32[2,1,32], index: 15, kind: input, shape index: {}]
  %s16 = inlined_call_operand.vmem [shape: f32[2,1,32], index: 16, kind: input, shape index: {}]
  %s17 = inlined_call_operand.vmem [shape: f32[2,1,32], index: 17, kind: input, shape index: {}]
  %s18 = inlined_call_operand.vmem [shape: bf16[2,32,128], index: 18, kind: input, shape index: {}]
  %s19 = inlined_call_operand.vmem [shape: f32[2,1,128], index: 19, kind: input, shape index: {}]
  %s20 = inlined_call_operand.vmem [shape: bf16[2,128,32], index: 20, kind: input, shape index: {}]
  %s21 = inlined_call_operand.vmem [shape: f32[2,1,32], index: 21, kind: input, shape index: {}]
  %s22 = inlined_call_operand.vmem [shape: f32[1,32], index: 22, kind: input, shape index: {}]
  %s23 = inlined_call_operand.vmem [shape: f32[1,32], index: 23, kind: input, shape index: {}]
  %s24 = inlined_call_operand.vmem [shape: bf16[32,256], index: 24, kind: input, shape index: {}]
  %s25 = inlined_call_operand.hbm [shape: f32[16,256], index: 25, kind: output, shape index: {}]
  %s26 = sld [smem:[#allocation0]]
  $region141: #{gpt_forward.1} parent=0
    _
  %s28 = ssub.s32 1, %s26
  %s29 = scalar_select 0, %s28, %s26
  $region1: #{gpt_forward.1} parent=0
    #allocation3 [shape = 'u8[16384]{0}', space=vmem, size = 0x4000, scoped, tag = 'output window, operand 0, single buffered']
    #allocation4 [shape = 's32[2]{0}', space=sflag, size = 0x8, scoped, tag = 'scoped memory for gpt_forward.1']
    %30 = vsyncpa [#allocation4], 0
    loop: start=0, step=1, limit=4
    $region2: #{gpt_forward.1} parent=1 // loop_pre_header
      _
    $region3: #{gpt_forward.1} parent=1 // loop_header
      %s32 = sphi 0, %s36
      %p33 = scmp.ge.s32.totalorder %s32, 4
      %s40 = sphi 0, %s40
      %s42 = sphi 0, %s40
      %s43 = sphi 0, %s42
      %s57 = sphi 0, %s43
      %s61 = sphi 0, %s61
      %s63 = sphi 0, %s61
      %s64 = sphi 0, %s63
      %s78 = sphi 0, %s64
      %s82 = sphi 0, %s82
      %s84 = sphi 0, %s82
      %s85 = sphi 0, %s84
      %s99 = sphi 0, %s85
      %s103 = sphi 0, %s103
      %s105 = sphi 0, %s103
      %s106 = sphi 0, %s105
      %s120 = sphi 0, %s106
      %s124 = sphi 0, %s124
      %s126 = sphi 0, %s124
      %s127 = sphi 0, %s126
      %s141 = sphi 0, %s127
      %s145 = sphi 0, %s145
      %s147 = sphi 0, %s145
      %s148 = sphi 0, %s147
      %s162 = sphi 0, %s148
      %s168 = sphi 0, %s170
      %s171 = sphi 0, %s168
      %s172 = sphi 0, %s171
      %s188 = sphi 0, %s172
      %s194 = sphi 0, %s196
      %s197 = sphi 0, %s194
      %s198 = sphi 0, %s197
      %s214 = sphi 0, %s198
      %s220 = sphi 0, %s222
      %s223 = sphi 0, %s220
      %s224 = sphi 0, %s223
      %s240 = sphi 0, %s224
      %s246 = sphi 0, %s248
      %s249 = sphi 0, %s246
      %s250 = sphi 0, %s249
      %s266 = sphi 0, %s250
      %s272 = sphi 0, %s274
      %s275 = sphi 0, %s272
      %s276 = sphi 0, %s275
      %s292 = sphi 0, %s276
      %s298 = sphi 0, %s300
      %s301 = sphi 0, %s298
      %s302 = sphi 0, %s301
      %s318 = sphi 0, %s302
      %s324 = sphi 0, %s326
      %s327 = sphi 0, %s324
      %s328 = sphi 0, %s327
      %s344 = sphi 0, %s328
      %s350 = sphi 0, %s352
      %s353 = sphi 0, %s350
      %s354 = sphi 0, %s353
      %s370 = sphi 0, %s354
      %s376 = sphi 0, %s378
      %s379 = sphi 0, %s376
      %s380 = sphi 0, %s379
      %s396 = sphi 0, %s380
      %s402 = sphi 0, %s404
      %s405 = sphi 0, %s402
      %s406 = sphi 0, %s405
      %s422 = sphi 0, %s406
      %s428 = sphi 0, %s430
      %s431 = sphi 0, %s428
      %s432 = sphi 0, %s431
      %s448 = sphi 0, %s432
      %s454 = sphi 0, %s456
      %s457 = sphi 0, %s454
      %s458 = sphi 0, %s457
      %s474 = sphi 0, %s458
      %s480 = sphi 0, %s482
      %s483 = sphi 0, %s480
      %s484 = sphi 0, %s483
      %s500 = sphi 0, %s484
      %s506 = sphi 0, %s508
      %s509 = sphi 0, %s506
      %s510 = sphi 0, %s509
      %s526 = sphi 0, %s510
      %s532 = sphi 0, %s534
      %s535 = sphi 0, %s532
      %s536 = sphi 0, %s535
      %s552 = sphi 0, %s536
      %s558 = sphi 0, %s560
      %s561 = sphi 0, %s558
      %s562 = sphi 0, %s561
      %s578 = sphi 0, %s562
      %s582 = sphi 0, %s582
      %s584 = sphi 0, %s582
      %s585 = sphi 0, %s584
      %s599 = sphi 0, %s585
      %s603 = sphi 0, %s603
      %s605 = sphi 0, %s603
      %s606 = sphi 0, %s605
      %s620 = sphi 0, %s606
      %s624 = sphi 0, %s624
      %s626 = sphi 0, %s624
      %s627 = sphi 0, %s626
      %s641 = sphi 0, %s627
      %s645 = sphi 0, %s645
      %s647 = sphi 0, %s645
      %s648 = sphi 0, %s647
      %s662 = sphi 0, %s648
    $region4: #{gpt_forward.1} parent=1 // loop_header_branch
      %35 = sbr.rel (%p33) target = $region8
    $region5: #{gpt_forward.1} parent=1 // loop_body
      %s37 = ssub.s32 %s32, 1
      %s38 = ssub.s32 %s32, 2
      %s39 = sadd.s32 %s32, 1
      %s41 = sadd.s32 %s40, 1
      %p44 = scmp.eq.s32.totalorder %s32, 1
      %p45 = scmp.ne.s32.totalorder %s40, %s42
      %p46 = scmp.eq.s32.totalorder %s32, 0
      %p47 = por %p45, %p46
      %p48 = scmp.ne.s32.totalorder %s40, %s42
      %p49 = scmp.eq.s32.totalorder %s37, 1
      %p50 = por %p48, %p49
      %p51 = scmp.ne.s32.totalorder %s42, %s43
      %p52 = scmp.eq.s32.totalorder %s37, 0
      %p53 = por %p51, %p52
      %p54 = scmp.ne.s32.totalorder %s42, %s43
      %p55 = scmp.eq.s32.totalorder %s38, 1
      %p56 = por %p54, %p55
      %p58 = scmp.ne.s32.totalorder %s43, %s57
      %p59 = scmp.eq.s32.totalorder %s38, 0
      %p60 = por %p58, %p59
      %s62 = sadd.s32 %s61, 1
      %p65 = scmp.eq.s32.totalorder %s32, 1
      %p66 = scmp.ne.s32.totalorder %s61, %s63
      %p67 = scmp.eq.s32.totalorder %s32, 0
      %p68 = por %p66, %p67
      %p69 = scmp.ne.s32.totalorder %s61, %s63
      %p70 = scmp.eq.s32.totalorder %s37, 1
      %p71 = por %p69, %p70
      %p72 = scmp.ne.s32.totalorder %s63, %s64
      %p73 = scmp.eq.s32.totalorder %s37, 0
      %p74 = por %p72, %p73
      %p75 = scmp.ne.s32.totalorder %s63, %s64
      %p76 = scmp.eq.s32.totalorder %s38, 1
      %p77 = por %p75, %p76
      %p79 = scmp.ne.s32.totalorder %s64, %s78
      %p80 = scmp.eq.s32.totalorder %s38, 0
      %p81 = por %p79, %p80
      %s83 = sadd.s32 %s82, 1
      %p86 = scmp.eq.s32.totalorder %s32, 1
      %p87 = scmp.ne.s32.totalorder %s82, %s84
      %p88 = scmp.eq.s32.totalorder %s32, 0
      %p89 = por %p87, %p88
      %p90 = scmp.ne.s32.totalorder %s82, %s84
      %p91 = scmp.eq.s32.totalorder %s37, 1
      %p92 = por %p90, %p91
      %p93 = scmp.ne.s32.totalorder %s84, %s85
      %p94 = scmp.eq.s32.totalorder %s37, 0
      %p95 = por %p93, %p94
      %p96 = scmp.ne.s32.totalorder %s84, %s85
      %p97 = scmp.eq.s32.totalorder %s38, 1
      %p98 = por %p96, %p97
      %p100 = scmp.ne.s32.totalorder %s85, %s99
      %p101 = scmp.eq.s32.totalorder %s38, 0
      %p102 = por %p100, %p101
      %s104 = sadd.s32 %s103, 1
      %p107 = scmp.eq.s32.totalorder %s32, 1
      %p108 = scmp.ne.s32.totalorder %s103, %s105
      %p109 = scmp.eq.s32.totalorder %s32, 0
      %p110 = por %p108, %p109
      %p111 = scmp.ne.s32.totalorder %s103, %s105
      %p112 = scmp.eq.s32.totalorder %s37, 1
      %p113 = por %p111, %p112
      %p114 = scmp.ne.s32.totalorder %s105, %s106
      %p115 = scmp.eq.s32.totalorder %s37, 0
      %p116 = por %p114, %p115
      %p117 = scmp.ne.s32.totalorder %s105, %s106
      %p118 = scmp.eq.s32.totalorder %s38, 1
      %p119 = por %p117, %p118
      %p121 = scmp.ne.s32.totalorder %s106, %s120
      %p122 = scmp.eq.s32.totalorder %s38, 0
      %p123 = por %p121, %p122
      %s125 = sadd.s32 %s124, 1
      %p128 = scmp.eq.s32.totalorder %s32, 1
      %p129 = scmp.ne.s32.totalorder %s124, %s126
      %p130 = scmp.eq.s32.totalorder %s32, 0
      %p131 = por %p129, %p130
      %p132 = scmp.ne.s32.totalorder %s124, %s126
      %p133 = scmp.eq.s32.totalorder %s37, 1
      %p134 = por %p132, %p133
      %p135 = scmp.ne.s32.totalorder %s126, %s127
      %p136 = scmp.eq.s32.totalorder %s37, 0
      %p137 = por %p135, %p136
      %p138 = scmp.ne.s32.totalorder %s126, %s127
      %p139 = scmp.eq.s32.totalorder %s38, 1
      %p140 = por %p138, %p139
      %p142 = scmp.ne.s32.totalorder %s127, %s141
      %p143 = scmp.eq.s32.totalorder %s38, 0
      %p144 = por %p142, %p143
      %s146 = sadd.s32 %s145, 1
      %p149 = scmp.eq.s32.totalorder %s32, 1
      %p150 = scmp.ne.s32.totalorder %s145, %s147
      %p151 = scmp.eq.s32.totalorder %s32, 0
      %p152 = por %p150, %p151
      %p153 = scmp.ne.s32.totalorder %s145, %s147
      %p154 = scmp.eq.s32.totalorder %s37, 1
      %p155 = por %p153, %p154
      %p156 = scmp.ne.s32.totalorder %s147, %s148
      %p157 = scmp.eq.s32.totalorder %s37, 0
      %p158 = por %p156, %p157
      %p159 = scmp.ne.s32.totalorder %s147, %s148
      %p160 = scmp.eq.s32.totalorder %s38, 1
      %p161 = por %p159, %p160
      %p163 = scmp.ne.s32.totalorder %s148, %s162
      %p164 = scmp.eq.s32.totalorder %s38, 0
      %p165 = por %p163, %p164
      %s166 = ssub.s32 %s32, %s39
      %p167 = scmp.eq.s32.totalorder %s166, 0
      %s169 = sadd.s32 %s168, 1
      %s170 = scalar_select %p167, %s168, %s169
      %p173 = pneg %p167
      %p174 = scmp.eq.s32.totalorder %s32, 1
      %p175 = por %p173, %p174
      %p176 = scmp.ne.s32.totalorder %s168, %s171
      %p177 = scmp.eq.s32.totalorder %s32, 0
      %p178 = por %p176, %p177
      %p179 = scmp.ne.s32.totalorder %s168, %s171
      %p180 = scmp.eq.s32.totalorder %s37, 1
      %p181 = por %p179, %p180
      %p182 = scmp.ne.s32.totalorder %s171, %s172
      %p183 = scmp.eq.s32.totalorder %s37, 0
      %p184 = por %p182, %p183
      %p185 = scmp.ne.s32.totalorder %s171, %s172
      %p186 = scmp.eq.s32.totalorder %s38, 1
      %p187 = por %p185, %p186
      %p189 = scmp.ne.s32.totalorder %s172, %s188
      %p190 = scmp.eq.s32.totalorder %s38, 0
      %p191 = por %p189, %p190
      %s192 = ssub.s32 %s32, %s39
      %p193 = scmp.eq.s32.totalorder %s192, 0
      %s195 = sadd.s32 %s194, 1
      %s196 = scalar_select %p193, %s194, %s195
      %p199 = pneg %p193
      %p200 = scmp.eq.s32.totalorder %s32, 1
      %p201 = por %p199, %p200
      %p202 = scmp.ne.s32.totalorder %s194, %s197
      %p203 = scmp.eq.s32.totalorder %s32, 0
      %p204 = por %p202, %p203
      %p205 = scmp.ne.s32.totalorder %s194, %s197
      %p206 = scmp.eq.s32.totalorder %s37, 1
      %p207 = por %p205, %p206
      %p208 = scmp.ne.s32.totalorder %s197, %s198
      %p209 = scmp.eq.s32.totalorder %s37, 0
      %p210 = por %p208, %p209
      %p211 = scmp.ne.s32.totalorder %s197, %s198
      %p212 = scmp.eq.s32.totalorder %s38, 1
      %p213 = por %p211, %p212
      %p215 = scmp.ne.s32.totalorder %s198, %s214
      %p216 = scmp.eq.s32.totalorder %s38, 0
      %p217 = por %p215, %p216
      %s218 = ssub.s32 %s32, %s39
      %p219 = scmp.eq.s32.totalorder %s218, 0
      %s221 = sadd.s32 %s220, 1
      %s222 = scalar_select %p219, %s220, %s221
      %p225 = pneg %p219
      %p226 = scmp.eq.s32.totalorder %s32, 1
      %p227 = por %p225, %p226
      %p228 = scmp.ne.s32.totalorder %s220, %s223
      %p229 = scmp.eq.s32.totalorder %s32, 0
      %p230 = por %p228, %p229
      %p231 = scmp.ne.s32.totalorder %s220, %s223
      %p232 = scmp.eq.s32.totalorder %s37, 1
      %p233 = por %p231, %p232
      %p234 = scmp.ne.s32.totalorder %s223, %s224
      %p235 = scmp.eq.s32.totalorder %s37, 0
      %p236 = por %p234, %p235
      %p237 = scmp.ne.s32.totalorder %s223, %s224
      %p238 = scmp.eq.s32.totalorder %s38, 1
      %p239 = por %p237, %p238
      %p241 = scmp.ne.s32.totalorder %s224, %s240
      %p242 = scmp.eq.s32.totalorder %s38, 0
      %p243 = por %p241, %p242
      %s244 = ssub.s32 %s32, %s39
      %p245 = scmp.eq.s32.totalorder %s244, 0
      %s247 = sadd.s32 %s246, 1
      %s248 = scalar_select %p245, %s246, %s247
      %p251 = pneg %p245
      %p252 = scmp.eq.s32.totalorder %s32, 1
      %p253 = por %p251, %p252
      %p254 = scmp.ne.s32.totalorder %s246, %s249
      %p255 = scmp.eq.s32.totalorder %s32, 0
      %p256 = por %p254, %p255
      %p257 = scmp.ne.s32.totalorder %s246, %s249
      %p258 = scmp.eq.s32.totalorder %s37, 1
      %p259 = por %p257, %p258
      %p260 = scmp.ne.s32.totalorder %s249, %s250
      %p261 = scmp.eq.s32.totalorder %s37, 0
      %p262 = por %p260, %p261
      %p263 = scmp.ne.s32.totalorder %s249, %s250
      %p264 = scmp.eq.s32.totalorder %s38, 1
      %p265 = por %p263, %p264
      %p267 = scmp.ne.s32.totalorder %s250, %s266
      %p268 = scmp.eq.s32.totalorder %s38, 0
      %p269 = por %p267, %p268
      %s270 = ssub.s32 %s32, %s39
      %p271 = scmp.eq.s32.totalorder %s270, 0
      %s273 = sadd.s32 %s272, 1
      %s274 = scalar_select %p271, %s272, %s273
      %p277 = pneg %p271
      %p278 = scmp.eq.s32.totalorder %s32, 1
      %p279 = por %p277, %p278
      %p280 = scmp.ne.s32.totalorder %s272, %s275
      %p281 = scmp.eq.s32.totalorder %s32, 0
      %p282 = por %p280, %p281
      %p283 = scmp.ne.s32.totalorder %s272, %s275
      %p284 = scmp.eq.s32.totalorder %s37, 1
      %p285 = por %p283, %p284
      %p286 = scmp.ne.s32.totalorder %s275, %s276
      %p287 = scmp.eq.s32.totalorder %s37, 0
      %p288 = por %p286, %p287
      %p289 = scmp.ne.s32.totalorder %s275, %s276
      %p290 = scmp.eq.s32.totalorder %s38, 1
      %p291 = por %p289, %p290
      %p293 = scmp.ne.s32.totalorder %s276, %s292
      %p294 = scmp.eq.s32.totalorder %s38, 0
      %p295 = por %p293, %p294
      %s296 = ssub.s32 %s32, %s39
      %p297 = scmp.eq.s32.totalorder %s296, 0
      %s299 = sadd.s32 %s298, 1
      %s300 = scalar_select %p297, %s298, %s299
      %p303 = pneg %p297
      %p304 = scmp.eq.s32.totalorder %s32, 1
      %p305 = por %p303, %p304
      %p306 = scmp.ne.s32.totalorder %s298, %s301
      %p307 = scmp.eq.s32.totalorder %s32, 0
      %p308 = por %p306, %p307
      %p309 = scmp.ne.s32.totalorder %s298, %s301
      %p310 = scmp.eq.s32.totalorder %s37, 1
      %p311 = por %p309, %p310
      %p312 = scmp.ne.s32.totalorder %s301, %s302
      %p313 = scmp.eq.s32.totalorder %s37, 0
      %p314 = por %p312, %p313
      %p315 = scmp.ne.s32.totalorder %s301, %s302
      %p316 = scmp.eq.s32.totalorder %s38, 1
      %p317 = por %p315, %p316
      %p319 = scmp.ne.s32.totalorder %s302, %s318
      %p320 = scmp.eq.s32.totalorder %s38, 0
      %p321 = por %p319, %p320
      %s322 = ssub.s32 %s32, %s39
      %p323 = scmp.eq.s32.totalorder %s322, 0
      %s325 = sadd.s32 %s324, 1
      %s326 = scalar_select %p323, %s324, %s325
      %p329 = pneg %p323
      %p330 = scmp.eq.s32.totalorder %s32, 1
      %p331 = por %p329, %p330
      %p332 = scmp.ne.s32.totalorder %s324, %s327
      %p333 = scmp.eq.s32.totalorder %s32, 0
      %p334 = por %p332, %p333
      %p335 = scmp.ne.s32.totalorder %s324, %s327
      %p336 = scmp.eq.s32.totalorder %s37, 1
      %p337 = por %p335, %p336
      %p338 = scmp.ne.s32.totalorder %s327, %s328
      %p339 = scmp.eq.s32.totalorder %s37, 0
      %p340 = por %p338, %p339
      %p341 = scmp.ne.s32.totalorder %s327, %s328
      %p342 = scmp.eq.s32.totalorder %s38, 1
      %p343 = por %p341, %p342
      %p345 = scmp.ne.s32.totalorder %s328, %s344
      %p346 = scmp.eq.s32.totalorder %s38, 0
      %p347 = por %p345, %p346
      %s348 = ssub.s32 %s32, %s39
      %p349 = scmp.eq.s32.totalorder %s348, 0
      %s351 = sadd.s32 %s350, 1
      %s352 = scalar_select %p349, %s350, %s351
      %p355 = pneg %p349
      %p356 = scmp.eq.s32.totalorder %s32, 1
      %p357 = por %p355, %p356
      %p358 = scmp.ne.s32.totalorder %s350, %s353
      %p359 = scmp.eq.s32.totalorder %s32, 0
      %p360 = por %p358, %p359
      %p361 = scmp.ne.s32.totalorder %s350, %s353
      %p362 = scmp.eq.s32.totalorder %s37, 1
      %p363 = por %p361, %p362
      %p364 = scmp.ne.s32.totalorder %s353, %s354
      %p365 = scmp.eq.s32.totalorder %s37, 0
      %p366 = por %p364, %p365
      %p367 = scmp.ne.s32.totalorder %s353, %s354
      %p368 = scmp.eq.s32.totalorder %s38, 1
      %p369 = por %p367, %p368
      %p371 = scmp.ne.s32.totalorder %s354, %s370
      %p372 = scmp.eq.s32.totalorder %s38, 0
      %p373 = por %p371, %p372
      %s374 = ssub.s32 %s32, %s39
      %p375 = scmp.eq.s32.totalorder %s374, 0
      %s377 = sadd.s32 %s376, 1
      %s378 = scalar_select %p375, %s376, %s377
      %p381 = pneg %p375
      %p382 = scmp.eq.s32.totalorder %s32, 1
      %p383 = por %p381, %p382
      %p384 = scmp.ne.s32.totalorder %s376, %s379
      %p385 = scmp.eq.s32.totalorder %s32, 0
      %p386 = por %p384, %p385
      %p387 = scmp.ne.s32.totalorder %s376, %s379
      %p388 = scmp.eq.s32.totalorder %s37, 1
      %p389 = por %p387, %p388
      %p390 = scmp.ne.s32.totalorder %s379, %s380
      %p391 = scmp.eq.s32.totalorder %s37, 0
      %p392 = por %p390, %p391
      %p393 = scmp.ne.s32.totalorder %s379, %s380
      %p394 = scmp.eq.s32.totalorder %s38, 1
      %p395 = por %p393, %p394
      %p397 = scmp.ne.s32.totalorder %s380, %s396
      %p398 = scmp.eq.s32.totalorder %s38, 0
      %p399 = por %p397, %p398
      %s400 = ssub.s32 %s32, %s39
      %p401 = scmp.eq.s32.totalorder %s400, 0
      %s403 = sadd.s32 %s402, 1
      %s404 = scalar_select %p401, %s402, %s403
      %p407 = pneg %p401
      %p408 = scmp.eq.s32.totalorder %s32, 1
      %p409 = por %p407, %p408
      %p410 = scmp.ne.s32.totalorder %s402, %s405
      %p411 = scmp.eq.s32.totalorder %s32, 0
      %p412 = por %p410, %p411
      %p413 = scmp.ne.s32.totalorder %s402, %s405
      %p414 = scmp.eq.s32.totalorder %s37, 1
      %p415 = por %p413, %p414
      %p416 = scmp.ne.s32.totalorder %s405, %s406
      %p417 = scmp.eq.s32.totalorder %s37, 0
      %p418 = por %p416, %p417
      %p419 = scmp.ne.s32.totalorder %s405, %s406
      %p420 = scmp.eq.s32.totalorder %s38, 1
      %p421 = por %p419, %p420
      %p423 = scmp.ne.s32.totalorder %s406, %s422
      %p424 = scmp.eq.s32.totalorder %s38, 0
      %p425 = por %p423, %p424
      %s426 = ssub.s32 %s32, %s39
      %p427 = scmp.eq.s32.totalorder %s426, 0
      %s429 = sadd.s32 %s428, 1
      %s430 = scalar_select %p427, %s428, %s429
      %p433 = pneg %p427
      %p434 = scmp.eq.s32.totalorder %s32, 1
      %p435 = por %p433, %p434
      %p436 = scmp.ne.s32.totalorder %s428, %s431
      %p437 = scmp.eq.s32.totalorder %s32, 0
      %p438 = por %p436, %p437
      %p439 = scmp.ne.s32.totalorder %s428, %s431
      %p440 = scmp.eq.s32.totalorder %s37, 1
      %p441 = por %p439, %p440
      %p442 = scmp.ne.s32.totalorder %s431, %s432
      %p443 = scmp.eq.s32.totalorder %s37, 0
      %p444 = por %p442, %p443
      %p445 = scmp.ne.s32.totalorder %s431, %s432
      %p446 = scmp.eq.s32.totalorder %s38, 1
      %p447 = por %p445, %p446
      %p449 = scmp.ne.s32.totalorder %s432, %s448
      %p450 = scmp.eq.s32.totalorder %s38, 0
      %p451 = por %p449, %p450
      %s452 = ssub.s32 %s32, %s39
      %p453 = scmp.eq.s32.totalorder %s452, 0
      %s455 = sadd.s32 %s454, 1
      %s456 = scalar_select %p453, %s454, %s455
      %p459 = pneg %p453
      %p460 = scmp.eq.s32.totalorder %s32, 1
      %p461 = por %p459, %p460
      %p462 = scmp.ne.s32.totalorder %s454, %s457
      %p463 = scmp.eq.s32.totalorder %s32, 0
      %p464 = por %p462, %p463
      %p465 = scmp.ne.s32.totalorder %s454, %s457
      %p466 = scmp.eq.s32.totalorder %s37, 1
      %p467 = por %p465, %p466
      %p468 = scmp.ne.s32.totalorder %s457, %s458
      %p469 = scmp.eq.s32.totalorder %s37, 0
      %p470 = por %p468, %p469
      %p471 = scmp.ne.s32.totalorder %s457, %s458
      %p472 = scmp.eq.s32.totalorder %s38, 1
      %p473 = por %p471, %p472
      %p475 = scmp.ne.s32.totalorder %s458, %s474
      %p476 = scmp.eq.s32.totalorder %s38, 0
      %p477 = por %p475, %p476
      %s478 = ssub.s32 %s32, %s39
      %p479 = scmp.eq.s32.totalorder %s478, 0
      %s481 = sadd.s32 %s480, 1
      %s482 = scalar_select %p479, %s480, %s481
      %p485 = pneg %p479
      %p486 = scmp.eq.s32.totalorder %s32, 1
      %p487 = por %p485, %p486
      %p488 = scmp.ne.s32.totalorder %s480, %s483
      %p489 = scmp.eq.s32.totalorder %s32, 0
      %p490 = por %p488, %p489
      %p491 = scmp.ne.s32.totalorder %s480, %s483
      %p492 = scmp.eq.s32.totalorder %s37, 1
      %p493 = por %p491, %p492
      %p494 = scmp.ne.s32.totalorder %s483, %s484
      %p495 = scmp.eq.s32.totalorder %s37, 0
      %p496 = por %p494, %p495
      %p497 = scmp.ne.s32.totalorder %s483, %s484
      %p498 = scmp.eq.s32.totalorder %s38, 1
      %p499 = por %p497, %p498
      %p501 = scmp.ne.s32.totalorder %s484, %s500
      %p502 = scmp.eq.s32.totalorder %s38, 0
      %p503 = por %p501, %p502
      %s504 = ssub.s32 %s32, %s39
      %p505 = scmp.eq.s32.totalorder %s504, 0
      %s507 = sadd.s32 %s506, 1
      %s508 = scalar_select %p505, %s506, %s507
      %p511 = pneg %p505
      %p512 = scmp.eq.s32.totalorder %s32, 1
      %p513 = por %p511, %p512
      %p514 = scmp.ne.s32.totalorder %s506, %s509
      %p515 = scmp.eq.s32.totalorder %s32, 0
      %p516 = por %p514, %p515
      %p517 = scmp.ne.s32.totalorder %s506, %s509
      %p518 = scmp.eq.s32.totalorder %s37, 1
      %p519 = por %p517, %p518
      %p520 = scmp.ne.s32.totalorder %s509, %s510
      %p521 = scmp.eq.s32.totalorder %s37, 0
      %p522 = por %p520, %p521
      %p523 = scmp.ne.s32.totalorder %s509, %s510
      %p524 = scmp.eq.s32.totalorder %s38, 1
      %p525 = por %p523, %p524
      %p527 = scmp.ne.s32.totalorder %s510, %s526
      %p528 = scmp.eq.s32.totalorder %s38, 0
      %p529 = por %p527, %p528
      %s530 = ssub.s32 %s32, %s39
      %p531 = scmp.eq.s32.totalorder %s530, 0
      %s533 = sadd.s32 %s532, 1
      %s534 = scalar_select %p531, %s532, %s533
      %p537 = pneg %p531
      %p538 = scmp.eq.s32.totalorder %s32, 1
      %p539 = por %p537, %p538
      %p540 = scmp.ne.s32.totalorder %s532, %s535
      %p541 = scmp.eq.s32.totalorder %s32, 0
      %p542 = por %p540, %p541
      %p543 = scmp.ne.s32.totalorder %s532, %s535
      %p544 = scmp.eq.s32.totalorder %s37, 1
      %p545 = por %p543, %p544
      %p546 = scmp.ne.s32.totalorder %s535, %s536
      %p547 = scmp.eq.s32.totalorder %s37, 0
      %p548 = por %p546, %p547
      %p549 = scmp.ne.s32.totalorder %s535, %s536
      %p550 = scmp.eq.s32.totalorder %s38, 1
      %p551 = por %p549, %p550
      %p553 = scmp.ne.s32.totalorder %s536, %s552
      %p554 = scmp.eq.s32.totalorder %s38, 0
      %p555 = por %p553, %p554
      %s556 = ssub.s32 %s32, %s39
      %p557 = scmp.eq.s32.totalorder %s556, 0
      %s559 = sadd.s32 %s558, 1
      %s560 = scalar_select %p557, %s558, %s559
      %p563 = pneg %p557
      %p564 = scmp.eq.s32.totalorder %s32, 1
      %p565 = por %p563, %p564
      %p566 = scmp.ne.s32.totalorder %s558, %s561
      %p567 = scmp.eq.s32.totalorder %s32, 0
      %p568 = por %p566, %p567
      %p569 = scmp.ne.s32.totalorder %s558, %s561
      %p570 = scmp.eq.s32.totalorder %s37, 1
      %p571 = por %p569, %p570
      %p572 = scmp.ne.s32.totalorder %s561, %s562
      %p573 = scmp.eq.s32.totalorder %s37, 0
      %p574 = por %p572, %p573
      %p575 = scmp.ne.s32.totalorder %s561, %s562
      %p576 = scmp.eq.s32.totalorder %s38, 1
      %p577 = por %p575, %p576
      %p579 = scmp.ne.s32.totalorder %s562, %s578
      %p580 = scmp.eq.s32.totalorder %s38, 0
      %p581 = por %p579, %p580
      %s583 = sadd.s32 %s582, 1
      %p586 = scmp.eq.s32.totalorder %s32, 1
      %p587 = scmp.ne.s32.totalorder %s582, %s584
      %p588 = scmp.eq.s32.totalorder %s32, 0
      %p589 = por %p587, %p588
      %p590 = scmp.ne.s32.totalorder %s582, %s584
      %p591 = scmp.eq.s32.totalorder %s37, 1
      %p592 = por %p590, %p591
      %p593 = scmp.ne.s32.totalorder %s584, %s585
      %p594 = scmp.eq.s32.totalorder %s37, 0
      %p595 = por %p593, %p594
      %p596 = scmp.ne.s32.totalorder %s584, %s585
      %p597 = scmp.eq.s32.totalorder %s38, 1
      %p598 = por %p596, %p597
      %p600 = scmp.ne.s32.totalorder %s585, %s599
      %p601 = scmp.eq.s32.totalorder %s38, 0
      %p602 = por %p600, %p601
      %s604 = sadd.s32 %s603, 1
      %p607 = scmp.eq.s32.totalorder %s32, 1
      %p608 = scmp.ne.s32.totalorder %s603, %s605
      %p609 = scmp.eq.s32.totalorder %s32, 0
      %p610 = por %p608, %p609
      %p611 = scmp.ne.s32.totalorder %s603, %s605
      %p612 = scmp.eq.s32.totalorder %s37, 1
      %p613 = por %p611, %p612
      %p614 = scmp.ne.s32.totalorder %s605, %s606
      %p615 = scmp.eq.s32.totalorder %s37, 0
      %p616 = por %p614, %p615
      %p617 = scmp.ne.s32.totalorder %s605, %s606
      %p618 = scmp.eq.s32.totalorder %s38, 1
      %p619 = por %p617, %p618
      %p621 = scmp.ne.s32.totalorder %s606, %s620
      %p622 = scmp.eq.s32.totalorder %s38, 0
      %p623 = por %p621, %p622
      %s625 = sadd.s32 %s624, 1
      %p628 = scmp.eq.s32.totalorder %s32, 1
      %p629 = scmp.ne.s32.totalorder %s624, %s626
      %p630 = scmp.eq.s32.totalorder %s32, 0
      %p631 = por %p629, %p630
      %p632 = scmp.ne.s32.totalorder %s624, %s626
      %p633 = scmp.eq.s32.totalorder %s37, 1
      %p634 = por %p632, %p633
      %p635 = scmp.ne.s32.totalorder %s626, %s627
      %p636 = scmp.eq.s32.totalorder %s37, 0
      %p637 = por %p635, %p636
      %p638 = scmp.ne.s32.totalorder %s626, %s627
      %p639 = scmp.eq.s32.totalorder %s38, 1
      %p640 = por %p638, %p639
      %p642 = scmp.ne.s32.totalorder %s627, %s641
      %p643 = scmp.eq.s32.totalorder %s38, 0
      %p644 = por %p642, %p643
      %s646 = sadd.s32 %s645, 1
      %p649 = scmp.eq.s32.totalorder %s32, 1
      %p650 = scmp.ne.s32.totalorder %s645, %s647
      %p651 = scmp.eq.s32.totalorder %s32, 0
      %p652 = por %p650, %p651
      %p653 = scmp.ne.s32.totalorder %s645, %s647
      %p654 = scmp.eq.s32.totalorder %s37, 1
      %p655 = por %p653, %p654
      %p656 = scmp.ne.s32.totalorder %s647, %s648
      %p657 = scmp.eq.s32.totalorder %s37, 0
      %p658 = por %p656, %p657
      %p659 = scmp.ne.s32.totalorder %s647, %s648
      %p660 = scmp.eq.s32.totalorder %s38, 1
      %p661 = por %p659, %p660
      %p663 = scmp.ne.s32.totalorder %s648, %s662
      %p664 = scmp.eq.s32.totalorder %s38, 0
      %p665 = por %p663, %p664
      %p666 = scmp.le.s32.totalorder 1, %s32
      %p667 = scmp.lt.s32.totalorder %s32, 3
      %p668 = pnand %p666, %p667
      %p669 = pneg %p668
      // Predicated region
      $region9: #{gpt_forward.1} parent=5 // pred_check
        _
      $region10: #{gpt_forward.1} parent=5 // pred_check_branch
        %671 = sbr.rel (%p668) target = $region12
      $region11: #{gpt_forward.1} parent=5 // pred_region
        %s672 = ssub.s32 %s32, 1
        // Predicated region
        $region13: #{gpt_forward.1} parent=11 // pred_check
          %p673 = pneg %p53
        $region14: #{gpt_forward.1} parent=11 // pred_check_branch
          %675 = sbr.rel (%p673) target = $region16
        $region15: #{gpt_forward.1} parent=11 // pred_region
          _
        $region16: #{gpt_forward.1} parent=11 // pred_fallthru
          _
        // Predicated region
        $region17: #{gpt_forward.1} parent=11 // pred_check
          %p676 = pneg %p74
        $region18: #{gpt_forward.1} parent=11 // pred_check_branch
          %678 = sbr.rel (%p676) target = $region20
        $region19: #{gpt_forward.1} parent=11 // pred_region
          _
        $region20: #{gpt_forward.1} parent=11 // pred_fallthru
          _
        // Predicated region
        $region21: #{gpt_forward.1} parent=11 // pred_check
          %p679 = pneg %p95
        $region22: #{gpt_forward.1} parent=11 // pred_check_branch
          %681 = sbr.rel (%p679) target = $region24
        $region23: #{gpt_forward.1} parent=11 // pred_region
          _
        $region24: #{gpt_forward.1} parent=11 // pred_fallthru
          _
        // Predicated region
        $region25: #{gpt_forward.1} parent=11 // pred_check
          %p682 = pneg %p116
        $region26: #{gpt_forward.1} parent=11 // pred_check_branch
          %684 = sbr.rel (%p682) target = $region28
        $region27: #{gpt_forward.1} parent=11 // pred_region
          _
        $region28: #{gpt_forward.1} parent=11 // pred_fallthru
          _
        // Predicated region
        $region29: #{gpt_forward.1} parent=11 // pred_check
          %p685 = pneg %p137
        $region30: #{gpt_forward.1} parent=11 // pred_check_branch
          %687 = sbr.rel (%p685) target = $region32
        $region31: #{gpt_forward.1} parent=11 // pred_region
          _
        $region32: #{gpt_forward.1} parent=11 // pred_fallthru
          _
        // Predicated region
        $region33: #{gpt_forward.1} parent=11 // pred_check
          %p688 = pneg %p158
        $region34: #{gpt_forward.1} parent=11 // pred_check_branch
          %690 = sbr.rel (%p688) target = $region36
        $region35: #{gpt_forward.1} parent=11 // pred_region
          _
        $region36: #{gpt_forward.1} parent=11 // pred_fallthru
          _
        // Predicated region
        $region37: #{gpt_forward.1} parent=11 // pred_check
          %p691 = pneg %p595
        $region38: #{gpt_forward.1} parent=11 // pred_check_branch
          %693 = sbr.rel (%p691) target = $region40
        $region39: #{gpt_forward.1} parent=11 // pred_region
          _
        $region40: #{gpt_forward.1} parent=11 // pred_fallthru
          _
        // Predicated region
        $region41: #{gpt_forward.1} parent=11 // pred_check
          %p694 = pneg %p616
        $region42: #{gpt_forward.1} parent=11 // pred_check_branch
          %696 = sbr.rel (%p694) target = $region44
        $region43: #{gpt_forward.1} parent=11 // pred_region
          _
        $region44: #{gpt_forward.1} parent=11 // pred_fallthru
          _
        // Predicated region
        $region45: #{gpt_forward.1} parent=11 // pred_check
          %p697 = pneg %p637
        $region46: #{gpt_forward.1} parent=11 // pred_check_branch
          %699 = sbr.rel (%p697) target = $region48
        $region47: #{gpt_forward.1} parent=11 // pred_region
          _
        $region48: #{gpt_forward.1} parent=11 // pred_fallthru
          _
      $region12: #{gpt_forward.1} parent=5 // pred_fallthru
        _
      %p700 = scmp.lt.s32.totalorder %s32, 2
      // Predicated region
      $region49: #{gpt_forward.1} parent=5 // pred_check
        %p701 = pneg %p700
      $region50: #{gpt_forward.1} parent=5 // pred_check_branch
        %703 = sbr.rel (%p701) target = $region52
      $region51: #{gpt_forward.1} parent=5 // pred_region
        // Predicated region
        $region53: #{gpt_forward.1} parent=51 // pred_check
          %p704 = pneg %p178
        $region54: #{gpt_forward.1} parent=51 // pred_check_branch
          %706 = sbr.rel (%p704) target = $region56
        $region55: #{gpt_forward.1} parent=51 // pred_region
          %p707 = scmp.lt.s32.totalorder %s32, 1
          %s708 = scalar_select %p707, %s32, 1
          %s709 = scalar_lea.vmem %s6, %s708
        $region56: #{gpt_forward.1} parent=51 // pred_fallthru
          _
        // Predicated region
        $region57: #{gpt_forward.1} parent=51 // pred_check
          %p710 = pneg %p204
        $region58: #{gpt_forward.1} parent=51 // pred_check_branch
          %712 = sbr.rel (%p710) target = $region60
        $region59: #{gpt_forward.1} parent=51 // pred_region
          %p713 = scmp.lt.s32.totalorder %s32, 1
          %s714 = scalar_select %p713, %s32, 1
          %s715 = scalar_lea.vmem %s7, %s714
        $region60: #{gpt_forward.1} parent=51 // pred_fallthru
          _
        // Predicated region
        $region61: #{gpt_forward.1} parent=51 // pred_check
          %p716 = pneg %p230
        $region62: #{gpt_forward.1} parent=51 // pred_check_branch
          %718 = sbr.rel (%p716) target = $region64
        $region63: #{gpt_forward.1} parent=51 // pred_region
          %p719 = scmp.lt.s32.totalorder %s32, 1
          %s720 = scalar_select %p719, %s32, 1
          %s721 = smul.addr %s720, 8
          %s722 = smul.addr %s721, 4
          %s723 = scalar_lea.vmem %s8, %s722
        $region64: #{gpt_forward.1} parent=51 // pred_fallthru
          _
        // Predicated region
        $region65: #{gpt_forward.1} parent=51 // pred_check
          %p724 = pneg %p256
        $region66: #{gpt_forward.1} parent=51 // pred_check_branch
          %726 = sbr.rel (%p724) target = $region68
        $region67: #{gpt_forward.1} parent=51 // pred_region
          %p727 = scmp.lt.s32.totalorder %s32, 1
          %s728 = scalar_select %p727, %s32, 1
          %s729 = smul.addr %s728, 8
          %s730 = smul.addr %s729, 4
          %s731 = scalar_lea.vmem %s9, %s730
        $region68: #{gpt_forward.1} parent=51 // pred_fallthru
          _
        // Predicated region
        $region69: #{gpt_forward.1} parent=51 // pred_check
          %p732 = pneg %p282
        $region70: #{gpt_forward.1} parent=51 // pred_check_branch
          %734 = sbr.rel (%p732) target = $region72
        $region71: #{gpt_forward.1} parent=51 // pred_region
          %p735 = scmp.lt.s32.totalorder %s32, 1
          %s736 = scalar_select %p735, %s32, 1
          %s737 = smul.addr %s736, 8
          %s738 = smul.addr %s737, 4
          %s739 = scalar_lea.vmem %s10, %s738
        $region72: #{gpt_forward.1} parent=51 // pred_fallthru
          _
        // Predicated region
        $region73: #{gpt_forward.1} parent=51 // pred_check
          %p740 = pneg %p308
        $region74: #{gpt_forward.1} parent=51 // pred_check_branch
          %742 = sbr.rel (%p740) target = $region76
        $region75: #{gpt_forward.1} parent=51 // pred_region
          %p743 = scmp.lt.s32.totalorder %s32, 1
          %s744 = scalar_select %p743, %s32, 1
          %s745 = smul.addr %s744, 2
          %s746 = scalar_lea.vmem %s11, %s745
        $region76: #{gpt_forward.1} parent=51 // pred_fallthru
          _
        // Predicated region
        $region77: #{gpt_forward.1} parent=51 // pred_check
          %p747 = pneg %p334
        $region78: #{gpt_forward.1} parent=51 // pred_check_branch
          %749 = sbr.rel (%p747) target = $region80
        $region79: #{gpt_forward.1} parent=51 // pred_region
          %p750 = scmp.lt.s32.totalorder %s32, 1
          %s751 = scalar_select %p750, %s32, 1
          %s752 = smul.addr %s751, 2
          %s753 = scalar_lea.vmem %s12, %s752
        $region80: #{gpt_forward.1} parent=51 // pred_fallthru
          _
        // Predicated region
        $region81: #{gpt_forward.1} parent=51 // pred_check
          %p754 = pneg %p360
        $region82: #{gpt_forward.1} parent=51 // pred_check_branch
          %756 = sbr.rel (%p754) target = $region84
        $region83: #{gpt_forward.1} parent=51 // pred_region
          %p757 = scmp.lt.s32.totalorder %s32, 1
          %s758 = scalar_select %p757, %s32, 1
          %s759 = smul.addr %s758, 2
          %s760 = scalar_lea.vmem %s13, %s759
        $region84: #{gpt_forward.1} parent=51 // pred_fallthru
          _
        // Predicated region
        $region85: #{gpt_forward.1} parent=51 // pred_check
          %p761 = pneg %p386
        $region86: #{gpt_forward.1} parent=51 // pred_check_branch
          %763 = sbr.rel (%p761) target = $region88
        $region87: #{gpt_forward.1} parent=51 // pred_region
          %p764 = scmp.lt.s32.totalorder %s32, 1
          %s765 = scalar_select %p764, %s32, 1
          %s766 = smul.addr %s765, 4
          %s767 = smul.addr %s766, 4
          %s768 = scalar_lea.vmem %s14, %s767
        $region88: #{gpt_forward.1} parent=51 // pred_fallthru
          _
        // Predicated region
        $region89: #{gpt_forward.1} parent=51 // pred_check
          %p769 = pneg %p412
        $region90: #{gpt_forward.1} parent=51 // pred_check_branch
          %771 = sbr.rel (%p769) target = $region92
        $region91: #{gpt_forward.1} parent=51 // pred_region
          %p772 = scmp.lt.s32.totalorder %s32, 1
          %s773 = scalar_select %p772, %s32, 1
          %s774 = scalar_lea.vmem %s15, %s773
        $region92: #{gpt_forward.1} parent=51 // pred_fallthru
          _
        // Predicated region
        $region93: #{gpt_forward.1} parent=51 // pred_check
          %p775 = pneg %p438
        $region94: #{gpt_forward.1} parent=51 // pred_check_branch
          %777 = sbr.rel (%p775) target = $region96
        $region95: #{gpt_forward.1} parent=51 // pred_region
          %p778 = scmp.lt.s32.totalorder %s32, 1
          %s779 = scalar_select %p778, %s32, 1
          %s780 = scalar_lea.vmem %s16, %s779
        $region96: #{gpt_forward.1} parent=51 // pred_fallthru
          _
        // Predicated region
        $region97: #{gpt_forward.1} parent=51 // pred_check
          %p781 = pneg %p464
        $region98: #{gpt_forward.1} parent=51 // pred_check_branch
          %783 = sbr.rel (%p781) target = $region100
        $region99: #{gpt_forward.1} parent=51 // pred_region
          %p784 = scmp.lt.s32.totalorder %s32, 1
          %s785 = scalar_select %p784, %s32, 1
          %s786 = scalar_lea.vmem %s17, %s785
        $region100: #{gpt_forward.1} parent=51 // pred_fallthru
          _
        // Predicated region
        $region101: #{gpt_forward.1} parent=51 // pred_check
          %p787 = pneg %p490
        $region102: #{gpt_forward.1} parent=51 // pred_check_branch
          %789 = sbr.rel (%p787) target = $region104
        $region103: #{gpt_forward.1} parent=51 // pred_region
          %p790 = scmp.lt.s32.totalorder %s32, 1
          %s791 = scalar_select %p790, %s32, 1
          %s792 = smul.addr %s791, 4
          %s793 = smul.addr %s792, 4
          %s794 = scalar_lea.vmem %s18, %s793
        $region104: #{gpt_forward.1} parent=51 // pred_fallthru
          _
        // Predicated region
        $region105: #{gpt_forward.1} parent=51 // pred_check
          %p795 = pneg %p516
        $region106: #{gpt_forward.1} parent=51 // pred_check_branch
          %797 = sbr.rel (%p795) target = $region108
        $region107: #{gpt_forward.1} parent=51 // pred_region
          %p798 = scmp.lt.s32.totalorder %s32, 1
          %s799 = scalar_select %p798, %s32, 1
          %s800 = scalar_lea.vmem %s19, %s799
        $region108: #{gpt_forward.1} parent=51 // pred_fallthru
          _
        // Predicated region
        $region109: #{gpt_forward.1} parent=51 // pred_check
          %p801 = pneg %p542
        $region110: #{gpt_forward.1} parent=51 // pred_check_branch
          %803 = sbr.rel (%p801) target = $region112
        $region111: #{gpt_forward.1} parent=51 // pred_region
          %p804 = scmp.lt.s32.totalorder %s32, 1
          %s805 = scalar_select %p804, %s32, 1
          %s806 = smul.addr %s805, 16
          %s807 = smul.addr %s806, 4
          %s808 = scalar_lea.vmem %s20, %s807
        $region112: #{gpt_forward.1} parent=51 // pred_fallthru
          _
        // Predicated region
        $region113: #{gpt_forward.1} parent=51 // pred_check
          %p809 = pneg %p568
        $region114: #{gpt_forward.1} parent=51 // pred_check_branch
          %811 = sbr.rel (%p809) target = $region116
        $region115: #{gpt_forward.1} parent=51 // pred_region
          %p812 = scmp.lt.s32.totalorder %s32, 1
          %s813 = scalar_select %p812, %s32, 1
          %s814 = scalar_lea.vmem %s21, %s813
        $region116: #{gpt_forward.1} parent=51 // pred_fallthru
          _
      $region52: #{gpt_forward.1} parent=5 // pred_fallthru
        _
      %p815 = scmp.le.s32.totalorder 1, %s32
      %p816 = scmp.lt.s32.totalorder %s32, 3
      %p817 = pnand %p815, %p816
      %p818 = pneg %p817
      // Predicated region
      $region117: #{gpt_forward.1} parent=5 // pred_check
        _
      $region118: #{gpt_forward.1} parent=5 // pred_check_branch
        %820 = sbr.rel (%p817) target = $region120
      $region119: #{gpt_forward.1} parent=5 // pred_region
        %s821 = ssub.s32 %s32, 1
        %p822 = pneg %p53
        %p823 = pneg %p50
        %p824 = pneg %p74
        %p825 = pneg %p71
        %p826 = pneg %p95
        %p827 = pneg %p92
        %p828 = pneg %p116
        %p829 = pneg %p113
        %p830 = pneg %p137
        %p831 = pneg %p134
        %p832 = pneg %p158
        %p833 = pneg %p155
        %p834 = scmp.lt.s32.totalorder %s37, 1
        %s835 = scalar_select %p834, %s37, 1
        %s836 = scalar_lea.vmem %s6, %s835
        %p837 = pneg %p184
        %p838 = pneg %p181
        %p839 = scmp.lt.s32.totalorder %s37, 1
        %s840 = scalar_select %p839, %s37, 1
        %s841 = scalar_lea.vmem %s7, %s840
        %p842 = pneg %p210
        %p843 = pneg %p207
        %p844 = scmp.lt.s32.totalorder %s37, 1
        %s845 = scalar_select %p844, %s37, 1
        %s846 = smul.addr %s845, 8
        %s847 = smul.addr %s846, 4
        %s848 = scalar_lea.vmem %s8, %s847
        %p849 = pneg %p236
        %p850 = pneg %p233
        %p851 = scmp.lt.s32.totalorder %s37, 1
        %s852 = scalar_select %p851, %s37, 1
        %s853 = smul.addr %s852, 8
        %s854 = smul.addr %s853, 4
        %s855 = scalar_lea.vmem %s9, %s854
        %p856 = pneg %p262
        %p857 = pneg %p259
        %p858 = scmp.lt.s32.totalorder %s37, 1
        %s859 = scalar_select %p858, %s37, 1
        %s860 = smul.addr %s859, 8
        %s861 = smul.addr %s860, 4
        %s862 = scalar_lea.vmem %s10, %s861
        %p863 = pneg %p288
        %p864 = pneg %p285
        %p865 = scmp.lt.s32.totalorder %s37, 1
        %s866 = scalar_select %p865, %s37, 1
        %s867 = smul.addr %s866, 2
        %s868 = scalar_lea.vmem %s11, %s867
        %p869 = pneg %p314
        %p870 = pneg %p311
        %p871 = scmp.lt.s32.totalorder %s37, 1
        %s872 = scalar_select %p871, %s37, 1
        %s873 = smul.addr %s872, 2
        %s874 = scalar_lea.vmem %s12, %s873
        %p875 = pneg %p340
        %p876 = pneg %p337
        %p877 = scmp.lt.s32.totalorder %s37, 1
        %s878 = scalar_select %p877, %s37, 1
        %s879 = smul.addr %s878, 2
        %s880 = scalar_lea.vmem %s13, %s879
        %p881 = pneg %p366
        %p882 = pneg %p363
        %p883 = scmp.lt.s32.totalorder %s37, 1
        %s884 = scalar_select %p883, %s37, 1
        %s885 = smul.addr %s884, 4
        %s886 = smul.addr %s885, 4
        %s887 = scalar_lea.vmem %s14, %s886
        %p888 = pneg %p392
        %p889 = pneg %p389
        %p890 = scmp.lt.s32.totalorder %s37, 1
        %s891 = scalar_select %p890, %s37, 1
        %s892 = scalar_lea.vmem %s15, %s891
        %p893 = pneg %p418
        %p894 = pneg %p415
        %p895 = scmp.lt.s32.totalorder %s37, 1
        %s896 = scalar_select %p895, %s37, 1
        %s897 = scalar_lea.vmem %s16, %s896
        %p898 = pneg %p444
        %p899 = pneg %p441
        %p900 = scmp.lt.s32.totalorder %s37, 1
        %s901 = scalar_select %p900, %s37, 1
        %s902 = scalar_lea.vmem %s17, %s901
        %p903 = pneg %p470
        %p904 = pneg %p467
        %p905 = scmp.lt.s32.totalorder %s37, 1
        %s906 = scalar_select %p905, %s37, 1
        %s907 = smul.addr %s906, 4
        %s908 = smul.addr %s907, 4
        %s909 = scalar_lea.vmem %s18, %s908
        %p910 = pneg %p496
        %p911 = pneg %p493
        %p912 = scmp.lt.s32.totalorder %s37, 1
        %s913 = scalar_select %p912, %s37, 1
        %s914 = scalar_lea.vmem %s19, %s913
        %p915 = pneg %p522
        %p916 = pneg %p519
        %p917 = scmp.lt.s32.totalorder %s37, 1
        %s918 = scalar_select %p917, %s37, 1
        %s919 = smul.addr %s918, 16
        %s920 = smul.addr %s919, 4
        %s921 = scalar_lea.vmem %s20, %s920
        %p922 = pneg %p548
        %p923 = pneg %p545
        %p924 = scmp.lt.s32.totalorder %s37, 1
        %s925 = scalar_select %p924, %s37, 1
        %s926 = scalar_lea.vmem %s21, %s925
        %p927 = pneg %p574
        %p928 = pneg %p571
        %p929 = pneg %p595
        %p930 = pneg %p592
        %p931 = pneg %p616
        %p932 = pneg %p613
        %p933 = pneg %p637
        %p934 = pneg %p634
        %p935 = pneg %p658
        %p936 = pneg %p655
        %p937 = scmp.lt.s32.totalorder %s37, 1
        %s938 = scalar_select %p937, %s37, 1
        %s939 = scalar_lea.vmem %s6, %s938
        %p940 = scmp.lt.s32.totalorder %s37, 1
        %s941 = scalar_select %p940, %s37, 1
        %s942 = scalar_lea.vmem %s7, %s941
        %p943 = scmp.lt.s32.totalorder %s37, 1
        %s944 = scalar_select %p943, %s37, 1
        %s945 = smul.addr %s944, 8
        %s946 = smul.addr %s945, 4
        %s947 = scalar_lea.vmem %s8, %s946
        %p948 = scmp.lt.s32.totalorder %s37, 1
        %s949 = scalar_select %p948, %s37, 1
        %s950 = smul.addr %s949, 8
        %s951 = smul.addr %s950, 4
        %s952 = scalar_lea.vmem %s9, %s951
        %p953 = scmp.lt.s32.totalorder %s37, 1
        %s954 = scalar_select %p953, %s37, 1
        %s955 = smul.addr %s954, 8
        %s956 = smul.addr %s955, 4
        %s957 = scalar_lea.vmem %s10, %s956
        %p958 = scmp.lt.s32.totalorder %s37, 1
        %s959 = scalar_select %p958, %s37, 1
        %s960 = smul.addr %s959, 2
        %s961 = scalar_lea.vmem %s11, %s960
        %p962 = scmp.lt.s32.totalorder %s37, 1
        %s963 = scalar_select %p962, %s37, 1
        %s964 = smul.addr %s963, 2
        %s965 = scalar_lea.vmem %s12, %s964
        %p966 = scmp.lt.s32.totalorder %s37, 1
        %s967 = scalar_select %p966, %s37, 1
        %s968 = smul.addr %s967, 2
        %s969 = scalar_lea.vmem %s13, %s968
        %p970 = scmp.lt.s32.totalorder %s37, 1
        %s971 = scalar_select %p970, %s37, 1
        %s972 = smul.addr %s971, 4
        %s973 = smul.addr %s972, 4
        %s974 = scalar_lea.vmem %s14, %s973
        %p975 = scmp.lt.s32.totalorder %s37, 1
        %s976 = scalar_select %p975, %s37, 1
        %s977 = scalar_lea.vmem %s15, %s976
        %p978 = scmp.lt.s32.totalorder %s37, 1
        %s979 = scalar_select %p978, %s37, 1
        %s980 = scalar_lea.vmem %s16, %s979
        %p981 = scmp.lt.s32.totalorder %s37, 1
        %s982 = scalar_select %p981, %s37, 1
        %s983 = scalar_lea.vmem %s17, %s982
        %p984 = scmp.lt.s32.totalorder %s37, 1
        %s985 = scalar_select %p984, %s37, 1
        %s986 = smul.addr %s985, 4
        %s987 = smul.addr %s986, 4
        %s988 = scalar_lea.vmem %s18, %s987
        %p989 = scmp.lt.s32.totalorder %s37, 1
        %s990 = scalar_select %p989, %s37, 1
        %s991 = scalar_lea.vmem %s19, %s990
        %p992 = scmp.lt.s32.totalorder %s37, 1
        %s993 = scalar_select %p992, %s37, 1
        %s994 = smul.addr %s993, 16
        %s995 = smul.addr %s994, 4
        %s996 = scalar_lea.vmem %s20, %s995
        %p997 = scmp.lt.s32.totalorder %s37, 1
        %s998 = scalar_select %p997, %s37, 1
        %s999 = scalar_lea.vmem %s21, %s998
        %p1001 = scmp.eq.s32.totalorder %s37, 0
        // Predicated region
        $region121: #{gpt_forward.1} parent=119 // pred_check
          %p1002 = pneg %p1001
        $region122: #{gpt_forward.1} parent=119 // pred_check_branch
          %1004 = sbr.rel (%p1002) target = $region124
        $region123: #{gpt_forward.1} parent=119 // pred_region
          %v1005 = vlaneseq
          %v1006 = vand.u32 %v1005, 127
          %v1007 = vadd.s32 %v1006, 128
          %v1008 = vld [vmem:[%s0] sm:$0xff]
          %v1009 = vld [vmem:[%s0 + $0x8] sm:$0xff]
          %1010 = vset.pattern.permute.xlu0 0
          %1011 = vperm.xlu0 %1010, %v1008
          %v1012 = vpop.permute.xlu0 %1011
          %1013 = vset.pattern.permute.xlu0 0
          %1014 = vperm.xlu0 %1013, %v1009
          %v1015 = vpop.permute.xlu0 %1014
          %vm1016 = vcmp.eq.s32.totalorder %v1006, %v1012
          %vm1017 = vcmp.eq.s32.totalorder %v1007, %v1012
          %vm1018 = vcmp.eq.s32.totalorder %v1006, %v1015
          %vm1019 = vcmp.eq.s32.totalorder %v1007, %v1015
          %v1020 = vsel %vm1016, 1, 0
          %v1021 = vsel %vm1017, 1, 0
          %v1022 = vsel %vm1018, 1, 0
          %v1023 = vsel %vm1019, 1, 0
          %v1024 = vcvt.s32.f32 %v1020
          %v1025 = vcvt.s32.f32 %v1021
          %v1026 = vcvt.s32.f32 %v1022
          %v1027 = vcvt.s32.f32 %v1023
          %v1028 = vld [vmem:[%s3] sm:$0xff]
          %v1029 = vld [vmem:[%s3 + $0x8] sm:$0xff]
          %1030 = vset.pattern.permute.xlu0 0
          %1031 = vperm.xlu0 %1030, %v1028
          %v1032 = vpop.permute.xlu0 %1031
          %1033 = vset.pattern.permute.xlu0 0
          %1034 = vperm.xlu0 %1033, %v1029
          %v1035 = vpop.permute.xlu0 %1034
          %vm1036 = vcmp.eq.s32.totalorder %v1006, %v1032
          %vm1037 = vcmp.eq.s32.totalorder %v1006, %v1035
          %v1038 = vsel %vm1036, 1, 0
          %v1039 = vsel %vm1037, 1, 0
          %v1040 = vcvt.s32.f32 %v1038
          %v1041 = vcvt.s32.f32 %v1039
          %v1042 = vld [vmem:[%s4] sm:$0xff]
          %v1043 = vld [vmem:[%s4 + $0x8] sm:$0xff]
          %v1044 = vld [vmem:[%s4 + $0x10] sm:$0xff]
          %v1045 = vld [vmem:[%s4 + $0x18] sm:$0xff]
          %v1046 = vld [vmem:[%s4 + $0x20] sm:$0xff]
          %v1047 = vld [vmem:[%s4 + $0x28] sm:$0xff]
          %v1048 = vld [vmem:[%s4 + $0x30] sm:$0xff]
          %v1049 = vld [vmem:[%s4 + $0x38] sm:$0xff]
          %v1050 = vld [vmem:[%s4 + $0x40] sm:$0xff]
          %v1051 = vld [vmem:[%s4 + $0x48] sm:$0xff]
          %v1052 = vld [vmem:[%s4 + $0x50] sm:$0xff]
          %v1053 = vld [vmem:[%s4 + $0x58] sm:$0xff]
          %v1054 = vld [vmem:[%s4 + $0x60] sm:$0xff]
          %v1055 = vld [vmem:[%s4 + $0x68] sm:$0xff]
          %v1056 = vld [vmem:[%s4 + $0x70] sm:$0xff]
          %v1057 = vld [vmem:[%s4 + $0x78] sm:$0xff]
          %v1058 = vld [vmem:[%s4 + $0x80] sm:$0xff]
          %v1059 = vld [vmem:[%s4 + $0x88] sm:$0xff]
          %v1060 = vld [vmem:[%s4 + $0x90] sm:$0xff]
          %v1061 = vld [vmem:[%s4 + $0x98] sm:$0xff]
          %v1062 = vld [vmem:[%s4 + $0xa0] sm:$0xff]
          %v1063 = vld [vmem:[%s4 + $0xa8] sm:$0xff]
          %v1064 = vld [vmem:[%s4 + $0xb0] sm:$0xff]
          %v1065 = vld [vmem:[%s4 + $0xb8] sm:$0xff]
          %v1066 = vld [vmem:[%s4 + $0xc0] sm:$0xff]
          %v1067 = vld [vmem:[%s4 + $0xc8] sm:$0xff]
          %v1068 = vld [vmem:[%s4 + $0xd0] sm:$0xff]
          %v1069 = vld [vmem:[%s4 + $0xd8] sm:$0xff]
          %v1070 = vld [vmem:[%s4 + $0xe0] sm:$0xff]
          %v1071 = vld [vmem:[%s4 + $0xe8] sm:$0xff]
          %v1072 = vld [vmem:[%s4 + $0xf0] sm:$0xff]
          %v1073 = vld [vmem:[%s4 + $0xf8] sm:$0xff]
          %v1074 = vld [vmem:[%s5] sm:$0xff]
          %v1075 = vld [vmem:[%s5 + $0x8] sm:$0xff]
          %vm1076 = vcmask 130048
          %v1078 = vsel %vm1076, %v1040, 0
          %v1081 = vsel %vm1076, %v1041, 0
          %1083 = vmatprep.subr.mxu0 0.0
          %1084 = vmatpush1.msra.mxu0 0.0
          %1085 = vmatprep.subr.mxu0 0.0
          %1086 = vmatpush1.msra.mxu0 0.0
          %1087 = vmatprep.subr.mxu0 0.0
          %1088 = vmatpush1.msra.mxu0 0.0
          %1089 = vmatprep.subr.mxu0 0.0
          %1090 = vmatpush1.msra.mxu0 0.0
          %1091 = vmatprep.subr.mxu0 0.0
          %1092 = vmatpush1.msra.mxu0 0.0
          %1093 = vmatprep.subr.mxu0 0.0
          %1094 = vmatpush1.msra.mxu0 0.0
          %1095 = vmatprep.subr.mxu0 0.0
          %1096 = vmatpush1.msra.mxu0 0.0
          %1097 = vmatprep.subr.mxu0 0.0
          %1098 = vmatpush1.msra.mxu0 0.0
          %1099 = vmatprep.subr.mxu0 0.0
          %1100 = vmatpush1.msra.mxu0 0.0
          %1101 = vmatprep.subr.mxu0 0.0
          %1102 = vmatpush1.msra.mxu0 0.0
          %1103 = vmatprep.subr.mxu0 0.0
          %1104 = vmatpush1.msra.mxu0 0.0
          %1105 = vmatprep.subr.mxu0 0.0
          %1106 = vmatpush1.msra.mxu0 0.0
          %1107 = vmatprep.subr.mxu0 0.0
          %1108 = vmatpush1.msra.mxu0 0.0
          %1109 = vmatprep.subr.mxu0 0.0
          %1110 = vmatpush1.msra.mxu0 0.0
          %1111 = vmatprep.subr.mxu0 0.0
          %1112 = vmatpush1.msra.mxu0 %v1075
          %1113 = vmatprep.subr.mxu0 0.0
          %1114 = vmatpush1.msra.mxu0 %v1074
          %1115 = vmatprep.subr.mxu0 0.0
          %1116 = vmatpush2.msra.mxu0 0.0
          %1117 = vmatprep.subr.mxu0 0.0
          %1118 = vmatpush2.msra.mxu0 0.0
          %1119 = vmatprep.subr.mxu0 0.0
          %1120 = vmatpush2.msra.mxu0 0.0
          %1121 = vmatprep.subr.mxu0 0.0
          %1122 = vmatpush2.msra.mxu0 0.0
          %1123 = vmatprep.subr.mxu0 0.0
          %1124 = vmatpush2.msra.mxu0 0.0
          %1125 = vmatprep.subr.mxu0 0.0
          %1126 = vmatpush2.msra.mxu0 0.0
          %1127 = vmatprep.subr.mxu0 0.0
          %1128 = vmatpush2.msra.mxu0 0.0
          %1129 = vmatprep.subr.mxu0 0.0
          %1130 = vmatpush2.msra.mxu0 0.0
          %1131 = vmatprep.subr.mxu0 0.0
          %1132 = vmatpush2.msra.mxu0 0.0
          %1133 = vmatprep.subr.mxu0 0.0
          %1134 = vmatpush2.msra.mxu0 0.0
          %1135 = vmatprep.subr.mxu0 0.0
          %1136 = vmatpush2.msra.mxu0 0.0
          %1137 = vmatprep.subr.mxu0 0.0
          %1138 = vmatpush2.msra.mxu0 0.0
          %1139 = vmatprep.subr.mxu0 0.0
          %1140 = vmatpush2.msra.mxu0 0.0
          %1141 = vmatprep.subr.mxu0 0.0
          %1142 = vmatpush2.msra.mxu0 0.0
          %1143 = vmatprep.subr.mxu0 0.0
          %1144 = vmatpush2.msra.mxu0 0.0
          %1145 = vmatprep.subr.mxu0 0.0
          %1146 = vmatpush2.msra.mxu0 0.0
          %1147 = vmatprep.mubr.f32.mxu0 0.0
          %1148 = vmatmul.mubr.f32.gmra.mxu0 %v1078
          %v1149 = vpop.f32.mrf.mxu0
          %v1150 = vadd.f32 0.0, %v1149
          %v1151 = vpop.f32.mrf.mxu0
          %1152 = vmatprep.mubr.f32.mxu0 0.0
          %1153 = vmatmul.mubr.f32.gmra.mxu0 %v1081
          %v1154 = vpop.f32.mrf.mxu0
          %v1155 = vadd.f32 0.0, %v1154
          %v1156 = vpop.f32.mrf.mxu0
          %1157 = vdwg.mxu0
          %1158 = vmatprep.subr.mxu0 0.0
          %1159 = vmatpush1.msra.mxu0 %v1057
          %1160 = vmatprep.subr.mxu0 0.0
          %1161 = vmatpush1.msra.mxu0 %v1056
          %1162 = vmatprep.subr.mxu0 0.0
          %1163 = vmatpush1.msra.mxu0 %v1055
          %1164 = vmatprep.subr.mxu0 0.0
          %1165 = vmatpush1.msra.mxu0 %v1054
          %1166 = vmatprep.subr.mxu0 0.0
          %1167 = vmatpush1.msra.mxu0 %v1053
          %1168 = vmatprep.subr.mxu0 0.0
          %1169 = vmatpush1.msra.mxu0 %v1052
          %1170 = vmatprep.subr.mxu0 0.0
          %1171 = vmatpush1.msra.mxu0 %v1051
          %1172 = vmatprep.subr.mxu0 0.0
          %1173 = vmatpush1.msra.mxu0 %v1050
          %1174 = vmatprep.subr.mxu0 0.0
          %1175 = vmatpush1.msra.mxu0 %v1049
          %1176 = vmatprep.subr.mxu0 0.0
          %1177 = vmatpush1.msra.mxu0 %v1048
          %1178 = vmatprep.subr.mxu0 0.0
          %1179 = vmatpush1.msra.mxu0 %v1047
          %1180 = vmatprep.subr.mxu0 0.0
          %1181 = vmatpush1.msra.mxu0 %v1046
          %1182 = vmatprep.subr.mxu0 0.0
          %1183 = vmatpush1.msra.mxu0 %v1045
          %1184 = vmatprep.subr.mxu0 0.0
          %1185 = vmatpush1.msra.mxu0 %v1044
          %1186 = vmatprep.subr.mxu0 0.0
          %1187 = vmatpush1.msra.mxu0 %v1043
          %1188 = vmatprep.subr.mxu0 0.0
          %1189 = vmatpush1.msra.mxu0 %v1042
          %1190 = vmatprep.subr.mxu0 0.0
          %1191 = vmatpush2.msra.mxu0 %v1073
          %1192 = vmatprep.subr.mxu0 0.0
          %1193 = vmatpush2.msra.mxu0 %v1072
          %1194 = vmatprep.subr.mxu0 0.0
          %1195 = vmatpush2.msra.mxu0 %v1071
          %1196 = vmatprep.subr.mxu0 0.0
          %1197 = vmatpush2.msra.mxu0 %v1070
          %1198 = vmatprep.subr.mxu0 0.0
          %1199 = vmatpush2.msra.mxu0 %v1069
          %1200 = vmatprep.subr.mxu0 0.0
          %1201 = vmatpush2.msra.mxu0 %v1068
          %1202 = vmatprep.subr.mxu0 0.0
          %1203 = vmatpush2.msra.mxu0 %v1067
          %1204 = vmatprep.subr.mxu0 0.0
          %1205 = vmatpush2.msra.mxu0 %v1066
          %1206 = vmatprep.subr.mxu0 0.0
          %1207 = vmatpush2.msra.mxu0 %v1065
          %1208 = vmatprep.subr.mxu0 0.0
          %1209 = vmatpush2.msra.mxu0 %v1064
          %1210 = vmatprep.subr.mxu0 0.0
          %1211 = vmatpush2.msra.mxu0 %v1063
          %1212 = vmatprep.subr.mxu0 0.0
          %1213 = vmatpush2.msra.mxu0 %v1062
          %1214 = vmatprep.subr.mxu0 0.0
          %1215 = vmatpush2.msra.mxu0 %v1061
          %1216 = vmatprep.subr.mxu0 0.0
          %1217 = vmatpush2.msra.mxu0 %v1060
          %1218 = vmatprep.subr.mxu0 0.0
          %1219 = vmatpush2.msra.mxu0 %v1059
          %1220 = vmatprep.subr.mxu0 0.0
          %1221 = vmatpush2.msra.mxu0 %v1058
          %1222 = vmatprep.mubr.f32.mxu0 %v1025
          %1223 = vmatmul.mubr.f32.gmra.mxu0 %v1024
          %v1224 = vpop.f32.mrf.mxu0
          %v1225 = vadd.f32 %v1150, %v1224
          %v1226 = vpop.f32.mrf.mxu0
          %1227 = vmatprep.mubr.f32.mxu0 %v1027
          %1228 = vmatmul.mubr.f32.gmra.mxu0 %v1026
          %v1229 = vpop.f32.mrf.mxu0
          %v1230 = vadd.f32 %v1155, %v1229
          %v1231 = vpop.f32.mrf.mxu0
          %1232 = vdwg.mxu0
          %vm1233 = vcmask 261120
          %1234 = vst.msk [vmem:[#allocation2] sm:$0xff] %vm1233, %v1225
          %1235 = vst.msk [vmem:[#allocation2 + $0x8] sm:$0xff] %vm1233, %v1230
        $region124: #{gpt_forward.1} parent=119 // pred_fallthru
          _
        %v1236 = vld [vmem:[#allocation2] sm:$0xff]
        %v1237 = vld [vmem:[#allocation2 + $0x8] sm:$0xff]
        %v1238 = vlaneseq
        %v1239 = vshrl.u32 %v1238, 7
        %v1240 = vadd.s32 %v1239, 8
        %v1241 = vlaneseq
        %v1242 = vand.u32 %v1241, 127
        %v1243 = vld [vmem:[%s1] sm:$0xff]
        %v1244 = vld [vmem:[%s1 + $0x8] sm:$0xff]
        %v1245 = vld [vmem:[%s2] sm:$0x1]
        %1246 = vset.pattern.permute.xlu0 0
        %1247 = vperm.xlu0 %1246, %v1243
        %v1248 = vpop.permute.xlu0 %1247
        %1249 = vset.pattern.permute.xlu0 0
        %1250 = vperm.xlu0 %1249, %v1244
        %v1251 = vpop.permute.xlu0 %1250
        %v1252 = vlaneseq
        %v1253 = vshrl.u32 %v1252, 7
        %v1254 = vsub.s32 0, %v1253
        %v1255 = vrot.slane %v1245, %v1254
        %vm1256 = vcmp.eq.s32.totalorder %v1248, %v1255
        %vm1257 = vcmp.eq.s32.totalorder %v1251, %v1255
        %vm1258 = vcmp.le.s32.totalorder %v1242, %v1239
        %vm1259 = vcmp.le.s32.totalorder %v1242, %v1240
        %vm1260 = vmand %vm1256, %vm1258
        %vm1261 = vmand %vm1257, %vm1259
        %v1262 = vsel %vm1260, 0.0, -1e+30
        %v1263 = vsel %vm1261, 0.0, -1e+30
        %v1264 = vld [vmem:[%s939] sm:$0x1]
        %v1265 = vld [vmem:[%s942] sm:$0x1]
        %vm1266 = vcmask 261120
        %v1267 = vsel %vm1266, %v1236, 0.0
        %1268 = vadd.xlane.f32.xlu0 %v1267
        %v1269 = vpop.xlane.xlu0 %1268
        %v1270 = vsel %vm1266, %v1237, 0.0
        %1271 = vadd.xlane.f32.xlu0 %v1270
        %v1272 = vpop.xlane.xlu0 %1271
        %v1273 = vrcp.pop 32.0
        %v1274 = vmul.f32 %v1269, %v1273
        %v1275 = vmul.f32 %v1272, %v1273
        %v1276 = vsub.f32 %v1236, %v1274
        %v1277 = vsub.f32 %v1237, %v1275
        %v1278 = vmul.f32 %v1276, %v1276
        %v1279 = vmul.f32 %v1277, %v1277
        %v1280 = vsel %vm1266, %v1278, 0.0
        %1281 = vadd.xlane.f32.xlu0 %v1280
        %v1282 = vpop.xlane.xlu0 %1281
        %v1283 = vsel %vm1266, %v1279, 0.0
        %1284 = vadd.xlane.f32.xlu0 %v1283
        %v1285 = vpop.xlane.xlu0 %1284
        %v1286 = vmul.f32 %v1282, %v1273
        %v1287 = vmul.f32 %v1285, %v1273
        %v1288 = vadd.f32 %v1286, 1e-05
        %v1289 = vadd.f32 %v1287, 1e-05
        %v1290 = vrsqrt.pop %v1288
        %v1291 = vrsqrt.pop %v1289
        %v1292 = vmul.f32 %v1276, %v1290
        %v1293 = vmul.f32 %v1277, %v1291
        %v1295 = vlaneseq
        %v1296 = vshrl.u32 %v1295, 7
        %v1297 = vsub.s32 0, %v1296
        %v1298 = vrot.slane %v1264, %v1297
        %v1300 = vmul.f32 %v1292, %v1298
        %v1301 = vmul.f32 %v1293, %v1298
        %v1303 = vlaneseq
        %v1304 = vshrl.u32 %v1303, 7
        %v1305 = vsub.s32 0, %v1304
        %v1306 = vrot.slane %v1265, %v1305
        %v1308 = vadd.f32 %v1300, %v1306
        %v1309 = vadd.f32 %v1301, %v1306
        %v1310 = vpack.c.bf16 %v1309, %v1308
        %v1311 = vld [vmem:[%s947] sm:$0xf]
        %v1312 = vld [vmem:[%s947 + $0x4] sm:$0xf]
        %v1313 = vld [vmem:[%s947 + $0x8] sm:$0xf]
        %v1314 = vld [vmem:[%s947 + $0xc] sm:$0xf]
        %v1315 = vld [vmem:[%s961] sm:$0x1]
        %v1317 = vlaneseq
        %v1318 = vshrl.u32 %v1317, 7
        %v1319 = vsub.s32 0, %v1318
        %v1320 = vrot.slane %v1315, %v1319
        %v1326 = vunpack.c.l.b16 %v1311
        %v1327 = vunpack.c.l.b16 %v1312
        %v1328 = vunpack.c.l.b16 %v1313
        %v1329 = vunpack.c.l.b16 %v1314
        %v1330 = vpack.c.b16 %v1327, %v1326
        %v1331 = vpack.c.b16 %v1329, %v1328
        %v1335 = vsel %vm1266, %v1310, 0
        %1337 = vmatprep.subr.bf16.mxu0 0
        %1338 = vmatpush1.bf16.msra.mxu0 0
        %1339 = vmatprep.subr.bf16.mxu0 0
        %1340 = vmatpush1.bf16.msra.mxu0 0
        %1341 = vmatprep.subr.bf16.mxu0 0
        %1342 = vmatpush1.bf16.msra.mxu0 0
        %1343 = vmatprep.subr.bf16.mxu0 0
        %1344 = vmatpush1.bf16.msra.mxu0 0
        %1345 = vmatprep.subr.bf16.mxu0 0
        %1346 = vmatpush1.bf16.msra.mxu0 0
        %1347 = vmatprep.subr.bf16.mxu0 0
        %1348 = vmatpush1.bf16.msra.mxu0 0
        %1349 = vmatprep.subr.bf16.mxu0 0
        %1350 = vmatpush1.bf16.msra.mxu0 %v1331
        %1351 = vmatprep.subr.bf16.mxu0 0
        %1352 = vmatpush1.bf16.msra.mxu0 %v1330
        %1353 = vmatprep.subr.bf16.mxu0 0
        %1354 = vmatpush2.bf16.msra.mxu0 0
        %1355 = vmatprep.subr.bf16.mxu0 0
        %1356 = vmatpush2.bf16.msra.mxu0 0
        %1357 = vmatprep.subr.bf16.mxu0 0
        %1358 = vmatpush2.bf16.msra.mxu0 0
        %1359 = vmatprep.subr.bf16.mxu0 0
        %1360 = vmatpush2.bf16.msra.mxu0 0
        %1361 = vmatprep.subr.bf16.mxu0 0
        %1362 = vmatpush2.bf16.msra.mxu0 0
        %1363 = vmatprep.subr.bf16.mxu0 0
        %1364 = vmatpush2.bf16.msra.mxu0 0
        %1365 = vmatprep.subr.bf16.mxu0 0
        %1366 = vmatpush2.bf16.msra.mxu0 0
        %1367 = vmatprep.subr.bf16.mxu0 0
        %1368 = vmatpush2.bf16.msra.mxu0 0
        %1369 = vmatprep.mubr.bf16.mxu0 0
        %1370 = vmatmul.mubr.bf16.gmra.mxu0 %v1335
        %v1371 = vpop.f32.mrf.mxu0
        %v1372 = vadd.f32 %v1320, %v1371
        %v1373 = vpop.f32.mrf.mxu0
        %v1374 = vpop.f32.mrf.mxu0
        %v1375 = vadd.f32 %v1320, %v1374
        %v1376 = vpop.f32.mrf.mxu0
        %1377 = vdwg.mxu0
        %v1378 = vld [vmem:[%s952] sm:$0xf]
        %v1379 = vld [vmem:[%s952 + $0x4] sm:$0xf]
        %v1380 = vld [vmem:[%s952 + $0x8] sm:$0xf]
        %v1381 = vld [vmem:[%s952 + $0xc] sm:$0xf]
        %v1382 = vld [vmem:[%s965] sm:$0x1]
        %v1384 = vlaneseq
        %v1385 = vshrl.u32 %v1384, 7
        %v1386 = vsub.s32 0, %v1385
        %v1387 = vrot.slane %v1382, %v1386
        %v1393 = vunpack.c.l.b16 %v1378
        %v1394 = vunpack.c.l.b16 %v1379
        %v1395 = vunpack.c.l.b16 %v1380
        %v1396 = vunpack.c.l.b16 %v1381
        %v1397 = vpack.c.b16 %v1394, %v1393
        %v1398 = vpack.c.b16 %v1396, %v1395
        %1401 = vmatprep.subr.bf16.mxu0 0
        %1402 = vmatpush1.bf16.msra.mxu0 0
        %1403 = vmatprep.subr.bf16.mxu0 0
        %1404 = vmatpush1.bf16.msra.mxu0 0
        %1405 = vmatprep.subr.bf16.mxu0 0
        %1406 = vmatpush1.bf16.msra.mxu0 0
        %1407 = vmatprep.subr.bf16.mxu0 0
        %1408 = vmatpush1.bf16.msra.mxu0 0
        %1409 = vmatprep.subr.bf16.mxu0 0
        %1410 = vmatpush1.bf16.msra.mxu0 0
        %1411 = vmatprep.subr.bf16.mxu0 0
        %1412 = vmatpush1.bf16.msra.mxu0 0
        %1413 = vmatprep.subr.bf16.mxu0 0
        %1414 = vmatpush1.bf16.msra.mxu0 %v1398
        %1415 = vmatprep.subr.bf16.mxu0 0
        %1416 = vmatpush1.bf16.msra.mxu0 %v1397
        %1417 = vmatprep.subr.bf16.mxu0 0
        %1418 = vmatpush2.bf16.msra.mxu0 0
        %1419 = vmatprep.subr.bf16.mxu0 0
        %1420 = vmatpush2.bf16.msra.mxu0 0
        %1421 = vmatprep.subr.bf16.mxu0 0
        %1422 = vmatpush2.bf16.msra.mxu0 0
        %1423 = vmatprep.subr.bf16.mxu0 0
        %1424 = vmatpush2.bf16.msra.mxu0 0
        %1425 = vmatprep.subr.bf16.mxu0 0
        %1426 = vmatpush2.bf16.msra.mxu0 0
        %1427 = vmatprep.subr.bf16.mxu0 0
        %1428 = vmatpush2.bf16.msra.mxu0 0
        %1429 = vmatprep.subr.bf16.mxu0 0
        %1430 = vmatpush2.bf16.msra.mxu0 0
        %1431 = vmatprep.subr.bf16.mxu0 0
        %1432 = vmatpush2.bf16.msra.mxu0 0
        %1433 = vmatprep.mubr.bf16.mxu0 0
        %1434 = vmatmul.mubr.bf16.gmra.mxu0 %v1335
        %v1435 = vpop.f32.mrf.mxu0
        %v1436 = vadd.f32 %v1387, %v1435
        %v1437 = vpop.f32.mrf.mxu0
        %v1438 = vpop.f32.mrf.mxu0
        %v1439 = vadd.f32 %v1387, %v1438
        %v1440 = vpop.f32.mrf.mxu0
        %1441 = vdwg.mxu0
        %v1442 = vld [vmem:[%s957] sm:$0xf]
        %v1443 = vld [vmem:[%s957 + $0x4] sm:$0xf]
        %v1444 = vld [vmem:[%s957 + $0x8] sm:$0xf]
        %v1445 = vld [vmem:[%s957 + $0xc] sm:$0xf]
        %v1446 = vld [vmem:[%s969] sm:$0x1]
        %v1448 = vlaneseq
        %v1449 = vshrl.u32 %v1448, 7
        %v1450 = vsub.s32 0, %v1449
        %v1451 = vrot.slane %v1446, %v1450
        %v1457 = vunpack.c.l.b16 %v1442
        %v1458 = vunpack.c.l.b16 %v1443
        %v1459 = vunpack.c.l.b16 %v1444
        %v1460 = vunpack.c.l.b16 %v1445
        %v1461 = vpack.c.b16 %v1458, %v1457
        %v1462 = vpack.c.b16 %v1460, %v1459
        %1465 = vmatprep.subr.bf16.mxu0 0
        %1466 = vmatpush1.bf16.msra.mxu0 0
        %1467 = vmatprep.subr.bf16.mxu0 0
        %1468 = vmatpush1.bf16.msra.mxu0 0
        %1469 = vmatprep.subr.bf16.mxu0 0
        %1470 = vmatpush1.bf16.msra.mxu0 0
        %1471 = vmatprep.subr.bf16.mxu0 0
        %1472 = vmatpush1.bf16.msra.mxu0 0
        %1473 = vmatprep.subr.bf16.mxu0 0
        %1474 = vmatpush1.bf16.msra.mxu0 0
        %1475 = vmatprep.subr.bf16.mxu0 0
        %1476 = vmatpush1.bf16.msra.mxu0 0
        %1477 = vmatprep.subr.bf16.mxu0 0
        %1478 = vmatpush1.bf16.msra.mxu0 %v1462
        %1479 = vmatprep.subr.bf16.mxu0 0
        %1480 = vmatpush1.bf16.msra.mxu0 %v1461
        %1481 = vmatprep.subr.bf16.mxu0 0
        %1482 = vmatpush2.bf16.msra.mxu0 0
        %1483 = vmatprep.subr.bf16.mxu0 0
        %1484 = vmatpush2.bf16.msra.mxu0 0
        %1485 = vmatprep.subr.bf16.mxu0 0
        %1486 = vmatpush2.bf16.msra.mxu0 0
        %1487 = vmatprep.subr.bf16.mxu0 0
        %1488 = vmatpush2.bf16.msra.mxu0 0
        %1489 = vmatprep.subr.bf16.mxu0 0
        %1490 = vmatpush2.bf16.msra.mxu0 0
        %1491 = vmatprep.subr.bf16.mxu0 0
        %1492 = vmatpush2.bf16.msra.mxu0 0
        %1493 = vmatprep.subr.bf16.mxu0 0
        %1494 = vmatpush2.bf16.msra.mxu0 0
        %1495 = vmatprep.subr.bf16.mxu0 0
        %1496 = vmatpush2.bf16.msra.mxu0 0
        %1497 = vmatprep.mubr.bf16.mxu0 0
        %1498 = vmatmul.mubr.bf16.gmra.mxu0 %v1335
        %v1499 = vpop.f32.mrf.mxu0
        %v1500 = vadd.f32 %v1451, %v1499
        %v1501 = vpop.f32.mrf.mxu0
        %v1502 = vpop.f32.mrf.mxu0
        %v1503 = vadd.f32 %v1451, %v1502
        %v1504 = vpop.f32.mrf.mxu0
        %1505 = vdwg.mxu0
        %v1506 = vpack.c.bf16 %v1375, %v1372
        %v1507 = vpack.c.bf16 %v1439, %v1436
        %vm1508 = vcmask 130048
        %v1510 = vsel %vm1508, %v1506, 0
        %v1513 = vsel %vm1508, %v1507, 0
        %1515 = vmatprep.subr.bf16.mxu0 0
        %1516 = vmatpush1.bf16.xpose.msra.mxu0 0
        %1517 = vmatprep.subr.bf16.mxu0 0
        %1518 = vmatpush1.bf16.xpose.msra.mxu0 0
        %1519 = vmatprep.subr.bf16.mxu0 0
        %1520 = vmatpush1.bf16.xpose.msra.mxu0 0
        %1521 = vmatprep.subr.bf16.mxu0 0
        %1522 = vmatpush1.bf16.xpose.msra.mxu0 0
        %1523 = vmatprep.subr.bf16.mxu0 0
        %1524 = vmatpush1.bf16.xpose.msra.mxu0 0
        %1525 = vmatprep.subr.bf16.mxu0 0
        %1526 = vmatpush1.bf16.xpose.msra.mxu0 0
        %1527 = vmatprep.subr.bf16.mxu0 0
        %1528 = vmatpush1.bf16.xpose.msra.mxu0 0
        %1529 = vmatprep.subr.bf16.mxu0 0
        %1530 = vmatpush1.bf16.xpose.msra.mxu0 %v1513
        %1531 = vmatprep.subr.bf16.mxu0 0
        %1532 = vmatpush2.bf16.xpose.msra.mxu0 0
        %1533 = vmatprep.subr.bf16.mxu0 0
        %1534 = vmatpush2.bf16.xpose.msra.mxu0 0
        %1535 = vmatprep.subr.bf16.mxu0 0
        %1536 = vmatpush2.bf16.xpose.msra.mxu0 0
        %1537 = vmatprep.subr.bf16.mxu0 0
        %1538 = vmatpush2.bf16.xpose.msra.mxu0 0
        %1539 = vmatprep.subr.bf16.mxu0 0
        %1540 = vmatpush2.bf16.xpose.msra.mxu0 0
        %1541 = vmatprep.subr.bf16.mxu0 0
        %1542 = vmatpush2.bf16.xpose.msra.mxu0 0
        %1543 = vmatprep.subr.bf16.mxu0 0
        %1544 = vmatpush2.bf16.xpose.msra.mxu0 0
        %1545 = vmatprep.subr.bf16.mxu0 0
        %1546 = vmatpush2.bf16.xpose.msra.mxu0 0
        %1547 = vmatprep.mubr.bf16.mxu0 0
        %1548 = vmatmul.mubr.bf16.gmra.mxu0 %v1510
        %v1549 = vpop.f32.mrf.mxu0
        %v1550 = vadd.f32 0.0, %v1549
        %v1551 = vpop.f32.mrf.mxu0
        %v1552 = vpop.f32.mrf.mxu0
        %v1553 = vadd.f32 0.0, %v1552
        %v1554 = vpop.f32.mrf.mxu0
        %1555 = vdwg.mxu0
        %v1556 = vmul.f32 %v1550, 0.25
        %v1557 = vmul.f32 %v1553, 0.25
        %v1558 = vadd.f32 %v1556, %v1262
        %v1559 = vadd.f32 %v1557, %v1263
        %v1560 = vsel %vm1508, %v1558, -inf
        %1561 = vmax.xlane.f32.xlu0 %v1560
        %v1562 = vpop.xlane.xlu0 %1561
        %v1563 = vsel %vm1508, %v1559, -inf
        %1564 = vmax.xlane.f32.xlu0 %v1563
        %v1565 = vpop.xlane.xlu0 %1564
        %v1566 = vsub.f32 %v1558, %v1562
        %v1567 = vsub.f32 %v1559, %v1565
        %v1568 = vmul.f32 %v1566, 1.442695
        %v1569 = vpow.pop %v1568
        %v1570 = vmul.f32 %v1567, 1.442695
        %v1571 = vpow.pop %v1570
        %v1572 = vsel %vm1508, %v1569, 0.0
        %1573 = vadd.xlane.f32.xlu0 %v1572
        %v1574 = vpop.xlane.xlu0 %1573
        %v1575 = vsel %vm1508, %v1571, 0.0
        %1576 = vadd.xlane.f32.xlu0 %v1575
        %v1577 = vpop.xlane.xlu0 %1576
        %v1578 = vrcp.pop %v1574
        %v1579 = vrcp.pop %v1577
        %v1580 = vmul.f32 %v1569, %v1578
        %v1581 = vmul.f32 %v1571, %v1579
        %v1582 = vpack.c.bf16 %v1581, %v1580
        %v1583 = vpack.c.bf16 %v1503, %v1500
        %v1585 = vsel %vm1508, %v1582, 0
        %1587 = vmatprep.subr.bf16.mxu0 0
        %1588 = vmatpush1.bf16.msra.mxu0 0
        %1589 = vmatprep.subr.bf16.mxu0 0
        %1590 = vmatpush1.bf16.msra.mxu0 0
        %1591 = vmatprep.subr.bf16.mxu0 0
        %1592 = vmatpush1.bf16.msra.mxu0 0
        %1593 = vmatprep.subr.bf16.mxu0 0
        %1594 = vmatpush1.bf16.msra.mxu0 0
        %1595 = vmatprep.subr.bf16.mxu0 0
        %1596 = vmatpush1.bf16.msra.mxu0 0
        %1597 = vmatprep.subr.bf16.mxu0 0
        %1598 = vmatpush1.bf16.msra.mxu0 0
        %1599 = vmatprep.subr.bf16.mxu0 0
        %1600 = vmatpush1.bf16.msra.mxu0 0
        %1601 = vmatprep.subr.bf16.mxu0 0
        %1602 = vmatpush1.bf16.msra.mxu0 %v1583
        %1603 = vmatprep.subr.bf16.mxu0 0
        %1604 = vmatpush2.bf16.msra.mxu0 0
        %1605 = vmatprep.subr.bf16.mxu0 0
        %1606 = vmatpush2.bf16.msra.mxu0 0
        %1607 = vmatprep.subr.bf16.mxu0 0
        %1608 = vmatpush2.bf16.msra.mxu0 0
        %1609 = vmatprep.subr.bf16.mxu0 0
        %1610 = vmatpush2.bf16.msra.mxu0 0
        %1611 = vmatprep.subr.bf16.mxu0 0
        %1612 = vmatpush2.bf16.msra.mxu0 0
        %1613 = vmatprep.subr.bf16.mxu0 0
        %1614 = vmatpush2.bf16.msra.mxu0 0
        %1615 = vmatprep.subr.bf16.mxu0 0
        %1616 = vmatpush2.bf16.msra.mxu0 0
        %1617 = vmatprep.subr.bf16.mxu0 0
        %1618 = vmatpush2.bf16.msra.mxu0 0
        %1619 = vmatprep.mubr.bf16.mxu0 0
        %1620 = vmatmul.mubr.bf16.gmra.mxu0 %v1585
        %v1621 = vpop.f32.mrf.mxu0
        %v1622 = vadd.f32 0.0, %v1621
        %v1623 = vpop.f32.mrf.mxu0
        %v1624 = vpop.f32.mrf.mxu0
        %v1625 = vadd.f32 0.0, %v1624
        %v1626 = vpop.f32.mrf.mxu0
        %1627 = vdwg.mxu0
        %v1628 = vpack.c.bf16 %v1625, %v1622
        %v1629 = vld [vmem:[%s974] sm:$0xf]
        %v1630 = vld [vmem:[%s974 + $0x4] sm:$0xf]
        %s1631 = scalar_lea.vmem %s947, 16
        %v1632 = vld [vmem:[%s1631] sm:$0xf]
        %v1633 = vld [vmem:[%s1631 + $0x4] sm:$0xf]
        %v1634 = vld [vmem:[%s1631 + $0x8] sm:$0xf]
        %v1635 = vld [vmem:[%s1631 + $0xc] sm:$0xf]
        %s1636 = scalar_lea.vmem %s961, 1
        %v1637 = vld [vmem:[%s1636] sm:$0x1]
        %v1639 = vlaneseq
        %v1640 = vshrl.u32 %v1639, 7
        %v1641 = vsub.s32 0, %v1640
        %v1642 = vrot.slane %v1637, %v1641
        %v1648 = vunpack.c.l.b16 %v1632
        %v1649 = vunpack.c.l.b16 %v1633
        %v1650 = vunpack.c.l.b16 %v1634
        %v1651 = vunpack.c.l.b16 %v1635
        %v1652 = vpack.c.b16 %v1649, %v1648
        %v1653 = vpack.c.b16 %v1651, %v1650
        %1656 = vmatprep.subr.bf16.mxu0 0
        %1657 = vmatpush1.bf16.msra.mxu0 0
        %1658 = vmatprep.subr.bf16.mxu0 0
        %1659 = vmatpush1.bf16.msra.mxu0 0
        %1660 = vmatprep.subr.bf16.mxu0 0
        %1661 = vmatpush1.bf16.msra.mxu0 0
        %1662 = vmatprep.subr.bf16.mxu0 0
        %1663 = vmatpush1.bf16.msra.mxu0 0
        %1664 = vmatprep.subr.bf16.mxu0 0
        %1665 = vmatpush1.bf16.msra.mxu0 0
        %1666 = vmatprep.subr.bf16.mxu0 0
        %1667 = vmatpush1.bf16.msra.mxu0 0
        %1668 = vmatprep.subr.bf16.mxu0 0
        %1669 = vmatpush1.bf16.msra.mxu0 %v1653
        %1670 = vmatprep.subr.bf16.mxu0 0
        %1671 = vmatpush1.bf16.msra.mxu0 %v1652
        %1672 = vmatprep.subr.bf16.mxu0 0
        %1673 = vmatpush2.bf16.msra.mxu0 0
        %1674 = vmatprep.subr.bf16.mxu0 0
        %1675 = vmatpush2.bf16.msra.mxu0 0
        %1676 = vmatprep.subr.bf16.mxu0 0
        %1677 = vmatpush2.bf16.msra.mxu0 0
        %1678 = vmatprep.subr.bf16.mxu0 0
        %1679 = vmatpush2.bf16.msra.mxu0 0
        %1680 = vmatprep.subr.bf16.mxu0 0
        %1681 = vmatpush2.bf16.msra.mxu0 0
        %1682 = vmatprep.subr.bf16.mxu0 0
        %1683 = vmatpush2.bf16.msra.mxu0 0
        %1684 = vmatprep.subr.bf16.mxu0 0
        %1685 = vmatpush2.bf16.msra.mxu0 0
        %1686 = vmatprep.subr.bf16.mxu0 0
        %1687 = vmatpush2.bf16.msra.mxu0 0
        %1688 = vmatprep.mubr.bf16.mxu0 0
        %1689 = vmatmul.mubr.bf16.gmra.mxu0 %v1335
        %v1690 = vpop.f32.mrf.mxu0
        %v1691 = vadd.f32 %v1642, %v1690
        %v1692 = vpop.f32.mrf.mxu0
        %v1693 = vpop.f32.mrf.mxu0
        %v1694 = vadd.f32 %v1642, %v1693
        %v1695 = vpop.f32.mrf.mxu0
        %1696 = vdwg.mxu0
        %s1697 = scalar_lea.vmem %s952, 16
        %v1698 = vld [vmem:[%s1697] sm:$0xf]
        %v1699 = vld [vmem:[%s1697 + $0x4] sm:$0xf]
        %v1700 = vld [vmem:[%s1697 + $0x8] sm:$0xf]
        %v1701 = vld [vmem:[%s1697 + $0xc] sm:$0xf]
        %s1702 = scalar_lea.vmem %s965, 1
        %v1703 = vld [vmem:[%s1702] sm:$0x1]
        %v1705 = vlaneseq
        %v1706 = vshrl.u32 %v1705, 7
        %v1707 = vsub.s32 0, %v1706
        %v1708 = vrot.slane %v1703, %v1707
        %v1714 = vunpack.c.l.b16 %v1698
        %v1715 = vunpack.c.l.b16 %v1699
        %v1716 = vunpack.c.l.b16 %v1700
        %v1717 = vunpack.c.l.b16 %v1701
        %v1718 = vpack.c.b16 %v1715, %v1714
        %v1719 = vpack.c.b16 %v1717, %v1716
        %1722 = vmatprep.subr.bf16.mxu0 0
        %1723 = vmatpush1.bf16.msra.mxu0 0
        %1724 = vmatprep.subr.bf16.mxu0 0
        %1725 = vmatpush1.bf16.msra.mxu0 0
        %1726 = vmatprep.subr.bf16.mxu0 0
        %1727 = vmatpush1.bf16.msra.mxu0 0
        %1728 = vmatprep.subr.bf16.mxu0 0
        %1729 = vmatpush1.bf16.msra.mxu0 0
        %1730 = vmatprep.subr.bf16.mxu0 0
        %1731 = vmatpush1.bf16.msra.mxu0 0
        %1732 = vmatprep.subr.bf16.mxu0 0
        %1733 = vmatpush1.bf16.msra.mxu0 0
        %1734 = vmatprep.subr.bf16.mxu0 0
        %1735 = vmatpush1.bf16.msra.mxu0 %v1719
        %1736 = vmatprep.subr.bf16.mxu0 0
        %1737 = vmatpush1.bf16.msra.mxu0 %v1718
        %1738 = vmatprep.subr.bf16.mxu0 0
        %1739 = vmatpush2.bf16.msra.mxu0 0
        %1740 = vmatprep.subr.bf16.mxu0 0
        %1741 = vmatpush2.bf16.msra.mxu0 0
        %1742 = vmatprep.subr.bf16.mxu0 0
        %1743 = vmatpush2.bf16.msra.mxu0 0
        %1744 = vmatprep.subr.bf16.mxu0 0
        %1745 = vmatpush2.bf16.msra.mxu0 0
        %1746 = vmatprep.subr.bf16.mxu0 0
        %1747 = vmatpush2.bf16.msra.mxu0 0
        %1748 = vmatprep.subr.bf16.mxu0 0
        %1749 = vmatpush2.bf16.msra.mxu0 0
        %1750 = vmatprep.subr.bf16.mxu0 0
        %1751 = vmatpush2.bf16.msra.mxu0 0
        %1752 = vmatprep.subr.bf16.mxu0 0
        %1753 = vmatpush2.bf16.msra.mxu0 0
        %1754 = vmatprep.mubr.bf16.mxu0 0
        %1755 = vmatmul.mubr.bf16.gmra.mxu0 %v1335
        %v1756 = vpop.f32.mrf.mxu0
        %v1757 = vadd.f32 %v1708, %v1756
        %v1758 = vpop.f32.mrf.mxu0
        %v1759 = vpop.f32.mrf.mxu0
        %v1760 = vadd.f32 %v1708, %v1759
        %v1761 = vpop.f32.mrf.mxu0
        %1762 = vdwg.mxu0
        %s1763 = scalar_lea.vmem %s957, 16
        %v1764 = vld [vmem:[%s1763] sm:$0xf]
        %v1765 = vld [vmem:[%s1763 + $0x4] sm:$0xf]
        %v1766 = vld [vmem:[%s1763 + $0x8] sm:$0xf]
        %v1767 = vld [vmem:[%s1763 + $0xc] sm:$0xf]
        %s1768 = scalar_lea.vmem %s969, 1
        %v1769 = vld [vmem:[%s1768] sm:$0x1]
        %v1771 = vlaneseq
        %v1772 = vshrl.u32 %v1771, 7
        %v1773 = vsub.s32 0, %v1772
        %v1774 = vrot.slane %v1769, %v1773
        %v1780 = vunpack.c.l.b16 %v1764
        %v1781 = vunpack.c.l.b16 %v1765
        %v1782 = vunpack.c.l.b16 %v1766
        %v1783 = vunpack.c.l.b16 %v1767
        %v1784 = vpack.c.b16 %v1781, %v1780
        %v1785 = vpack.c.b16 %v1783, %v1782
        %1788 = vmatprep.subr.bf16.mxu0 0
        %1789 = vmatpush1.bf16.msra.mxu0 0
        %1790 = vmatprep.subr.bf16.mxu0 0
        %1791 = vmatpush1.bf16.msra.mxu0 0
        %1792 = vmatprep.subr.bf16.mxu0 0
        %1793 = vmatpush1.bf16.msra.mxu0 0
        %1794 = vmatprep.subr.bf16.mxu0 0
        %1795 = vmatpush1.bf16.msra.mxu0 0
        %1796 = vmatprep.subr.bf16.mxu0 0
        %1797 = vmatpush1.bf16.msra.mxu0 0
        %1798 = vmatprep.subr.bf16.mxu0 0
        %1799 = vmatpush1.bf16.msra.mxu0 0
        %1800 = vmatprep.subr.bf16.mxu0 0
        %1801 = vmatpush1.bf16.msra.mxu0 %v1785
        %1802 = vmatprep.subr.bf16.mxu0 0
        %1803 = vmatpush1.bf16.msra.mxu0 %v1784
        %1804 = vmatprep.subr.bf16.mxu0 0
        %1805 = vmatpush2.bf16.msra.mxu0 0
        %1806 = vmatprep.subr.bf16.mxu0 0
        %1807 = vmatpush2.bf16.msra.mxu0 0
        %1808 = vmatprep.subr.bf16.mxu0 0
        %1809 = vmatpush2.bf16.msra.mxu0 0
        %1810 = vmatprep.subr.bf16.mxu0 0
        %1811 = vmatpush2.bf16.msra.mxu0 0
        %1812 = vmatprep.subr.bf16.mxu0 0
        %1813 = vmatpush2.bf16.msra.mxu0 0
        %1814 = vmatprep.subr.bf16.mxu0 0
        %1815 = vmatpush2.bf16.msra.mxu0 0
        %1816 = vmatprep.subr.bf16.mxu0 0
        %1817 = vmatpush2.bf16.msra.mxu0 0
        %1818 = vmatprep.subr.bf16.mxu0 0
        %1819 = vmatpush2.bf16.msra.mxu0 0
        %1820 = vmatprep.mubr.bf16.mxu0 0
        %1821 = vmatmul.mubr.bf16.gmra.mxu0 %v1335
        %v1822 = vpop.f32.mrf.mxu0
        %v1823 = vadd.f32 %v1774, %v1822
        %v1824 = vpop.f32.mrf.mxu0
        %v1825 = vpop.f32.mrf.mxu0
        %v1826 = vadd.f32 %v1774, %v1825
        %v1827 = vpop.f32.mrf.mxu0
        %1828 = vdwg.mxu0
        %v1829 = vpack.c.bf16 %v1694, %v1691
        %v1830 = vpack.c.bf16 %v1760, %v1757
        %v1832 = vsel %vm1508, %v1829, 0
        %v1835 = vsel %vm1508, %v1830, 0
        %1837 = vmatprep.subr.bf16.mxu0 0
        %1838 = vmatpush1.bf16.xpose.msra.mxu0 0
        %1839 = vmatprep.subr.bf16.mxu0 0
        %1840 = vmatpush1.bf16.xpose.msra.mxu0 0
        %1841 = vmatprep.subr.bf16.mxu0 0
        %1842 = vmatpush1.bf16.xpose.msra.mxu0 0
        %1843 = vmatprep.subr.bf16.mxu0 0
        %1844 = vmatpush1.bf16.xpose.msra.mxu0 0
        %1845 = vmatprep.subr.bf16.mxu0 0
        %1846 = vmatpush1.bf16.xpose.msra.mxu0 0
        %1847 = vmatprep.subr.bf16.mxu0 0
        %1848 = vmatpush1.bf16.xpose.msra.mxu0 0
        %1849 = vmatprep.subr.bf16.mxu0 0
        %1850 = vmatpush1.bf16.xpose.msra.mxu0 0
        %1851 = vmatprep.subr.bf16.mxu0 0
        %1852 = vmatpush1.bf16.xpose.msra.mxu0 %v1835
        %1853 = vmatprep.subr.bf16.mxu0 0
        %1854 = vmatpush2.bf16.xpose.msra.mxu0 0
        %1855 = vmatprep.subr.bf16.mxu0 0
        %1856 = vmatpush2.bf16.xpose.msra.mxu0 0
        %1857 = vmatprep.subr.bf16.mxu0 0
        %1858 = vmatpush2.bf16.xpose.msra.mxu0 0
        %1859 = vmatprep.subr.bf16.mxu0 0
        %1860 = vmatpush2.bf16.xpose.msra.mxu0 0
        %1861 = vmatprep.subr.bf16.mxu0 0
        %1862 = vmatpush2.bf16.xpose.msra.mxu0 0
        %1863 = vmatprep.subr.bf16.mxu0 0
        %1864 = vmatpush2.bf16.xpose.msra.mxu0 0
        %1865 = vmatprep.subr.bf16.mxu0 0
        %1866 = vmatpush2.bf16.xpose.msra.mxu0 0
        %1867 = vmatprep.subr.bf16.mxu0 0
        %1868 = vmatpush2.bf16.xpose.msra.mxu0 0
        %1869 = vmatprep.mubr.bf16.mxu0 0
        %1870 = vmatmul.mubr.bf16.gmra.mxu0 %v1832
        %v1871 = vpop.f32.mrf.mxu0
        %v1872 = vadd.f32 0.0, %v1871
        %v1873 = vpop.f32.mrf.mxu0
        %v1874 = vpop.f32.mrf.mxu0
        %v1875 = vadd.f32 0.0, %v1874
        %v1876 = vpop.f32.mrf.mxu0
        %1877 = vdwg.mxu0
        %v1878 = vmul.f32 %v1872, 0.25
        %v1879 = vmul.f32 %v1875, 0.25
        %v1880 = vadd.f32 %v1878, %v1262
        %v1881 = vadd.f32 %v1879, %v1263
        %v1882 = vsel %vm1508, %v1880, -inf
        %1883 = vmax.xlane.f32.xlu0 %v1882
        %v1884 = vpop.xlane.xlu0 %1883
        %v1885 = vsel %vm1508, %v1881, -inf
        %1886 = vmax.xlane.f32.xlu0 %v1885
        %v1887 = vpop.xlane.xlu0 %1886
        %v1888 = vsub.f32 %v1880, %v1884
        %v1889 = vsub.f32 %v1881, %v1887
        %v1890 = vmul.f32 %v1888, 1.442695
        %v1891 = vpow.pop %v1890
        %v1892 = vmul.f32 %v1889, 1.442695
        %v1893 = vpow.pop %v1892
        %v1894 = vsel %vm1508, %v1891, 0.0
        %1895 = vadd.xlane.f32.xlu0 %v1894
        %v1896 = vpop.xlane.xlu0 %1895
        %v1897 = vsel %vm1508, %v1893, 0.0
        %1898 = vadd.xlane.f32.xlu0 %v1897
        %v1899 = vpop.xlane.xlu0 %1898
        %v1900 = vrcp.pop %v1896
        %v1901 = vrcp.pop %v1899
        %v1902 = vmul.f32 %v1891, %v1900
        %v1903 = vmul.f32 %v1893, %v1901
        %v1904 = vpack.c.bf16 %v1903, %v1902
        %v1905 = vpack.c.bf16 %v1826, %v1823
        %v1907 = vsel %vm1508, %v1904, 0
        %1909 = vmatprep.subr.bf16.mxu0 0
        %1910 = vmatpush1.bf16.msra.mxu0 0
        %1911 = vmatprep.subr.bf16.mxu0 0
        %1912 = vmatpush1.bf16.msra.mxu0 0
        %1913 = vmatprep.subr.bf16.mxu0 0
        %1914 = vmatpush1.bf16.msra.mxu0 0
        %1915 = vmatprep.subr.bf16.mxu0 0
        %1916 = vmatpush1.bf16.msra.mxu0 0
        %1917 = vmatprep.subr.bf16.mxu0 0
        %1918 = vmatpush1.bf16.msra.mxu0 0
        %1919 = vmatprep.subr.bf16.mxu0 0
        %1920 = vmatpush1.bf16.msra.mxu0 0
        %1921 = vmatprep.subr.bf16.mxu0 0
        %1922 = vmatpush1.bf16.msra.mxu0 0
        %1923 = vmatprep.subr.bf16.mxu0 0
        %1924 = vmatpush1.bf16.msra.mxu0 %v1905
        %1925 = vmatprep.subr.bf16.mxu0 0
        %1926 = vmatpush2.bf16.msra.mxu0 0
        %1927 = vmatprep.subr.bf16.mxu0 0
        %1928 = vmatpush2.bf16.msra.mxu0 0
        %1929 = vmatprep.subr.bf16.mxu0 0
        %1930 = vmatpush2.bf16.msra.mxu0 0
        %1931 = vmatprep.subr.bf16.mxu0 0
        %1932 = vmatpush2.bf16.msra.mxu0 0
        %1933 = vmatprep.subr.bf16.mxu0 0
        %1934 = vmatpush2.bf16.msra.mxu0 0
        %1935 = vmatprep.subr.bf16.mxu0 0
        %1936 = vmatpush2.bf16.msra.mxu0 0
        %1937 = vmatprep.subr.bf16.mxu0 0
        %1938 = vmatpush2.bf16.msra.mxu0 0
        %1939 = vmatprep.subr.bf16.mxu0 0
        %1940 = vmatpush2.bf16.msra.mxu0 0
        %1941 = vmatprep.mubr.bf16.mxu0 0
        %1942 = vmatmul.mubr.bf16.gmra.mxu0 %v1907
        %v1943 = vpop.f32.mrf.mxu0
        %v1944 = vadd.f32 0.0, %v1943
        %v1945 = vpop.f32.mrf.mxu0
        %v1946 = vpop.f32.mrf.mxu0
        %v1947 = vadd.f32 0.0, %v1946
        %v1948 = vpop.f32.mrf.mxu0
        %1949 = vdwg.mxu0
        %v1950 = vpack.c.bf16 %v1947, %v1944
        %s1951 = scalar_lea.vmem %s974, 8
        %v1952 = vld [vmem:[%s1951] sm:$0xf]
        %v1953 = vld [vmem:[%s1951 + $0x4] sm:$0xf]
        %v1956 = vunpack.c.l.b16 %v1952
        %v1957 = vunpack.c.l.b16 %v1953
        %v1958 = vpack.c.b16 %v1957, %v1956
        %v1961 = vsel %vm1508, %v1950, 0
        %1963 = vmatprep.subr.bf16.mxu0 0
        %1964 = vmatpush1.bf16.msra.mxu0 0
        %1965 = vmatprep.subr.bf16.mxu0 0
        %1966 = vmatpush1.bf16.msra.mxu0 0
        %1967 = vmatprep.subr.bf16.mxu0 0
        %1968 = vmatpush1.bf16.msra.mxu0 0
        %1969 = vmatprep.subr.bf16.mxu0 0
        %1970 = vmatpush1.bf16.msra.mxu0 0
        %1971 = vmatprep.subr.bf16.mxu0 0
        %1972 = vmatpush1.bf16.msra.mxu0 0
        %1973 = vmatprep.subr.bf16.mxu0 0
        %1974 = vmatpush1.bf16.msra.mxu0 0
        %1975 = vmatprep.subr.bf16.mxu0 0
        %1976 = vmatpush1.bf16.msra.mxu0 0
        %1977 = vmatprep.subr.bf16.mxu0 0
        %1978 = vmatpush1.bf16.msra.mxu0 %v1958
        %1979 = vmatprep.subr.bf16.mxu0 0
        %1980 = vmatpush2.bf16.msra.mxu0 0
        %1981 = vmatprep.subr.bf16.mxu0 0
        %1982 = vmatpush2.bf16.msra.mxu0 0
        %1983 = vmatprep.subr.bf16.mxu0 0
        %1984 = vmatpush2.bf16.msra.mxu0 0
        %1985 = vmatprep.subr.bf16.mxu0 0
        %1986 = vmatpush2.bf16.msra.mxu0 0
        %1987 = vmatprep.subr.bf16.mxu0 0
        %1988 = vmatpush2.bf16.msra.mxu0 0
        %1989 = vmatprep.subr.bf16.mxu0 0
        %1990 = vmatpush2.bf16.msra.mxu0 0
        %1991 = vmatprep.subr.bf16.mxu0 0
        %1992 = vmatpush2.bf16.msra.mxu0 0
        %1993 = vmatprep.subr.bf16.mxu0 0
        %1994 = vmatpush2.bf16.msra.mxu0 0
        %1995 = vmatprep.mubr.bf16.mxu0 0
        %1996 = vmatmul.mubr.bf16.gmra.mxu0 %v1961
        %v1997 = vpop.f32.mrf.mxu0
        %v1998 = vadd.f32 0.0, %v1997
        %v1999 = vpop.f32.mrf.mxu0
        %v2000 = vpop.f32.mrf.mxu0
        %v2001 = vadd.f32 0.0, %v2000
        %v2002 = vpop.f32.mrf.mxu0
        %2003 = vdwg.mxu0
        %v2006 = vunpack.c.l.b16 %v1629
        %v2007 = vunpack.c.l.b16 %v1630
        %v2008 = vpack.c.b16 %v2007, %v2006
        %v2011 = vsel %vm1508, %v1628, 0
        %2013 = vmatprep.subr.bf16.mxu0 0
        %2014 = vmatpush1.bf16.msra.mxu0 0
        %2015 = vmatprep.subr.bf16.mxu0 0
        %2016 = vmatpush1.bf16.msra.mxu0 0
        %2017 = vmatprep.subr.bf16.mxu0 0
        %2018 = vmatpush1.bf16.msra.mxu0 0
        %2019 = vmatprep.subr.bf16.mxu0 0
        %2020 = vmatpush1.bf16.msra.mxu0 0
        %2021 = vmatprep.subr.bf16.mxu0 0
        %2022 = vmatpush1.bf16.msra.mxu0 0
        %2023 = vmatprep.subr.bf16.mxu0 0
        %2024 = vmatpush1.bf16.msra.mxu0 0
        %2025 = vmatprep.subr.bf16.mxu0 0
        %2026 = vmatpush1.bf16.msra.mxu0 0
        %2027 = vmatprep.subr.bf16.mxu0 0
        %2028 = vmatpush1.bf16.msra.mxu0 %v2008
        %2029 = vmatprep.subr.bf16.mxu0 0
        %2030 = vmatpush2.bf16.msra.mxu0 0
        %2031 = vmatprep.subr.bf16.mxu0 0
        %2032 = vmatpush2.bf16.msra.mxu0 0
        %2033 = vmatprep.subr.bf16.mxu0 0
        %2034 = vmatpush2.bf16.msra.mxu0 0
        %2035 = vmatprep.subr.bf16.mxu0 0
        %2036 = vmatpush2.bf16.msra.mxu0 0
        %2037 = vmatprep.subr.bf16.mxu0 0
        %2038 = vmatpush2.bf16.msra.mxu0 0
        %2039 = vmatprep.subr.bf16.mxu0 0
        %2040 = vmatpush2.bf16.msra.mxu0 0
        %2041 = vmatprep.subr.bf16.mxu0 0
        %2042 = vmatpush2.bf16.msra.mxu0 0
        %2043 = vmatprep.subr.bf16.mxu0 0
        %2044 = vmatpush2.bf16.msra.mxu0 0
        %2045 = vmatprep.mubr.bf16.mxu0 0
        %2046 = vmatmul.mubr.bf16.gmra.mxu0 %v2011
        %v2047 = vpop.f32.mrf.mxu0
        %v2048 = vadd.f32 %v1998, %v2047
        %v2049 = vpop.f32.mrf.mxu0
        %v2050 = vpop.f32.mrf.mxu0
        %v2051 = vadd.f32 %v2001, %v2050
        %v2052 = vpop.f32.mrf.mxu0
        %2053 = vdwg.mxu0
        %v2054 = vadd.f32 %v1236, %v2048
        %v2055 = vadd.f32 %v1237, %v2051
        %v2056 = vld [vmem:[%s977] sm:$0x1]
        %v2058 = vlaneseq
        %v2059 = vshrl.u32 %v2058, 7
        %v2060 = vsub.s32 0, %v2059
        %v2061 = vrot.slane %v2056, %v2060
        %v2063 = vadd.f32 %v2054, %v2061
        %v2064 = vadd.f32 %v2055, %v2061
        %v2065 = vld [vmem:[%s980] sm:$0x1]
        %v2066 = vld [vmem:[%s983] sm:$0x1]
        %v2067 = vsel %vm1266, %v2063, 0.0
        %2068 = vadd.xlane.f32.xlu0 %v2067
        %v2069 = vpop.xlane.xlu0 %2068
        %v2070 = vsel %vm1266, %v2064, 0.0
        %2071 = vadd.xlane.f32.xlu0 %v2070
        %v2072 = vpop.xlane.xlu0 %2071
        %v2073 = vmul.f32 %v2069, %v1273
        %v2074 = vmul.f32 %v2072, %v1273
        %v2075 = vsub.f32 %v2063, %v2073
        %v2076 = vsub.f32 %v2064, %v2074
        %v2077 = vmul.f32 %v2075, %v2075
        %v2078 = vmul.f32 %v2076, %v2076
        %v2079 = vsel %vm1266, %v2077, 0.0
        %2080 = vadd.xlane.f32.xlu0 %v2079
        %v2081 = vpop.xlane.xlu0 %2080
        %v2082 = vsel %vm1266, %v2078, 0.0
        %2083 = vadd.xlane.f32.xlu0 %v2082
        %v2084 = vpop.xlane.xlu0 %2083
        %v2085 = vmul.f32 %v2081, %v1273
        %v2086 = vmul.f32 %v2084, %v1273
        %v2087 = vadd.f32 %v2085, 1e-05
        %v2088 = vadd.f32 %v2086, 1e-05
        %v2089 = vrsqrt.pop %v2087
        %v2090 = vrsqrt.pop %v2088
        %v2091 = vmul.f32 %v2075, %v2089
        %v2092 = vmul.f32 %v2076, %v2090
        %v2094 = vlaneseq
        %v2095 = vshrl.u32 %v2094, 7
        %v2096 = vsub.s32 0, %v2095
        %v2097 = vrot.slane %v2065, %v2096
        %v2099 = vmul.f32 %v2091, %v2097
        %v2100 = vmul.f32 %v2092, %v2097
        %v2102 = vlaneseq
        %v2103 = vshrl.u32 %v2102, 7
        %v2104 = vsub.s32 0, %v2103
        %v2105 = vrot.slane %v2066, %v2104
        %v2107 = vadd.f32 %v2099, %v2105
        %v2108 = vadd.f32 %v2100, %v2105
        %v2109 = vpack.c.bf16 %v2108, %v2107
        %v2110 = vld [vmem:[%s988] sm:$0xf]
        %v2111 = vld [vmem:[%s988 + $0x4] sm:$0xf]
        %v2112 = vld [vmem:[%s988 + $0x8] sm:$0xf]
        %v2113 = vld [vmem:[%s988 + $0xc] sm:$0xf]
        %v2114 = vld [vmem:[%s991] sm:$0x1]
        %v2116 = vlaneseq
        %v2117 = vshrl.u32 %v2116, 7
        %v2118 = vsub.s32 0, %v2117
        %v2119 = vrot.slane %v2114, %v2118
        %v2125 = vunpack.c.l.b16 %v2110
        %v2126 = vunpack.c.l.b16 %v2111
        %v2127 = vunpack.c.l.b16 %v2112
        %v2128 = vunpack.c.l.b16 %v2113
        %v2129 = vpack.c.b16 %v2126, %v2125
        %v2130 = vpack.c.b16 %v2128, %v2127
        %v2134 = vsel %vm1266, %v2109, 0
        %2136 = vmatprep.subr.bf16.mxu0 0
        %2137 = vmatpush1.bf16.msra.mxu0 0
        %2138 = vmatprep.subr.bf16.mxu0 0
        %2139 = vmatpush1.bf16.msra.mxu0 0
        %2140 = vmatprep.subr.bf16.mxu0 0
        %2141 = vmatpush1.bf16.msra.mxu0 0
        %2142 = vmatprep.subr.bf16.mxu0 0
        %2143 = vmatpush1.bf16.msra.mxu0 0
        %2144 = vmatprep.subr.bf16.mxu0 0
        %2145 = vmatpush1.bf16.msra.mxu0 0
        %2146 = vmatprep.subr.bf16.mxu0 0
        %2147 = vmatpush1.bf16.msra.mxu0 0
        %2148 = vmatprep.subr.bf16.mxu0 0
        %2149 = vmatpush1.bf16.msra.mxu0 %v2130
        %2150 = vmatprep.subr.bf16.mxu0 0
        %2151 = vmatpush1.bf16.msra.mxu0 %v2129
        %2152 = vmatprep.subr.bf16.mxu0 0
        %2153 = vmatpush2.bf16.msra.mxu0 0
        %2154 = vmatprep.subr.bf16.mxu0 0
        %2155 = vmatpush2.bf16.msra.mxu0 0
        %2156 = vmatprep.subr.bf16.mxu0 0
        %2157 = vmatpush2.bf16.msra.mxu0 0
        %2158 = vmatprep.subr.bf16.mxu0 0
        %2159 = vmatpush2.bf16.msra.mxu0 0
        %2160 = vmatprep.subr.bf16.mxu0 0
        %2161 = vmatpush2.bf16.msra.mxu0 0
        %2162 = vmatprep.subr.bf16.mxu0 0
        %2163 = vmatpush2.bf16.msra.mxu0 0
        %2164 = vmatprep.subr.bf16.mxu0 0
        %2165 = vmatpush2.bf16.msra.mxu0 0
        %2166 = vmatprep.subr.bf16.mxu0 0
        %2167 = vmatpush2.bf16.msra.mxu0 0
        %2168 = vmatprep.mubr.bf16.mxu0 0
        %2169 = vmatmul.mubr.bf16.gmra.mxu0 %v2134
        %v2170 = vpop.f32.mrf.mxu0
        %v2171 = vadd.f32 %v2119, %v2170
        %v2172 = vpop.f32.mrf.mxu0
        %v2173 = vpop.f32.mrf.mxu0
        %v2174 = vadd.f32 %v2119, %v2173
        %v2175 = vpop.f32.mrf.mxu0
        %2176 = vdwg.mxu0
        %v2177 = vmul.f32 %v2171, 0.5
        %v2178 = vmul.f32 %v2174, 0.5
        %v2179 = vmul.f32 %v2171, 0.044715
        %v2180 = vmul.f32 %v2174, 0.044715
        %v2181 = vmul.f32 %v2179, %v2171
        %v2182 = vmul.f32 %v2180, %v2174
        %v2183 = vmul.f32 %v2181, %v2171
        %v2184 = vmul.f32 %v2182, %v2174
        %v2185 = vadd.f32 %v2171, %v2183
        %v2186 = vadd.f32 %v2174, %v2184
        %v2187 = vmul.f32 %v2185, 0.7978846
        %v2188 = vmul.f32 %v2186, 0.7978846
        %v2189 = vtanh.pop %v2187
        %v2190 = vtanh.pop %v2188
        %v2191 = vadd.f32 %v2189, 1.0
        %v2192 = vadd.f32 %v2190, 1.0
        %v2193 = vmul.f32 %v2177, %v2191
        %v2194 = vmul.f32 %v2178, %v2192
        %v2195 = vpack.c.bf16 %v2194, %v2193
        %v2196 = vld [vmem:[%s996] sm:$0xf]
        %v2197 = vld [vmem:[%s996 + $0x4] sm:$0xf]
        %v2198 = vld [vmem:[%s996 + $0x8] sm:$0xf]
        %v2199 = vld [vmem:[%s996 + $0xc] sm:$0xf]
        %v2200 = vld [vmem:[%s996 + $0x10] sm:$0xf]
        %v2201 = vld [vmem:[%s996 + $0x14] sm:$0xf]
        %v2202 = vld [vmem:[%s996 + $0x18] sm:$0xf]
        %v2203 = vld [vmem:[%s996 + $0x1c] sm:$0xf]
        %v2204 = vld [vmem:[%s996 + $0x20] sm:$0xf]
        %v2205 = vld [vmem:[%s996 + $0x24] sm:$0xf]
        %v2206 = vld [vmem:[%s996 + $0x28] sm:$0xf]
        %v2207 = vld [vmem:[%s996 + $0x2c] sm:$0xf]
        %v2208 = vld [vmem:[%s996 + $0x30] sm:$0xf]
        %v2209 = vld [vmem:[%s996 + $0x34] sm:$0xf]
        %v2210 = vld [vmem:[%s996 + $0x38] sm:$0xf]
        %v2211 = vld [vmem:[%s996 + $0x3c] sm:$0xf]
        %v2212 = vld [vmem:[%s999] sm:$0x1]
        %v2214 = vlaneseq
        %v2215 = vshrl.u32 %v2214, 7
        %v2216 = vsub.s32 0, %v2215
        %v2217 = vrot.slane %v2212, %v2216
        %v2235 = vunpack.c.l.b16 %v2196
        %v2236 = vunpack.c.l.b16 %v2197
        %v2237 = vunpack.c.l.b16 %v2198
        %v2238 = vunpack.c.l.b16 %v2199
        %v2239 = vunpack.c.l.b16 %v2200
        %v2240 = vunpack.c.l.b16 %v2201
        %v2241 = vunpack.c.l.b16 %v2202
        %v2242 = vunpack.c.l.b16 %v2203
        %v2243 = vunpack.c.l.b16 %v2204
        %v2244 = vunpack.c.l.b16 %v2205
        %v2245 = vunpack.c.l.b16 %v2206
        %v2246 = vunpack.c.l.b16 %v2207
        %v2247 = vunpack.c.l.b16 %v2208
        %v2248 = vunpack.c.l.b16 %v2209
        %v2249 = vunpack.c.l.b16 %v2210
        %v2250 = vunpack.c.l.b16 %v2211
        %v2251 = vpack.c.b16 %v2236, %v2235
        %v2252 = vpack.c.b16 %v2238, %v2237
        %v2253 = vpack.c.b16 %v2240, %v2239
        %v2254 = vpack.c.b16 %v2242, %v2241
        %v2255 = vpack.c.b16 %v2244, %v2243
        %v2256 = vpack.c.b16 %v2246, %v2245
        %v2257 = vpack.c.b16 %v2248, %v2247
        %v2258 = vpack.c.b16 %v2250, %v2249
        %2267 = vmatprep.subr.bf16.mxu0 0
        %2268 = vmatpush1.bf16.msra.mxu0 %v2258
        %2269 = vmatprep.subr.bf16.mxu0 0
        %2270 = vmatpush1.bf16.msra.mxu0 %v2257
        %2271 = vmatprep.subr.bf16.mxu0 0
        %2272 = vmatpush1.bf16.msra.mxu0 %v2256
        %2273 = vmatprep.subr.bf16.mxu0 0
        %2274 = vmatpush1.bf16.msra.mxu0 %v2255
        %2275 = vmatprep.subr.bf16.mxu0 0
        %2276 = vmatpush1.bf16.msra.mxu0 %v2254
        %2277 = vmatprep.subr.bf16.mxu0 0
        %2278 = vmatpush1.bf16.msra.mxu0 %v2253
        %2279 = vmatprep.subr.bf16.mxu0 0
        %2280 = vmatpush1.bf16.msra.mxu0 %v2252
        %2281 = vmatprep.subr.bf16.mxu0 0
        %2282 = vmatpush1.bf16.msra.mxu0 %v2251
        %2283 = vmatprep.subr.bf16.mxu0 0
        %2284 = vmatpush2.bf16.msra.mxu0 0
        %2285 = vmatprep.subr.bf16.mxu0 0
        %2286 = vmatpush2.bf16.msra.mxu0 0
        %2287 = vmatprep.subr.bf16.mxu0 0
        %2288 = vmatpush2.bf16.msra.mxu0 0
        %2289 = vmatprep.subr.bf16.mxu0 0
        %2290 = vmatpush2.bf16.msra.mxu0 0
        %2291 = vmatprep.subr.bf16.mxu0 0
        %2292 = vmatpush2.bf16.msra.mxu0 0
        %2293 = vmatprep.subr.bf16.mxu0 0
        %2294 = vmatpush2.bf16.msra.mxu0 0
        %2295 = vmatprep.subr.bf16.mxu0 0
        %2296 = vmatpush2.bf16.msra.mxu0 0
        %2297 = vmatprep.subr.bf16.mxu0 0
        %2298 = vmatpush2.bf16.msra.mxu0 0
        %2299 = vmatprep.mubr.bf16.mxu0 0
        %2300 = vmatmul.mubr.bf16.gmra.mxu0 %v2195
        %v2301 = vpop.f32.mrf.mxu0
        %v2302 = vadd.f32 %v2217, %v2301
        %v2303 = vpop.f32.mrf.mxu0
        %v2304 = vpop.f32.mrf.mxu0
        %v2305 = vadd.f32 %v2217, %v2304
        %v2306 = vpop.f32.mrf.mxu0
        %2307 = vdwg.mxu0
        %v2308 = vadd.f32 %v2063, %v2302
        %v2309 = vadd.f32 %v2064, %v2305
        %2310 = vst.msk [vmem:[#allocation2] sm:$0xff] %vm1266, %v2308
        %2311 = vst.msk [vmem:[#allocation2 + $0x8] sm:$0xff] %vm1266, %v2309
        %p2312 = scmp.eq.s32.totalorder %s37, 1
        // Predicated region
        $region125: #{gpt_forward.1} parent=119 // pred_check
          %p2313 = pneg %p2312
        $region126: #{gpt_forward.1} parent=119 // pred_check_branch
          %2315 = sbr.rel (%p2313) target = $region128
        $region127: #{gpt_forward.1} parent=119 // pred_region
          %v2316 = vld [vmem:[%s22] sm:$0x1]
          %v2317 = vld [vmem:[%s23] sm:$0x1]
          %v2318 = vsel %vm1266, %v2308, 0.0
          %2319 = vadd.xlane.f32.xlu0 %v2318
          %v2320 = vpop.xlane.xlu0 %2319
          %v2321 = vsel %vm1266, %v2309, 0.0
          %2322 = vadd.xlane.f32.xlu0 %v2321
          %v2323 = vpop.xlane.xlu0 %2322
          %v2324 = vmul.f32 %v2320, %v1273
          %v2325 = vmul.f32 %v2323, %v1273
          %v2326 = vsub.f32 %v2308, %v2324
          %v2327 = vsub.f32 %v2309, %v2325
          %v2328 = vmul.f32 %v2326, %v2326
          %v2329 = vmul.f32 %v2327, %v2327
          %v2330 = vsel %vm1266, %v2328, 0.0
          %2331 = vadd.xlane.f32.xlu0 %v2330
          %v2332 = vpop.xlane.xlu0 %2331
          %v2333 = vsel %vm1266, %v2329, 0.0
          %2334 = vadd.xlane.f32.xlu0 %v2333
          %v2335 = vpop.xlane.xlu0 %2334
          %v2336 = vmul.f32 %v2332, %v1273
          %v2337 = vmul.f32 %v2335, %v1273
          %v2338 = vadd.f32 %v2336, 1e-05
          %v2339 = vadd.f32 %v2337, 1e-05
          %v2340 = vrsqrt.pop %v2338
          %v2341 = vrsqrt.pop %v2339
          %v2342 = vmul.f32 %v2326, %v2340
          %v2343 = vmul.f32 %v2327, %v2341
          %v2345 = vlaneseq
          %v2346 = vshrl.u32 %v2345, 7
          %v2347 = vsub.s32 0, %v2346
          %v2348 = vrot.slane %v2316, %v2347
          %v2350 = vmul.f32 %v2342, %v2348
          %v2351 = vmul.f32 %v2343, %v2348
          %v2353 = vlaneseq
          %v2354 = vshrl.u32 %v2353, 7
          %v2355 = vsub.s32 0, %v2354
          %v2356 = vrot.slane %v2317, %v2355
          %v2358 = vadd.f32 %v2350, %v2356
          %v2359 = vadd.f32 %v2351, %v2356
          %v2360 = vpack.c.bf16 %v2359, %v2358
          %v2361 = vld [vmem:[%s24] sm:$0xff]
          %v2362 = vld [vmem:[%s24 + $0x8] sm:$0xff]
          %v2363 = vld [vmem:[%s24 + $0x10] sm:$0xff]
          %v2364 = vld [vmem:[%s24 + $0x18] sm:$0xff]
          %v2369 = vunpack.c.l.b16 %v2361
          %v2370 = vunpack.c.h.b16 %v2361
          %v2371 = vunpack.c.l.b16 %v2362
          %v2372 = vunpack.c.h.b16 %v2362
          %v2373 = vunpack.c.l.b16 %v2363
          %v2374 = vunpack.c.h.b16 %v2363
          %v2375 = vunpack.c.l.b16 %v2364
          %v2376 = vunpack.c.h.b16 %v2364
          %v2377 = vpack.c.b16 %v2371, %v2369
          %v2378 = vpack.c.b16 %v2372, %v2370
          %v2379 = vpack.c.b16 %v2375, %v2373
          %v2380 = vpack.c.b16 %v2376, %v2374
          %v2386 = vsel %vm1266, %v2360, 0
          %2388 = vmatprep.subr.bf16.mxu0 0
          %2389 = vmatpush1.bf16.msra.mxu0 0
          %2390 = vmatprep.subr.bf16.mxu0 0
          %2391 = vmatpush1.bf16.msra.mxu0 0
          %2392 = vmatprep.subr.bf16.mxu0 0
          %2393 = vmatpush1.bf16.msra.mxu0 0
          %2394 = vmatprep.subr.bf16.mxu0 0
          %2395 = vmatpush1.bf16.msra.mxu0 0
          %2396 = vmatprep.subr.bf16.mxu0 0
          %2397 = vmatpush1.bf16.msra.mxu0 0
          %2398 = vmatprep.subr.bf16.mxu0 0
          %2399 = vmatpush1.bf16.msra.mxu0 0
          %2400 = vmatprep.subr.bf16.mxu0 %v2380
          %2401 = vmatpush1.bf16.msra.mxu0 %v2379
          %2402 = vmatprep.subr.bf16.mxu0 %v2378
          %2403 = vmatpush1.bf16.msra.mxu0 %v2377
          %2404 = vmatprep.subr.bf16.mxu0 0
          %2405 = vmatpush2.bf16.msra.mxu0 0
          %2406 = vmatprep.subr.bf16.mxu0 0
          %2407 = vmatpush2.bf16.msra.mxu0 0
          %2408 = vmatprep.subr.bf16.mxu0 0
          %2409 = vmatpush2.bf16.msra.mxu0 0
          %2410 = vmatprep.subr.bf16.mxu0 0
          %2411 = vmatpush2.bf16.msra.mxu0 0
          %2412 = vmatprep.subr.bf16.mxu0 0
          %2413 = vmatpush2.bf16.msra.mxu0 0
          %2414 = vmatprep.subr.bf16.mxu0 0
          %2415 = vmatpush2.bf16.msra.mxu0 0
          %2416 = vmatprep.subr.bf16.mxu0 0
          %2417 = vmatpush2.bf16.msra.mxu0 0
          %2418 = vmatprep.subr.bf16.mxu0 0
          %2419 = vmatpush2.bf16.msra.mxu0 0
          %2420 = vmatprep.mubr.bf16.mxu0 0
          %2421 = vmatmul.mubr.bf16.gmra.mxu0 %v2386
          %v2422 = vpop.f32.mrf.mxu0
          %v2423 = vadd.f32 0.0, %v2422
          %v2424 = vpop.f32.mrf.mxu0
          %v2425 = vadd.f32 0.0, %v2424
          %v2426 = vpop.f32.mrf.mxu0
          %v2427 = vadd.f32 0.0, %v2426
          %v2428 = vpop.f32.mrf.mxu0
          %v2429 = vadd.f32 0.0, %v2428
          %2430 = vdwg.mxu0
          %2431 = vst [vmem:[#allocation3] sm:$0xff] %v2423
          %2432 = vst [vmem:[#allocation3 + $0x8] sm:$0xff] %v2425
          %2433 = vst [vmem:[#allocation3 + $0x10] sm:$0xff] %v2427
          %2434 = vst [vmem:[#allocation3 + $0x18] sm:$0xff] %v2429
        $region128: #{gpt_forward.1} parent=119 // pred_fallthru
          _
        // Predicated region
        $region129: #{gpt_forward.1} parent=119 // pred_check
          %p2435 = pneg %p655
        $region130: #{gpt_forward.1} parent=119 // pred_check_branch
          %2437 = sbr.rel (%p2435) target = $region132
        $region131: #{gpt_forward.1} parent=119 // pred_region
          %s2439 = ssub.s32 512, 512
          %2440 = vsyncadd [#allocation4], %s2439
          %s2441 = sshll.u32 [#allocation3], 4
          %s2442 = int_to_ptr.vmem [resolvable:$true] %s2441
          %2447 = dma.vmem_to_hbm [thread:$0]  %s2442, 512, %s25, [#allocation4], 256, 256, 16
        $region132: #{gpt_forward.1} parent=119 // pred_fallthru
          _
        // Predicated region
        $region133: #{gpt_forward.1} parent=119 // pred_check
          %p2448 = pneg %p655
        $region134: #{gpt_forward.1} parent=119 // pred_check_branch
          %2450 = sbr.rel (%p2448) target = $region136
        $region135: #{gpt_forward.1} parent=119 // pred_region
          %2451 = dma.done [#allocation4], 512
        $region136: #{gpt_forward.1} parent=119 // pred_fallthru
          _
      $region120: #{gpt_forward.1} parent=5 // pred_fallthru
        _
      %p2452 = scmp.le.s32.totalorder 2, %s32
      // Predicated region
      $region137: #{gpt_forward.1} parent=5 // pred_check
        %p2453 = pneg %p2452
      $region138: #{gpt_forward.1} parent=5 // pred_check_branch
        %2455 = sbr.rel (%p2453) target = $region140
      $region139: #{gpt_forward.1} parent=5 // pred_region
        %s2456 = ssub.s32 %s32, 2
      $region140: #{gpt_forward.1} parent=5 // pred_fallthru
        _
    $region6: #{gpt_forward.1} parent=1 // loop_footer
      %s36 = sadd.s32 1, %s32
    $region7: #{gpt_forward.1} parent=1 // loop_footer_branch
      %31 = sbr.rel target = $region3
    $region8: #{gpt_forward.1} parent=1 // loop_exit
      _
    %2457 = vsyncpa [#allocation4], 1
    %s2458 = scalar_lea.sflag [#allocation4], 1
    %2459 = vsyncpa %s2458, 1

</llo_original>
